<compile_context>
chip_gen: v6e
topology: v6e:2x2x1
jax: 0.10.0
libtpu: 0.0.40
codegen_flags: <defaults>
</compile_context>

<pallas_src>
import math

import jax
import jax.numpy as jnp
from jax import lax
from jax.experimental import pallas as pl
from jax.experimental.pallas import tpu as pltpu

# ----------------------------- scaled-down config -----------------------------
NUM_TOKENS  = 512       # vocab            (default 50432)
SEQ_LEN     = 8         # input seq length (default max_seq_len 8192)
DIM         = 128       # model dim        (default 2560)
DEPTH       = 2         # layers           (default 32)
DIM_HEAD    = 32        # head dim         (default 128)
HEADS       = 4         # query heads      (default 24)
KV_HEADS    = 2         # attn_kv_heads
ALIBI_HEADS = 2         # alibi_num_heads  (default 12 of 24 -> half the heads)
FF_MULT     = 4
FF_DIM      = FF_MULT * DIM

Q_OUT   = HEADS * DIM_HEAD              # 128
KV_OUT  = KV_HEADS * DIM_HEAD           # 64
QKV_OUT = Q_OUT + 2 * KV_OUT            # 256  (one fused projection width)

QK_NORM_SCALE   = 10.0   # x-transformers attention scale when qk_norm=True
XPOS_SCALE_BASE = 512.0
EPS      = 1e-5
NEG_INF  = -1e30


# ------------------------------- kernel helpers -------------------------------
def _layernorm(x, gamma):
    mu = jnp.mean(x, axis=-1, keepdims=True)
    var = jnp.mean(jnp.square(x - mu), axis=-1, keepdims=True)
    return (x - mu) * lax.rsqrt(var + EPS) * gamma


def _l2norm(t):
    return t * lax.rsqrt(jnp.sum(t * t, axis=-1, keepdims=True) + 1e-12)


def _rope(t, cos, sin, scale):
    # rotate-half kept as a lane concat (proven lowering at (T, 32)); negligible XLU work.
    half = t.shape[-1] // 2
    t1 = t[:, :half]
    t2 = t[:, half:]
    rot = jnp.concatenate([-t2, t1], axis=-1)
    return (t * cos + rot * sin) * scale


# ------------------------------ fused forward kernel ---------------------------
def nextgpt_fused_kernel(x_ref,
                         attn_g_ref, wqkv_ref, wo_ref, qs_ref, ks_ref,
                         ffn_g_ref, w1_ref, w2_ref,
                         fin_g_ref, wout_ref,
                         cos_ref, sin_ref, xq_ref, xk_ref, bias_ref,
                         o_ref):
    x = x_ref[0]                                  # (T, D) f32, residual stream
    cos = cos_ref[...]; sin = sin_ref[...]        # (T, dim_head)
    xq = xq_ref[...];   xk = xk_ref[...]          # xpos scales for q / k
    group = HEADS // KV_HEADS

    for l in range(DEPTH):
        # ------------------------------ attention -----------------------------
        h = _layernorm(x, attn_g_ref[l])          # (T, D) f32
        # fused Q|K|V projection: one lane-dense (D, 256) matmul, bf16 operands, f32 acc
        qkv = jnp.dot(h.astype(jnp.bfloat16), wqkv_ref[l],
                      preferred_element_type=jnp.float32)       # (T, 256)
        qs = qs_ref[l]                            # (HEADS, dim_head)
        ks = ks_ref[l]                            # (KV_HEADS, dim_head)

        # K / V processed ONCE per kv-head (l2-norm + learned scale + xpos rope)
        k_heads, v_heads = [], []
        for kv in range(KV_HEADS):
            k = qkv[:, Q_OUT + kv * DIM_HEAD: Q_OUT + (kv + 1) * DIM_HEAD]
            v = qkv[:, Q_OUT + KV_OUT + kv * DIM_HEAD:
                       Q_OUT + KV_OUT + (kv + 1) * DIM_HEAD]
            k = _l2norm(k) * ks[kv:kv + 1, :]
            k = _rope(k, cos, sin, xk)
            k_heads.append(k)
            v_heads.append(v)

        o_heads = []
        for hd in range(HEADS):
            kv = hd // group
            q = qkv[:, hd * DIM_HEAD:(hd + 1) * DIM_HEAD]
            q = _l2norm(q) * qs[hd:hd + 1, :]
            q = _rope(q, cos, sin, xq)
            s = jnp.dot(q, k_heads[kv].T,
                        preferred_element_type=jnp.float32) * QK_NORM_SCALE
            s = s + bias_ref[hd]                  # precomputed ALiBi + causal bias
            s = s - jnp.max(s, axis=-1, keepdims=True)
            e = jnp.exp(s)
            p = e * pl.reciprocal(jnp.sum(e, axis=-1, keepdims=True), approx=True)
            o_heads.append(jnp.dot(p, v_heads[kv],
                                   preferred_element_type=jnp.float32))

        # fused output projection: one (T, H*Dh) @ (H*Dh, D) matmul + single residual add
        o_all = jnp.concatenate(o_heads, axis=-1)                 # (T, H*Dh)
        x = x + jnp.dot(o_all.astype(jnp.bfloat16), wo_ref[l],
                        preferred_element_type=jnp.float32)

        # --------------------------------- FFN --------------------------------
        h = _layernorm(x, ffn_g_ref[l])
        u = jax.nn.gelu(jnp.dot(h.astype(jnp.bfloat16), w1_ref[l],
                                preferred_element_type=jnp.float32),
                        approximate=True)
        x = x + jnp.dot(u.astype(jnp.bfloat16), w2_ref[l],
                        preferred_element_type=jnp.float32)

    # ------------------------------- final logits ------------------------------
    h = _layernorm(x, fin_g_ref[...])
    o_ref[0] = jnp.dot(h.astype(jnp.bfloat16), wout_ref[...],
                       preferred_element_type=jnp.float32)


def nextgpt_pallas_forward(x_emb, params, cos, sin, xq, xk, bias):
    B, T, D = x_emb.shape
    V = params["w_out"].shape[-1]
    L = DEPTH

    def full(shape):
        return pl.BlockSpec(shape, lambda b, _n=len(shape): (0,) * _n)

    # TODO(synk): at production shapes (D=2560, V=50432, FF=10240) the full-weight
    # BlockSpecs below must be tiled over the vocab / hidden dims with an accumulator
    # (pl.when init/finalize) and vmem_limit_bytes set — at these scaled-down shapes
    # everything (<1 MB bf16) comfortably stays resident in VMEM.
    return pl.pallas_call(
        nextgpt_fused_kernel,
        out_shape=jax.ShapeDtypeStruct((B, T, V), jnp.float32),
        grid=(B,),
        in_specs=[
            pl.BlockSpec((1, T, D), lambda b: (b, 0, 0)),   # activations
            full((L, 1, D)),                                # attn LN gamma
            full((L, D, QKV_OUT)),                          # fused Wq|Wk|Wv
            full((L, Q_OUT, D)),                            # Wo
            full((L, HEADS, DIM_HEAD)),                     # q per-dim scales
            full((L, KV_HEADS, DIM_HEAD)),                  # k per-dim scales
            full((L, 1, D)),                                # ffn LN gamma
            full((L, D, FF_DIM)),                           # W1
            full((L, FF_DIM, D)),                           # W2
            full((1, D)),                                   # final LN gamma
            full((D, V)),                                   # to-logits
            full((T, DIM_HEAD)),                            # cos
            full((T, DIM_HEAD)),                            # sin
            full((T, DIM_HEAD)),                            # xpos scale (q)
            full((T, DIM_HEAD)),                            # xpos scale (k)
            full((HEADS, T, T)),                            # ALiBi + causal bias
        ],
        out_specs=pl.BlockSpec((1, T, V), lambda b: (b, 0, 0)),
        compiler_params=pltpu.CompilerParams(
            dimension_semantics=("parallel",)),             # keeps both v7x TCs busy
    )(x_emb, params["attn_ln_g"], params["wqkv"], params["wo"],
      params["q_scale"], params["k_scale"],
      params["ffn_ln_g"], params["w1"], params["w2"],
      params["final_ln_g"], params["w_out"],
      cos, sin, xq, xk, bias)


# ------------------------------ position / bias tables --------------------------
def rotary_tables(T, dim_head):
    half = dim_head // 2
    inv_freq = 1.0 / (10000.0 ** (jnp.arange(half, dtype=jnp.float32) / half))
    pos = jnp.arange(T, dtype=jnp.float32)
    ang = pos[:, None] * inv_freq[None, :]                        # (T, half)
    cos = jnp.concatenate([jnp.cos(ang), jnp.cos(ang)], axis=-1)  # (T, dim_head)
    sin = jnp.concatenate([jnp.sin(ang), jnp.sin(ang)], axis=-1)
    # xpos length-extrapolation scale
    base = (jnp.arange(0, dim_head, 2, dtype=jnp.float32) + 0.4 * dim_head) / (1.4 * dim_head)
    power = (pos - T // 2) / XPOS_SCALE_BASE
    scl = base[None, :] ** power[:, None]
    scl = jnp.concatenate([scl, scl], axis=-1)
    return cos, sin, scl, 1.0 / scl


def alibi_slopes(heads, alibi_heads):
    def pow2(n):
        start = 2.0 ** (-(2.0 ** -(math.log2(n) - 3)))
        return [start * (start ** i) for i in range(n)]
    if math.log2(alibi_heads).is_integer():
        s = pow2(alibi_heads)
    else:
        c = 2 ** math.floor(math.log2(alibi_heads))
        s = pow2(c) + pow2(2 * c)[0::2][: alibi_heads - c]
    return s + [0.0] * (heads - alibi_heads)


def alibi_causal_bias(T, heads, alibi_heads):
    slopes = jnp.asarray(alibi_slopes(heads, alibi_heads), jnp.float32)    # (H,)
    ii = jnp.arange(T, dtype=jnp.float32)[:, None]
    jj = jnp.arange(T, dtype=jnp.float32)[None, :]
    dist = jnp.abs(ii - jj)
    bias = -slopes[:, None, None] * dist[None, :, :]                       # (H, T, T)
    causal = (jj <= ii)[None, :, :]
    return jnp.where(causal, bias, NEG_INF).astype(jnp.float32)


# ------------------------------- model forward ---------------------------------
def transformer_forward(tokens, params):
    x = jnp.take(params["emb"], tokens, axis=0).astype(jnp.float32)   # (B, T, D)
    T = tokens.shape[1]
    cos, sin, xq, xk = rotary_tables(T, DIM_HEAD)
    bias = alibi_causal_bias(T, HEADS, ALIBI_HEADS)
    return nextgpt_pallas_forward(x, params, cos, sin, xq, xk, bias)


def nextgpt_forward(tokens, params):
    # AutoregressiveWrapper.forward: shift, run net, CE loss; [0] of its return == logits.
    inp, target = tokens[:, :-1], tokens[:, 1:]
    logits = transformer_forward(inp, params)            # (B, S-1, V)
    logp = jax.nn.log_softmax(logits, axis=-1)
    loss = -jnp.mean(jnp.take_along_axis(logp, target[..., None], axis=-1))
    # TODO(synk): the reference then calls self.decoder(logits, padded_x=logits[0]), which
    # feeds float logits to the token-embedding layer (type-invalid); we return the
    # first-pass logits (`model_input`) and the LM loss instead.
    return logits, loss


# --------------------------------- params init ---------------------------------
def init_params(key):
    def nrm(k, shape, scale=0.02, dtype=jnp.bfloat16):
        return (jax.random.normal(k, shape, jnp.float32) * scale).astype(dtype)

    ks = jax.random.split(key, 6)
    return {
        "emb": nrm(ks[0], (NUM_TOKENS, DIM), dtype=jnp.float32),
        "attn_ln_g": jnp.ones((DEPTH, 1, DIM), jnp.float32),
        "wqkv": nrm(ks[1], (DEPTH, DIM, QKV_OUT)),          # fused Wq|Wk|Wv (bf16)
        "wo": nrm(ks[2], (DEPTH, Q_OUT, DIM)),
        "q_scale": jnp.ones((DEPTH, HEADS, DIM_HEAD), jnp.float32),
        "k_scale": jnp.ones((DEPTH, KV_HEADS, DIM_HEAD), jnp.float32),
        "ffn_ln_g": jnp.ones((DEPTH, 1, DIM), jnp.float32),
        "w1": nrm(ks[3], (DEPTH, DIM, FF_DIM)),
        "w2": nrm(ks[4], (DEPTH, FF_DIM, DIM)),
        "final_ln_g": jnp.ones((1, DIM), jnp.float32),
        "w_out": nrm(ks[5], (DIM, NUM_TOKENS)),
    }


# ------------------------------------ main --------------------------------------
if __name__ == "__main__":
    key = jax.random.PRNGKey(0)
    pkey, tkey = jax.random.split(key)
    params = init_params(pkey)
    text_tokens = jax.random.randint(tkey, (2, SEQ_LEN), 0, NUM_TOKENS, dtype=jnp.int32)

    logits, loss = jax.jit(nextgpt_forward)(text_tokens, params)
    jax.block_until_ready((logits, loss))

    assert logits.shape == (2, SEQ_LEN - 1, NUM_TOKENS)
    assert bool(jnp.isfinite(loss))
    print("KERNEL_OK")
</pallas_src>

<mosaic_0001>
module attributes {stable_mosaic.version = 11 : i64} {
  func.func @nextgpt_fused_kernel(%arg0: i32, %arg1: memref<1x7x128xf32, #tpu.memory_space<vmem>>, %arg2: memref<2x1x128xf32, #tpu.memory_space<vmem>>, %arg3: memref<2x128x256xbf16, #tpu.memory_space<vmem>>, %arg4: memref<2x128x128xbf16, #tpu.memory_space<vmem>>, %arg5: memref<2x4x32xf32, #tpu.memory_space<vmem>>, %arg6: memref<2x2x32xf32, #tpu.memory_space<vmem>>, %arg7: memref<2x1x128xf32, #tpu.memory_space<vmem>>, %arg8: memref<2x128x512xbf16, #tpu.memory_space<vmem>>, %arg9: memref<2x512x128xbf16, #tpu.memory_space<vmem>>, %arg10: memref<1x128xf32, #tpu.memory_space<vmem>>, %arg11: memref<128x512xbf16, #tpu.memory_space<vmem>>, %arg12: memref<7x32xf32, #tpu.memory_space<vmem>>, %arg13: memref<7x32xf32, #tpu.memory_space<vmem>>, %arg14: memref<7x32xf32, #tpu.memory_space<vmem>>, %arg15: memref<7x32xf32, #tpu.memory_space<vmem>>, %arg16: memref<4x7x7xf32, #tpu.memory_space<vmem>>, %arg17: memref<1x7x512xf32, #tpu.memory_space<vmem>>) attributes {dimension_semantics = [#tpu.dimension_semantics<parallel>], iteration_bounds = array<i64: 2>, scalar_prefetch = 0 : i64, scratch_operands = 0 : i64, tpu.core_type = #tpu.core_type<tc>, window_params = [{transform_indices = @transform_0, window_bounds = array<i64: 1, 7, 128>}, {pipeline_mode = #tpu.pipeline_mode<synchronous>, transform_indices = @transform_1, window_bounds = array<i64: 2, 1, 128>}, {pipeline_mode = #tpu.pipeline_mode<synchronous>, transform_indices = @transform_2, window_bounds = array<i64: 2, 128, 256>}, {pipeline_mode = #tpu.pipeline_mode<synchronous>, transform_indices = @transform_3, window_bounds = array<i64: 2, 128, 128>}, {pipeline_mode = #tpu.pipeline_mode<synchronous>, transform_indices = @transform_4, window_bounds = array<i64: 2, 4, 32>}, {pipeline_mode = #tpu.pipeline_mode<synchronous>, transform_indices = @transform_5, window_bounds = array<i64: 2, 2, 32>}, {pipeline_mode = #tpu.pipeline_mode<synchronous>, transform_indices = @transform_6, window_bounds = array<i64: 2, 1, 128>}, {pipeline_mode = #tpu.pipeline_mode<synchronous>, transform_indices = @transform_7, window_bounds = array<i64: 2, 128, 512>}, {pipeline_mode = #tpu.pipeline_mode<synchronous>, transform_indices = @transform_8, window_bounds = array<i64: 2, 512, 128>}, {pipeline_mode = #tpu.pipeline_mode<synchronous>, transform_indices = @transform_9, window_bounds = array<i64: 1, 128>}, {pipeline_mode = #tpu.pipeline_mode<synchronous>, transform_indices = @transform_10, window_bounds = array<i64: 128, 512>}, {pipeline_mode = #tpu.pipeline_mode<synchronous>, transform_indices = @transform_11, window_bounds = array<i64: 7, 32>}, {pipeline_mode = #tpu.pipeline_mode<synchronous>, transform_indices = @transform_12, window_bounds = array<i64: 7, 32>}, {pipeline_mode = #tpu.pipeline_mode<synchronous>, transform_indices = @transform_13, window_bounds = array<i64: 7, 32>}, {pipeline_mode = #tpu.pipeline_mode<synchronous>, transform_indices = @transform_14, window_bounds = array<i64: 7, 32>}, {pipeline_mode = #tpu.pipeline_mode<synchronous>, transform_indices = @transform_15, window_bounds = array<i64: 4, 7, 7>}, {transform_indices = @transform_16, window_bounds = array<i64: 1, 7, 512>}]} {
    %c0 = arith.constant 0 : index
    %c0_0 = arith.constant 0 : index
    %c0_1 = arith.constant 0 : index
    %0 = vector.load %arg1[%c0, %c0_0, %c0_1] : memref<1x7x128xf32, #tpu.memory_space<vmem>>, vector<1x7x128xf32>
    %1 = vector.shape_cast %0 : vector<1x7x128xf32> to vector<7x128xf32>
    %c0_2 = arith.constant 0 : index
    %c0_3 = arith.constant 0 : index
    %2 = vector.load %arg12[%c0_2, %c0_3] : memref<7x32xf32, #tpu.memory_space<vmem>>, vector<7x32xf32>
    %c0_4 = arith.constant 0 : index
    %c0_5 = arith.constant 0 : index
    %3 = vector.load %arg13[%c0_4, %c0_5] : memref<7x32xf32, #tpu.memory_space<vmem>>, vector<7x32xf32>
    %c0_6 = arith.constant 0 : index
    %c0_7 = arith.constant 0 : index
    %4 = vector.load %arg14[%c0_6, %c0_7] : memref<7x32xf32, #tpu.memory_space<vmem>>, vector<7x32xf32>
    %c0_8 = arith.constant 0 : index
    %c0_9 = arith.constant 0 : index
    %5 = vector.load %arg15[%c0_8, %c0_9] : memref<7x32xf32, #tpu.memory_space<vmem>>, vector<7x32xf32>
    %c0_10 = arith.constant 0 : index
    %c0_11 = arith.constant 0 : index
    %c0_12 = arith.constant 0 : index
    %6 = vector.load %arg2[%c0_10, %c0_11, %c0_12] : memref<2x1x128xf32, #tpu.memory_space<vmem>>, vector<1x1x128xf32>
    %7 = vector.shape_cast %6 : vector<1x1x128xf32> to vector<1x128xf32>
    %cst = arith.constant dense<0.000000e+00> : vector<7xf32>
    %8 = vector.multi_reduction <add>, %1, %cst [1] : vector<7x128xf32> to vector<7xf32>
    %9 = vector.shape_cast %8 : vector<7xf32> to vector<7x1xf32>
    %cst_13 = arith.constant 1.280000e+02 : f32
    %10 = vector.broadcast %cst_13 : f32 to vector<7x1xf32>
    %11 = arith.divf %9, %10 : vector<7x1xf32>
    %12 = vector.broadcast %11 : vector<7x1xf32> to vector<7x128xf32>
    %13 = arith.subf %1, %12 : vector<7x128xf32>
    %14 = arith.mulf %13, %13 : vector<7x128xf32>
    %cst_14 = arith.constant dense<0.000000e+00> : vector<7xf32>
    %15 = vector.multi_reduction <add>, %14, %cst_14 [1] : vector<7x128xf32> to vector<7xf32>
    %16 = vector.shape_cast %15 : vector<7xf32> to vector<7x1xf32>
    %cst_15 = arith.constant 1.280000e+02 : f32
    %17 = vector.broadcast %cst_15 : f32 to vector<7x1xf32>
    %18 = arith.divf %16, %17 : vector<7x1xf32>
    %19 = vector.broadcast %11 : vector<7x1xf32> to vector<7x128xf32>
    %20 = arith.subf %1, %19 : vector<7x128xf32>
    %cst_16 = arith.constant 9.99999974E-6 : f32
    %21 = vector.broadcast %cst_16 : f32 to vector<7x1xf32>
    %22 = arith.addf %18, %21 : vector<7x1xf32>
    %23 = math.rsqrt %22 : vector<7x1xf32>
    %24 = vector.broadcast %23 : vector<7x1xf32> to vector<7x128xf32>
    %25 = arith.mulf %20, %24 : vector<7x128xf32>
    %26 = vector.broadcast %7 : vector<1x128xf32> to vector<7x128xf32>
    %27 = arith.mulf %25, %26 : vector<7x128xf32>
    %28 = arith.truncf %27 : vector<7x128xf32> to vector<7x128xbf16>
    %c0_17 = arith.constant 0 : index
    %c0_18 = arith.constant 0 : index
    %c0_19 = arith.constant 0 : index
    %29 = vector.load %arg3[%c0_17, %c0_18, %c0_19] : memref<2x128x256xbf16, #tpu.memory_space<vmem>>, vector<1x128x256xbf16>
    %30 = vector.shape_cast %29 : vector<1x128x256xbf16> to vector<128x256xbf16>
    %cst_20 = arith.constant dense<0.000000e+00> : vector<7x256xf32>
    %31 = tpu.matmul %28, %30, %cst_20 {dimension_numbers = #tpu.dot_dimension_numbers<[1], [0], [0], [1], [0, 0, 1, 1], [], []>} : vector<7x128xbf16>, vector<128x256xbf16>, vector<7x256xf32> -> vector<7x256xf32>
    %c0_21 = arith.constant 0 : index
    %c0_22 = arith.constant 0 : index
    %c0_23 = arith.constant 0 : index
    %32 = vector.load %arg5[%c0_21, %c0_22, %c0_23] : memref<2x4x32xf32, #tpu.memory_space<vmem>>, vector<1x4x32xf32>
    %33 = vector.shape_cast %32 : vector<1x4x32xf32> to vector<4x32xf32>
    %c0_24 = arith.constant 0 : index
    %c0_25 = arith.constant 0 : index
    %c0_26 = arith.constant 0 : index
    %34 = vector.load %arg6[%c0_24, %c0_25, %c0_26] : memref<2x2x32xf32, #tpu.memory_space<vmem>>, vector<1x2x32xf32>
    %35 = vector.shape_cast %34 : vector<1x2x32xf32> to vector<2x32xf32>
    %36 = vector.extract_strided_slice %31 {offsets = [0, 128], sizes = [7, 32], strides = [1, 1]} : vector<7x256xf32> to vector<7x32xf32>
    %37 = vector.extract_strided_slice %31 {offsets = [0, 192], sizes = [7, 32], strides = [1, 1]} : vector<7x256xf32> to vector<7x32xf32>
    %38 = arith.mulf %36, %36 : vector<7x32xf32>
    %cst_27 = arith.constant dense<0.000000e+00> : vector<7xf32>
    %39 = vector.multi_reduction <add>, %38, %cst_27 [1] : vector<7x32xf32> to vector<7xf32>
    %40 = vector.shape_cast %39 : vector<7xf32> to vector<7x1xf32>
    %cst_28 = arith.constant 9.99999996E-13 : f32
    %41 = vector.broadcast %cst_28 : f32 to vector<7x1xf32>
    %42 = arith.addf %40, %41 : vector<7x1xf32>
    %43 = math.rsqrt %42 : vector<7x1xf32>
    %44 = vector.broadcast %43 : vector<7x1xf32> to vector<7x32xf32>
    %45 = arith.mulf %36, %44 : vector<7x32xf32>
    %46 = vector.extract_strided_slice %35 {offsets = [0, 0], sizes = [1, 32], strides = [1, 1]} : vector<2x32xf32> to vector<1x32xf32>
    %47 = vector.broadcast %46 : vector<1x32xf32> to vector<7x32xf32>
    %48 = arith.mulf %45, %47 : vector<7x32xf32>
    %49 = vector.extract_strided_slice %48 {offsets = [0, 0], sizes = [7, 16], strides = [1, 1]} : vector<7x32xf32> to vector<7x16xf32>
    %50 = vector.extract_strided_slice %48 {offsets = [0, 16], sizes = [7, 16], strides = [1, 1]} : vector<7x32xf32> to vector<7x16xf32>
    %cst_29 = arith.constant 0.000000e+00 : f32
    %51 = vector.broadcast %cst_29 : f32 to vector<7x16xf32>
    %52 = arith.subf %51, %50 : vector<7x16xf32>
    %53 = tpu.concatenate %52, %49 in 1 : vector<7x16xf32>, vector<7x16xf32> -> vector<7x32xf32>
    %54 = arith.mulf %48, %2 : vector<7x32xf32>
    %55 = arith.mulf %53, %3 : vector<7x32xf32>
    %56 = arith.addf %54, %55 : vector<7x32xf32>
    %57 = arith.mulf %56, %5 : vector<7x32xf32>
    %58 = vector.extract_strided_slice %31 {offsets = [0, 160], sizes = [7, 32], strides = [1, 1]} : vector<7x256xf32> to vector<7x32xf32>
    %59 = vector.extract_strided_slice %31 {offsets = [0, 224], sizes = [7, 32], strides = [1, 1]} : vector<7x256xf32> to vector<7x32xf32>
    %60 = arith.mulf %58, %58 : vector<7x32xf32>
    %cst_30 = arith.constant dense<0.000000e+00> : vector<7xf32>
    %61 = vector.multi_reduction <add>, %60, %cst_30 [1] : vector<7x32xf32> to vector<7xf32>
    %62 = vector.shape_cast %61 : vector<7xf32> to vector<7x1xf32>
    %cst_31 = arith.constant 9.99999996E-13 : f32
    %63 = vector.broadcast %cst_31 : f32 to vector<7x1xf32>
    %64 = arith.addf %62, %63 : vector<7x1xf32>
    %65 = math.rsqrt %64 : vector<7x1xf32>
    %66 = vector.broadcast %65 : vector<7x1xf32> to vector<7x32xf32>
    %67 = arith.mulf %58, %66 : vector<7x32xf32>
    %68 = vector.extract_strided_slice %35 {offsets = [1, 0], sizes = [1, 32], strides = [1, 1]} : vector<2x32xf32> to vector<1x32xf32>
    %69 = vector.broadcast %68 : vector<1x32xf32> to vector<7x32xf32>
    %70 = arith.mulf %67, %69 : vector<7x32xf32>
    %71 = vector.extract_strided_slice %70 {offsets = [0, 0], sizes = [7, 16], strides = [1, 1]} : vector<7x32xf32> to vector<7x16xf32>
    %72 = vector.extract_strided_slice %70 {offsets = [0, 16], sizes = [7, 16], strides = [1, 1]} : vector<7x32xf32> to vector<7x16xf32>
    %cst_32 = arith.constant 0.000000e+00 : f32
    %73 = vector.broadcast %cst_32 : f32 to vector<7x16xf32>
    %74 = arith.subf %73, %72 : vector<7x16xf32>
    %75 = tpu.concatenate %74, %71 in 1 : vector<7x16xf32>, vector<7x16xf32> -> vector<7x32xf32>
    %76 = arith.mulf %70, %2 : vector<7x32xf32>
    %77 = arith.mulf %75, %3 : vector<7x32xf32>
    %78 = arith.addf %76, %77 : vector<7x32xf32>
    %79 = arith.mulf %78, %5 : vector<7x32xf32>
    %80 = vector.extract_strided_slice %31 {offsets = [0, 0], sizes = [7, 32], strides = [1, 1]} : vector<7x256xf32> to vector<7x32xf32>
    %81 = arith.mulf %80, %80 : vector<7x32xf32>
    %cst_33 = arith.constant dense<0.000000e+00> : vector<7xf32>
    %82 = vector.multi_reduction <add>, %81, %cst_33 [1] : vector<7x32xf32> to vector<7xf32>
    %83 = vector.shape_cast %82 : vector<7xf32> to vector<7x1xf32>
    %cst_34 = arith.constant 9.99999996E-13 : f32
    %84 = vector.broadcast %cst_34 : f32 to vector<7x1xf32>
    %85 = arith.addf %83, %84 : vector<7x1xf32>
    %86 = math.rsqrt %85 : vector<7x1xf32>
    %87 = vector.broadcast %86 : vector<7x1xf32> to vector<7x32xf32>
    %88 = arith.mulf %80, %87 : vector<7x32xf32>
    %89 = vector.extract_strided_slice %33 {offsets = [0, 0], sizes = [1, 32], strides = [1, 1]} : vector<4x32xf32> to vector<1x32xf32>
    %90 = vector.broadcast %89 : vector<1x32xf32> to vector<7x32xf32>
    %91 = arith.mulf %88, %90 : vector<7x32xf32>
    %92 = vector.extract_strided_slice %91 {offsets = [0, 0], sizes = [7, 16], strides = [1, 1]} : vector<7x32xf32> to vector<7x16xf32>
    %93 = vector.extract_strided_slice %91 {offsets = [0, 16], sizes = [7, 16], strides = [1, 1]} : vector<7x32xf32> to vector<7x16xf32>
    %cst_35 = arith.constant 0.000000e+00 : f32
    %94 = vector.broadcast %cst_35 : f32 to vector<7x16xf32>
    %95 = arith.subf %94, %93 : vector<7x16xf32>
    %96 = tpu.concatenate %95, %92 in 1 : vector<7x16xf32>, vector<7x16xf32> -> vector<7x32xf32>
    %97 = arith.mulf %91, %2 : vector<7x32xf32>
    %98 = arith.mulf %96, %3 : vector<7x32xf32>
    %99 = arith.addf %97, %98 : vector<7x32xf32>
    %100 = arith.mulf %99, %4 : vector<7x32xf32>
    %101 = tpu.transpose %57, [1, 0] : vector<7x32xf32> -> vector<32x7xf32>
    %cst_36 = arith.constant dense<0.000000e+00> : vector<7x7xf32>
    %102 = tpu.matmul %100, %101, %cst_36 {dimension_numbers = #tpu.dot_dimension_numbers<[1], [0], [0], [1], [0, 0, 1, 1], [], []>} : vector<7x32xf32>, vector<32x7xf32>, vector<7x7xf32> -> vector<7x7xf32>
    %cst_37 = arith.constant 1.000000e+01 : f32
    %103 = vector.broadcast %cst_37 : f32 to vector<7x7xf32>
    %104 = arith.mulf %102, %103 : vector<7x7xf32>
    %c0_38 = arith.constant 0 : index
    %c0_39 = arith.constant 0 : index
    %c0_40 = arith.constant 0 : index
    %105 = vector.load %arg16[%c0_38, %c0_39, %c0_40] : memref<4x7x7xf32, #tpu.memory_space<vmem>>, vector<1x7x7xf32>
    %106 = vector.shape_cast %105 : vector<1x7x7xf32> to vector<7x7xf32>
    %107 = arith.addf %104, %106 : vector<7x7xf32>
    %cst_41 = arith.constant dense<0xFF800000> : vector<7xf32>
    %108 = vector.multi_reduction <maximumf>, %107, %cst_41 [1] : vector<7x7xf32> to vector<7xf32>
    %109 = vector.shape_cast %108 : vector<7xf32> to vector<7x1xf32>
    %110 = vector.broadcast %109 : vector<7x1xf32> to vector<7x7xf32>
    %111 = arith.subf %107, %110 : vector<7x7xf32>
    %112 = math.exp %111 : vector<7x7xf32>
    %cst_42 = arith.constant dense<0.000000e+00> : vector<7xf32>
    %113 = vector.multi_reduction <add>, %112, %cst_42 [1] : vector<7x7xf32> to vector<7xf32>
    %114 = vector.shape_cast %113 : vector<7xf32> to vector<7x1xf32>
    %115 = tpu.reciprocal %114 {approx = true} : vector<7x1xf32> -> vector<7x1xf32>
    %116 = vector.broadcast %115 : vector<7x1xf32> to vector<7x7xf32>
    %117 = arith.mulf %112, %116 : vector<7x7xf32>
    %cst_43 = arith.constant dense<0.000000e+00> : vector<7x32xf32>
    %118 = tpu.matmul %117, %37, %cst_43 {dimension_numbers = #tpu.dot_dimension_numbers<[1], [0], [0], [1], [0, 0, 1, 1], [], []>} : vector<7x7xf32>, vector<7x32xf32>, vector<7x32xf32> -> vector<7x32xf32>
    %119 = vector.extract_strided_slice %31 {offsets = [0, 32], sizes = [7, 32], strides = [1, 1]} : vector<7x256xf32> to vector<7x32xf32>
    %120 = arith.mulf %119, %119 : vector<7x32xf32>
    %cst_44 = arith.constant dense<0.000000e+00> : vector<7xf32>
    %121 = vector.multi_reduction <add>, %120, %cst_44 [1] : vector<7x32xf32> to vector<7xf32>
    %122 = vector.shape_cast %121 : vector<7xf32> to vector<7x1xf32>
    %cst_45 = arith.constant 9.99999996E-13 : f32
    %123 = vector.broadcast %cst_45 : f32 to vector<7x1xf32>
    %124 = arith.addf %122, %123 : vector<7x1xf32>
    %125 = math.rsqrt %124 : vector<7x1xf32>
    %126 = vector.broadcast %125 : vector<7x1xf32> to vector<7x32xf32>
    %127 = arith.mulf %119, %126 : vector<7x32xf32>
    %128 = vector.extract_strided_slice %33 {offsets = [1, 0], sizes = [1, 32], strides = [1, 1]} : vector<4x32xf32> to vector<1x32xf32>
    %129 = vector.broadcast %128 : vector<1x32xf32> to vector<7x32xf32>
    %130 = arith.mulf %127, %129 : vector<7x32xf32>
    %131 = vector.extract_strided_slice %130 {offsets = [0, 0], sizes = [7, 16], strides = [1, 1]} : vector<7x32xf32> to vector<7x16xf32>
    %132 = vector.extract_strided_slice %130 {offsets = [0, 16], sizes = [7, 16], strides = [1, 1]} : vector<7x32xf32> to vector<7x16xf32>
    %cst_46 = arith.constant 0.000000e+00 : f32
    %133 = vector.broadcast %cst_46 : f32 to vector<7x16xf32>
    %134 = arith.subf %133, %132 : vector<7x16xf32>
    %135 = tpu.concatenate %134, %131 in 1 : vector<7x16xf32>, vector<7x16xf32> -> vector<7x32xf32>
    %136 = arith.mulf %130, %2 : vector<7x32xf32>
    %137 = arith.mulf %135, %3 : vector<7x32xf32>
    %138 = arith.addf %136, %137 : vector<7x32xf32>
    %139 = arith.mulf %138, %4 : vector<7x32xf32>
    %140 = tpu.transpose %57, [1, 0] : vector<7x32xf32> -> vector<32x7xf32>
    %cst_47 = arith.constant dense<0.000000e+00> : vector<7x7xf32>
    %141 = tpu.matmul %139, %140, %cst_47 {dimension_numbers = #tpu.dot_dimension_numbers<[1], [0], [0], [1], [0, 0, 1, 1], [], []>} : vector<7x32xf32>, vector<32x7xf32>, vector<7x7xf32> -> vector<7x7xf32>
    %cst_48 = arith.constant 1.000000e+01 : f32
    %142 = vector.broadcast %cst_48 : f32 to vector<7x7xf32>
    %143 = arith.mulf %141, %142 : vector<7x7xf32>
    %c1 = arith.constant 1 : index
    %c0_49 = arith.constant 0 : index
    %c0_50 = arith.constant 0 : index
    %144 = vector.load %arg16[%c1, %c0_49, %c0_50] : memref<4x7x7xf32, #tpu.memory_space<vmem>>, vector<1x7x7xf32>
    %145 = vector.shape_cast %144 : vector<1x7x7xf32> to vector<7x7xf32>
    %146 = arith.addf %143, %145 : vector<7x7xf32>
    %cst_51 = arith.constant dense<0xFF800000> : vector<7xf32>
    %147 = vector.multi_reduction <maximumf>, %146, %cst_51 [1] : vector<7x7xf32> to vector<7xf32>
    %148 = vector.shape_cast %147 : vector<7xf32> to vector<7x1xf32>
    %149 = vector.broadcast %148 : vector<7x1xf32> to vector<7x7xf32>
    %150 = arith.subf %146, %149 : vector<7x7xf32>
    %151 = math.exp %150 : vector<7x7xf32>
    %cst_52 = arith.constant dense<0.000000e+00> : vector<7xf32>
    %152 = vector.multi_reduction <add>, %151, %cst_52 [1] : vector<7x7xf32> to vector<7xf32>
    %153 = vector.shape_cast %152 : vector<7xf32> to vector<7x1xf32>
    %154 = tpu.reciprocal %153 {approx = true} : vector<7x1xf32> -> vector<7x1xf32>
    %155 = vector.broadcast %154 : vector<7x1xf32> to vector<7x7xf32>
    %156 = arith.mulf %151, %155 : vector<7x7xf32>
    %cst_53 = arith.constant dense<0.000000e+00> : vector<7x32xf32>
    %157 = tpu.matmul %156, %37, %cst_53 {dimension_numbers = #tpu.dot_dimension_numbers<[1], [0], [0], [1], [0, 0, 1, 1], [], []>} : vector<7x7xf32>, vector<7x32xf32>, vector<7x32xf32> -> vector<7x32xf32>
    %158 = vector.extract_strided_slice %31 {offsets = [0, 64], sizes = [7, 32], strides = [1, 1]} : vector<7x256xf32> to vector<7x32xf32>
    %159 = arith.mulf %158, %158 : vector<7x32xf32>
    %cst_54 = arith.constant dense<0.000000e+00> : vector<7xf32>
    %160 = vector.multi_reduction <add>, %159, %cst_54 [1] : vector<7x32xf32> to vector<7xf32>
    %161 = vector.shape_cast %160 : vector<7xf32> to vector<7x1xf32>
    %cst_55 = arith.constant 9.99999996E-13 : f32
    %162 = vector.broadcast %cst_55 : f32 to vector<7x1xf32>
    %163 = arith.addf %161, %162 : vector<7x1xf32>
    %164 = math.rsqrt %163 : vector<7x1xf32>
    %165 = vector.broadcast %164 : vector<7x1xf32> to vector<7x32xf32>
    %166 = arith.mulf %158, %165 : vector<7x32xf32>
    %167 = vector.extract_strided_slice %33 {offsets = [2, 0], sizes = [1, 32], strides = [1, 1]} : vector<4x32xf32> to vector<1x32xf32>
    %168 = vector.broadcast %167 : vector<1x32xf32> to vector<7x32xf32>
    %169 = arith.mulf %166, %168 : vector<7x32xf32>
    %170 = vector.extract_strided_slice %169 {offsets = [0, 0], sizes = [7, 16], strides = [1, 1]} : vector<7x32xf32> to vector<7x16xf32>
    %171 = vector.extract_strided_slice %169 {offsets = [0, 16], sizes = [7, 16], strides = [1, 1]} : vector<7x32xf32> to vector<7x16xf32>
    %cst_56 = arith.constant 0.000000e+00 : f32
    %172 = vector.broadcast %cst_56 : f32 to vector<7x16xf32>
    %173 = arith.subf %172, %171 : vector<7x16xf32>
    %174 = tpu.concatenate %173, %170 in 1 : vector<7x16xf32>, vector<7x16xf32> -> vector<7x32xf32>
    %175 = arith.mulf %169, %2 : vector<7x32xf32>
    %176 = arith.mulf %174, %3 : vector<7x32xf32>
    %177 = arith.addf %175, %176 : vector<7x32xf32>
    %178 = arith.mulf %177, %4 : vector<7x32xf32>
    %179 = tpu.transpose %79, [1, 0] : vector<7x32xf32> -> vector<32x7xf32>
    %cst_57 = arith.constant dense<0.000000e+00> : vector<7x7xf32>
    %180 = tpu.matmul %178, %179, %cst_57 {dimension_numbers = #tpu.dot_dimension_numbers<[1], [0], [0], [1], [0, 0, 1, 1], [], []>} : vector<7x32xf32>, vector<32x7xf32>, vector<7x7xf32> -> vector<7x7xf32>
    %cst_58 = arith.constant 1.000000e+01 : f32
    %181 = vector.broadcast %cst_58 : f32 to vector<7x7xf32>
    %182 = arith.mulf %180, %181 : vector<7x7xf32>
    %c2 = arith.constant 2 : index
    %c0_59 = arith.constant 0 : index
    %c0_60 = arith.constant 0 : index
    %183 = vector.load %arg16[%c2, %c0_59, %c0_60] : memref<4x7x7xf32, #tpu.memory_space<vmem>>, vector<1x7x7xf32>
    %184 = vector.shape_cast %183 : vector<1x7x7xf32> to vector<7x7xf32>
    %185 = arith.addf %182, %184 : vector<7x7xf32>
    %cst_61 = arith.constant dense<0xFF800000> : vector<7xf32>
    %186 = vector.multi_reduction <maximumf>, %185, %cst_61 [1] : vector<7x7xf32> to vector<7xf32>
    %187 = vector.shape_cast %186 : vector<7xf32> to vector<7x1xf32>
    %188 = vector.broadcast %187 : vector<7x1xf32> to vector<7x7xf32>
    %189 = arith.subf %185, %188 : vector<7x7xf32>
    %190 = math.exp %189 : vector<7x7xf32>
    %cst_62 = arith.constant dense<0.000000e+00> : vector<7xf32>
    %191 = vector.multi_reduction <add>, %190, %cst_62 [1] : vector<7x7xf32> to vector<7xf32>
    %192 = vector.shape_cast %191 : vector<7xf32> to vector<7x1xf32>
    %193 = tpu.reciprocal %192 {approx = true} : vector<7x1xf32> -> vector<7x1xf32>
    %194 = vector.broadcast %193 : vector<7x1xf32> to vector<7x7xf32>
    %195 = arith.mulf %190, %194 : vector<7x7xf32>
    %cst_63 = arith.constant dense<0.000000e+00> : vector<7x32xf32>
    %196 = tpu.matmul %195, %59, %cst_63 {dimension_numbers = #tpu.dot_dimension_numbers<[1], [0], [0], [1], [0, 0, 1, 1], [], []>} : vector<7x7xf32>, vector<7x32xf32>, vector<7x32xf32> -> vector<7x32xf32>
    %197 = vector.extract_strided_slice %31 {offsets = [0, 96], sizes = [7, 32], strides = [1, 1]} : vector<7x256xf32> to vector<7x32xf32>
    %198 = arith.mulf %197, %197 : vector<7x32xf32>
    %cst_64 = arith.constant dense<0.000000e+00> : vector<7xf32>
    %199 = vector.multi_reduction <add>, %198, %cst_64 [1] : vector<7x32xf32> to vector<7xf32>
    %200 = vector.shape_cast %199 : vector<7xf32> to vector<7x1xf32>
    %cst_65 = arith.constant 9.99999996E-13 : f32
    %201 = vector.broadcast %cst_65 : f32 to vector<7x1xf32>
    %202 = arith.addf %200, %201 : vector<7x1xf32>
    %203 = math.rsqrt %202 : vector<7x1xf32>
    %204 = vector.broadcast %203 : vector<7x1xf32> to vector<7x32xf32>
    %205 = arith.mulf %197, %204 : vector<7x32xf32>
    %206 = vector.extract_strided_slice %33 {offsets = [3, 0], sizes = [1, 32], strides = [1, 1]} : vector<4x32xf32> to vector<1x32xf32>
    %207 = vector.broadcast %206 : vector<1x32xf32> to vector<7x32xf32>
    %208 = arith.mulf %205, %207 : vector<7x32xf32>
    %209 = vector.extract_strided_slice %208 {offsets = [0, 0], sizes = [7, 16], strides = [1, 1]} : vector<7x32xf32> to vector<7x16xf32>
    %210 = vector.extract_strided_slice %208 {offsets = [0, 16], sizes = [7, 16], strides = [1, 1]} : vector<7x32xf32> to vector<7x16xf32>
    %cst_66 = arith.constant 0.000000e+00 : f32
    %211 = vector.broadcast %cst_66 : f32 to vector<7x16xf32>
    %212 = arith.subf %211, %210 : vector<7x16xf32>
    %213 = tpu.concatenate %212, %209 in 1 : vector<7x16xf32>, vector<7x16xf32> -> vector<7x32xf32>
    %214 = arith.mulf %208, %2 : vector<7x32xf32>
    %215 = arith.mulf %213, %3 : vector<7x32xf32>
    %216 = arith.addf %214, %215 : vector<7x32xf32>
    %217 = arith.mulf %216, %4 : vector<7x32xf32>
    %218 = tpu.transpose %79, [1, 0] : vector<7x32xf32> -> vector<32x7xf32>
    %cst_67 = arith.constant dense<0.000000e+00> : vector<7x7xf32>
    %219 = tpu.matmul %217, %218, %cst_67 {dimension_numbers = #tpu.dot_dimension_numbers<[1], [0], [0], [1], [0, 0, 1, 1], [], []>} : vector<7x32xf32>, vector<32x7xf32>, vector<7x7xf32> -> vector<7x7xf32>
    %cst_68 = arith.constant 1.000000e+01 : f32
    %220 = vector.broadcast %cst_68 : f32 to vector<7x7xf32>
    %221 = arith.mulf %219, %220 : vector<7x7xf32>
    %c3 = arith.constant 3 : index
    %c0_69 = arith.constant 0 : index
    %c0_70 = arith.constant 0 : index
    %222 = vector.load %arg16[%c3, %c0_69, %c0_70] : memref<4x7x7xf32, #tpu.memory_space<vmem>>, vector<1x7x7xf32>
    %223 = vector.shape_cast %222 : vector<1x7x7xf32> to vector<7x7xf32>
    %224 = arith.addf %221, %223 : vector<7x7xf32>
    %cst_71 = arith.constant dense<0xFF800000> : vector<7xf32>
    %225 = vector.multi_reduction <maximumf>, %224, %cst_71 [1] : vector<7x7xf32> to vector<7xf32>
    %226 = vector.shape_cast %225 : vector<7xf32> to vector<7x1xf32>
    %227 = vector.broadcast %226 : vector<7x1xf32> to vector<7x7xf32>
    %228 = arith.subf %224, %227 : vector<7x7xf32>
    %229 = math.exp %228 : vector<7x7xf32>
    %cst_72 = arith.constant dense<0.000000e+00> : vector<7xf32>
    %230 = vector.multi_reduction <add>, %229, %cst_72 [1] : vector<7x7xf32> to vector<7xf32>
    %231 = vector.shape_cast %230 : vector<7xf32> to vector<7x1xf32>
    %232 = tpu.reciprocal %231 {approx = true} : vector<7x1xf32> -> vector<7x1xf32>
    %233 = vector.broadcast %232 : vector<7x1xf32> to vector<7x7xf32>
    %234 = arith.mulf %229, %233 : vector<7x7xf32>
    %cst_73 = arith.constant dense<0.000000e+00> : vector<7x32xf32>
    %235 = tpu.matmul %234, %59, %cst_73 {dimension_numbers = #tpu.dot_dimension_numbers<[1], [0], [0], [1], [0, 0, 1, 1], [], []>} : vector<7x7xf32>, vector<7x32xf32>, vector<7x32xf32> -> vector<7x32xf32>
    %236 = tpu.concatenate %118, %157, %196, %235 in 1 : vector<7x32xf32>, vector<7x32xf32>, vector<7x32xf32>, vector<7x32xf32> -> vector<7x128xf32>
    %237 = arith.truncf %236 : vector<7x128xf32> to vector<7x128xbf16>
    %c0_74 = arith.constant 0 : index
    %c0_75 = arith.constant 0 : index
    %c0_76 = arith.constant 0 : index
    %238 = vector.load %arg4[%c0_74, %c0_75, %c0_76] : memref<2x128x128xbf16, #tpu.memory_space<vmem>>, vector<1x128x128xbf16>
    %239 = vector.shape_cast %238 : vector<1x128x128xbf16> to vector<128x128xbf16>
    %cst_77 = arith.constant dense<0.000000e+00> : vector<7x128xf32>
    %240 = tpu.matmul %237, %239, %cst_77 {dimension_numbers = #tpu.dot_dimension_numbers<[1], [0], [0], [1], [0, 0, 1, 1], [], []>} : vector<7x128xbf16>, vector<128x128xbf16>, vector<7x128xf32> -> vector<7x128xf32>
    %241 = arith.addf %1, %240 : vector<7x128xf32>
    %c0_78 = arith.constant 0 : index
    %c0_79 = arith.constant 0 : index
    %c0_80 = arith.constant 0 : index
    %242 = vector.load %arg7[%c0_78, %c0_79, %c0_80] : memref<2x1x128xf32, #tpu.memory_space<vmem>>, vector<1x1x128xf32>
    %243 = vector.shape_cast %242 : vector<1x1x128xf32> to vector<1x128xf32>
    %cst_81 = arith.constant dense<0.000000e+00> : vector<7xf32>
    %244 = vector.multi_reduction <add>, %241, %cst_81 [1] : vector<7x128xf32> to vector<7xf32>
    %245 = vector.shape_cast %244 : vector<7xf32> to vector<7x1xf32>
    %cst_82 = arith.constant 1.280000e+02 : f32
    %246 = vector.broadcast %cst_82 : f32 to vector<7x1xf32>
    %247 = arith.divf %245, %246 : vector<7x1xf32>
    %248 = vector.broadcast %247 : vector<7x1xf32> to vector<7x128xf32>
    %249 = arith.subf %241, %248 : vector<7x128xf32>
    %250 = arith.mulf %249, %249 : vector<7x128xf32>
    %cst_83 = arith.constant dense<0.000000e+00> : vector<7xf32>
    %251 = vector.multi_reduction <add>, %250, %cst_83 [1] : vector<7x128xf32> to vector<7xf32>
    %252 = vector.shape_cast %251 : vector<7xf32> to vector<7x1xf32>
    %cst_84 = arith.constant 1.280000e+02 : f32
    %253 = vector.broadcast %cst_84 : f32 to vector<7x1xf32>
    %254 = arith.divf %252, %253 : vector<7x1xf32>
    %255 = vector.broadcast %247 : vector<7x1xf32> to vector<7x128xf32>
    %256 = arith.subf %241, %255 : vector<7x128xf32>
    %cst_85 = arith.constant 9.99999974E-6 : f32
    %257 = vector.broadcast %cst_85 : f32 to vector<7x1xf32>
    %258 = arith.addf %254, %257 : vector<7x1xf32>
    %259 = math.rsqrt %258 : vector<7x1xf32>
    %260 = vector.broadcast %259 : vector<7x1xf32> to vector<7x128xf32>
    %261 = arith.mulf %256, %260 : vector<7x128xf32>
    %262 = vector.broadcast %243 : vector<1x128xf32> to vector<7x128xf32>
    %263 = arith.mulf %261, %262 : vector<7x128xf32>
    %264 = arith.truncf %263 : vector<7x128xf32> to vector<7x128xbf16>
    %c0_86 = arith.constant 0 : index
    %c0_87 = arith.constant 0 : index
    %c0_88 = arith.constant 0 : index
    %265 = vector.load %arg8[%c0_86, %c0_87, %c0_88] : memref<2x128x512xbf16, #tpu.memory_space<vmem>>, vector<1x128x512xbf16>
    %266 = vector.shape_cast %265 : vector<1x128x512xbf16> to vector<128x512xbf16>
    %cst_89 = arith.constant dense<0.000000e+00> : vector<7x512xf32>
    %267 = tpu.matmul %264, %266, %cst_89 {dimension_numbers = #tpu.dot_dimension_numbers<[1], [0], [0], [1], [0, 0, 1, 1], [], []>} : vector<7x128xbf16>, vector<128x512xbf16>, vector<7x512xf32> -> vector<7x512xf32>
    %268 = arith.mulf %267, %267 : vector<7x512xf32>
    %269 = arith.mulf %267, %268 : vector<7x512xf32>
    %cst_90 = arith.constant 4.471500e-02 : f32
    %270 = vector.broadcast %cst_90 : f32 to vector<7x512xf32>
    %271 = arith.mulf %270, %269 : vector<7x512xf32>
    %272 = arith.addf %267, %271 : vector<7x512xf32>
    %cst_91 = arith.constant 0.797884583 : f32
    %273 = vector.broadcast %cst_91 : f32 to vector<7x512xf32>
    %274 = arith.mulf %273, %272 : vector<7x512xf32>
    %275 = math.tanh %274 : vector<7x512xf32>
    %cst_92 = arith.constant 1.000000e+00 : f32
    %276 = vector.broadcast %cst_92 : f32 to vector<7x512xf32>
    %277 = arith.addf %276, %275 : vector<7x512xf32>
    %cst_93 = arith.constant 5.000000e-01 : f32
    %278 = vector.broadcast %cst_93 : f32 to vector<7x512xf32>
    %279 = arith.mulf %278, %277 : vector<7x512xf32>
    %280 = arith.mulf %267, %279 : vector<7x512xf32>
    %281 = arith.truncf %280 : vector<7x512xf32> to vector<7x512xbf16>
    %c0_94 = arith.constant 0 : index
    %c0_95 = arith.constant 0 : index
    %c0_96 = arith.constant 0 : index
    %282 = vector.load %arg9[%c0_94, %c0_95, %c0_96] : memref<2x512x128xbf16, #tpu.memory_space<vmem>>, vector<1x512x128xbf16>
    %283 = vector.shape_cast %282 : vector<1x512x128xbf16> to vector<512x128xbf16>
    %cst_97 = arith.constant dense<0.000000e+00> : vector<7x128xf32>
    %284 = tpu.matmul %281, %283, %cst_97 {dimension_numbers = #tpu.dot_dimension_numbers<[1], [0], [0], [1], [0, 0, 1, 1], [], []>} : vector<7x512xbf16>, vector<512x128xbf16>, vector<7x128xf32> -> vector<7x128xf32>
    %285 = arith.addf %241, %284 : vector<7x128xf32>
    %c1_98 = arith.constant 1 : index
    %c0_99 = arith.constant 0 : index
    %c0_100 = arith.constant 0 : index
    %286 = vector.load %arg2[%c1_98, %c0_99, %c0_100] : memref<2x1x128xf32, #tpu.memory_space<vmem>>, vector<1x1x128xf32>
    %287 = vector.shape_cast %286 : vector<1x1x128xf32> to vector<1x128xf32>
    %cst_101 = arith.constant dense<0.000000e+00> : vector<7xf32>
    %288 = vector.multi_reduction <add>, %285, %cst_101 [1] : vector<7x128xf32> to vector<7xf32>
    %289 = vector.shape_cast %288 : vector<7xf32> to vector<7x1xf32>
    %cst_102 = arith.constant 1.280000e+02 : f32
    %290 = vector.broadcast %cst_102 : f32 to vector<7x1xf32>
    %291 = arith.divf %289, %290 : vector<7x1xf32>
    %292 = vector.broadcast %291 : vector<7x1xf32> to vector<7x128xf32>
    %293 = arith.subf %285, %292 : vector<7x128xf32>
    %294 = arith.mulf %293, %293 : vector<7x128xf32>
    %cst_103 = arith.constant dense<0.000000e+00> : vector<7xf32>
    %295 = vector.multi_reduction <add>, %294, %cst_103 [1] : vector<7x128xf32> to vector<7xf32>
    %296 = vector.shape_cast %295 : vector<7xf32> to vector<7x1xf32>
    %cst_104 = arith.constant 1.280000e+02 : f32
    %297 = vector.broadcast %cst_104 : f32 to vector<7x1xf32>
    %298 = arith.divf %296, %297 : vector<7x1xf32>
    %299 = vector.broadcast %291 : vector<7x1xf32> to vector<7x128xf32>
    %300 = arith.subf %285, %299 : vector<7x128xf32>
    %cst_105 = arith.constant 9.99999974E-6 : f32
    %301 = vector.broadcast %cst_105 : f32 to vector<7x1xf32>
    %302 = arith.addf %298, %301 : vector<7x1xf32>
    %303 = math.rsqrt %302 : vector<7x1xf32>
    %304 = vector.broadcast %303 : vector<7x1xf32> to vector<7x128xf32>
    %305 = arith.mulf %300, %304 : vector<7x128xf32>
    %306 = vector.broadcast %287 : vector<1x128xf32> to vector<7x128xf32>
    %307 = arith.mulf %305, %306 : vector<7x128xf32>
    %308 = arith.truncf %307 : vector<7x128xf32> to vector<7x128xbf16>
    %c1_106 = arith.constant 1 : index
    %c0_107 = arith.constant 0 : index
    %c0_108 = arith.constant 0 : index
    %309 = vector.load %arg3[%c1_106, %c0_107, %c0_108] : memref<2x128x256xbf16, #tpu.memory_space<vmem>>, vector<1x128x256xbf16>
    %310 = vector.shape_cast %309 : vector<1x128x256xbf16> to vector<128x256xbf16>
    %cst_109 = arith.constant dense<0.000000e+00> : vector<7x256xf32>
    %311 = tpu.matmul %308, %310, %cst_109 {dimension_numbers = #tpu.dot_dimension_numbers<[1], [0], [0], [1], [0, 0, 1, 1], [], []>} : vector<7x128xbf16>, vector<128x256xbf16>, vector<7x256xf32> -> vector<7x256xf32>
    %c1_110 = arith.constant 1 : index
    %c0_111 = arith.constant 0 : index
    %c0_112 = arith.constant 0 : index
    %312 = vector.load %arg5[%c1_110, %c0_111, %c0_112] : memref<2x4x32xf32, #tpu.memory_space<vmem>>, vector<1x4x32xf32>
    %313 = vector.shape_cast %312 : vector<1x4x32xf32> to vector<4x32xf32>
    %c1_113 = arith.constant 1 : index
    %c0_114 = arith.constant 0 : index
    %c0_115 = arith.constant 0 : index
    %314 = vector.load %arg6[%c1_113, %c0_114, %c0_115] : memref<2x2x32xf32, #tpu.memory_space<vmem>>, vector<1x2x32xf32>
    %315 = vector.shape_cast %314 : vector<1x2x32xf32> to vector<2x32xf32>
    %316 = vector.extract_strided_slice %311 {offsets = [0, 128], sizes = [7, 32], strides = [1, 1]} : vector<7x256xf32> to vector<7x32xf32>
    %317 = vector.extract_strided_slice %311 {offsets = [0, 192], sizes = [7, 32], strides = [1, 1]} : vector<7x256xf32> to vector<7x32xf32>
    %318 = arith.mulf %316, %316 : vector<7x32xf32>
    %cst_116 = arith.constant dense<0.000000e+00> : vector<7xf32>
    %319 = vector.multi_reduction <add>, %318, %cst_116 [1] : vector<7x32xf32> to vector<7xf32>
    %320 = vector.shape_cast %319 : vector<7xf32> to vector<7x1xf32>
    %cst_117 = arith.constant 9.99999996E-13 : f32
    %321 = vector.broadcast %cst_117 : f32 to vector<7x1xf32>
    %322 = arith.addf %320, %321 : vector<7x1xf32>
    %323 = math.rsqrt %322 : vector<7x1xf32>
    %324 = vector.broadcast %323 : vector<7x1xf32> to vector<7x32xf32>
    %325 = arith.mulf %316, %324 : vector<7x32xf32>
    %326 = vector.extract_strided_slice %315 {offsets = [0, 0], sizes = [1, 32], strides = [1, 1]} : vector<2x32xf32> to vector<1x32xf32>
    %327 = vector.broadcast %326 : vector<1x32xf32> to vector<7x32xf32>
    %328 = arith.mulf %325, %327 : vector<7x32xf32>
    %329 = vector.extract_strided_slice %328 {offsets = [0, 0], sizes = [7, 16], strides = [1, 1]} : vector<7x32xf32> to vector<7x16xf32>
    %330 = vector.extract_strided_slice %328 {offsets = [0, 16], sizes = [7, 16], strides = [1, 1]} : vector<7x32xf32> to vector<7x16xf32>
    %cst_118 = arith.constant 0.000000e+00 : f32
    %331 = vector.broadcast %cst_118 : f32 to vector<7x16xf32>
    %332 = arith.subf %331, %330 : vector<7x16xf32>
    %333 = tpu.concatenate %332, %329 in 1 : vector<7x16xf32>, vector<7x16xf32> -> vector<7x32xf32>
    %334 = arith.mulf %328, %2 : vector<7x32xf32>
    %335 = arith.mulf %333, %3 : vector<7x32xf32>
    %336 = arith.addf %334, %335 : vector<7x32xf32>
    %337 = arith.mulf %336, %5 : vector<7x32xf32>
    %338 = vector.extract_strided_slice %311 {offsets = [0, 160], sizes = [7, 32], strides = [1, 1]} : vector<7x256xf32> to vector<7x32xf32>
    %339 = vector.extract_strided_slice %311 {offsets = [0, 224], sizes = [7, 32], strides = [1, 1]} : vector<7x256xf32> to vector<7x32xf32>
    %340 = arith.mulf %338, %338 : vector<7x32xf32>
    %cst_119 = arith.constant dense<0.000000e+00> : vector<7xf32>
    %341 = vector.multi_reduction <add>, %340, %cst_119 [1] : vector<7x32xf32> to vector<7xf32>
    %342 = vector.shape_cast %341 : vector<7xf32> to vector<7x1xf32>
    %cst_120 = arith.constant 9.99999996E-13 : f32
    %343 = vector.broadcast %cst_120 : f32 to vector<7x1xf32>
    %344 = arith.addf %342, %343 : vector<7x1xf32>
    %345 = math.rsqrt %344 : vector<7x1xf32>
    %346 = vector.broadcast %345 : vector<7x1xf32> to vector<7x32xf32>
    %347 = arith.mulf %338, %346 : vector<7x32xf32>
    %348 = vector.extract_strided_slice %315 {offsets = [1, 0], sizes = [1, 32], strides = [1, 1]} : vector<2x32xf32> to vector<1x32xf32>
    %349 = vector.broadcast %348 : vector<1x32xf32> to vector<7x32xf32>
    %350 = arith.mulf %347, %349 : vector<7x32xf32>
    %351 = vector.extract_strided_slice %350 {offsets = [0, 0], sizes = [7, 16], strides = [1, 1]} : vector<7x32xf32> to vector<7x16xf32>
    %352 = vector.extract_strided_slice %350 {offsets = [0, 16], sizes = [7, 16], strides = [1, 1]} : vector<7x32xf32> to vector<7x16xf32>
    %cst_121 = arith.constant 0.000000e+00 : f32
    %353 = vector.broadcast %cst_121 : f32 to vector<7x16xf32>
    %354 = arith.subf %353, %352 : vector<7x16xf32>
    %355 = tpu.concatenate %354, %351 in 1 : vector<7x16xf32>, vector<7x16xf32> -> vector<7x32xf32>
    %356 = arith.mulf %350, %2 : vector<7x32xf32>
    %357 = arith.mulf %355, %3 : vector<7x32xf32>
    %358 = arith.addf %356, %357 : vector<7x32xf32>
    %359 = arith.mulf %358, %5 : vector<7x32xf32>
    %360 = vector.extract_strided_slice %311 {offsets = [0, 0], sizes = [7, 32], strides = [1, 1]} : vector<7x256xf32> to vector<7x32xf32>
    %361 = arith.mulf %360, %360 : vector<7x32xf32>
    %cst_122 = arith.constant dense<0.000000e+00> : vector<7xf32>
    %362 = vector.multi_reduction <add>, %361, %cst_122 [1] : vector<7x32xf32> to vector<7xf32>
    %363 = vector.shape_cast %362 : vector<7xf32> to vector<7x1xf32>
    %cst_123 = arith.constant 9.99999996E-13 : f32
    %364 = vector.broadcast %cst_123 : f32 to vector<7x1xf32>
    %365 = arith.addf %363, %364 : vector<7x1xf32>
    %366 = math.rsqrt %365 : vector<7x1xf32>
    %367 = vector.broadcast %366 : vector<7x1xf32> to vector<7x32xf32>
    %368 = arith.mulf %360, %367 : vector<7x32xf32>
    %369 = vector.extract_strided_slice %313 {offsets = [0, 0], sizes = [1, 32], strides = [1, 1]} : vector<4x32xf32> to vector<1x32xf32>
    %370 = vector.broadcast %369 : vector<1x32xf32> to vector<7x32xf32>
    %371 = arith.mulf %368, %370 : vector<7x32xf32>
    %372 = vector.extract_strided_slice %371 {offsets = [0, 0], sizes = [7, 16], strides = [1, 1]} : vector<7x32xf32> to vector<7x16xf32>
    %373 = vector.extract_strided_slice %371 {offsets = [0, 16], sizes = [7, 16], strides = [1, 1]} : vector<7x32xf32> to vector<7x16xf32>
    %cst_124 = arith.constant 0.000000e+00 : f32
    %374 = vector.broadcast %cst_124 : f32 to vector<7x16xf32>
    %375 = arith.subf %374, %373 : vector<7x16xf32>
    %376 = tpu.concatenate %375, %372 in 1 : vector<7x16xf32>, vector<7x16xf32> -> vector<7x32xf32>
    %377 = arith.mulf %371, %2 : vector<7x32xf32>
    %378 = arith.mulf %376, %3 : vector<7x32xf32>
    %379 = arith.addf %377, %378 : vector<7x32xf32>
    %380 = arith.mulf %379, %4 : vector<7x32xf32>
    %381 = tpu.transpose %337, [1, 0] : vector<7x32xf32> -> vector<32x7xf32>
    %cst_125 = arith.constant dense<0.000000e+00> : vector<7x7xf32>
    %382 = tpu.matmul %380, %381, %cst_125 {dimension_numbers = #tpu.dot_dimension_numbers<[1], [0], [0], [1], [0, 0, 1, 1], [], []>} : vector<7x32xf32>, vector<32x7xf32>, vector<7x7xf32> -> vector<7x7xf32>
    %cst_126 = arith.constant 1.000000e+01 : f32
    %383 = vector.broadcast %cst_126 : f32 to vector<7x7xf32>
    %384 = arith.mulf %382, %383 : vector<7x7xf32>
    %c0_127 = arith.constant 0 : index
    %c0_128 = arith.constant 0 : index
    %c0_129 = arith.constant 0 : index
    %385 = vector.load %arg16[%c0_127, %c0_128, %c0_129] : memref<4x7x7xf32, #tpu.memory_space<vmem>>, vector<1x7x7xf32>
    %386 = vector.shape_cast %385 : vector<1x7x7xf32> to vector<7x7xf32>
    %387 = arith.addf %384, %386 : vector<7x7xf32>
    %cst_130 = arith.constant dense<0xFF800000> : vector<7xf32>
    %388 = vector.multi_reduction <maximumf>, %387, %cst_130 [1] : vector<7x7xf32> to vector<7xf32>
    %389 = vector.shape_cast %388 : vector<7xf32> to vector<7x1xf32>
    %390 = vector.broadcast %389 : vector<7x1xf32> to vector<7x7xf32>
    %391 = arith.subf %387, %390 : vector<7x7xf32>
    %392 = math.exp %391 : vector<7x7xf32>
    %cst_131 = arith.constant dense<0.000000e+00> : vector<7xf32>
    %393 = vector.multi_reduction <add>, %392, %cst_131 [1] : vector<7x7xf32> to vector<7xf32>
    %394 = vector.shape_cast %393 : vector<7xf32> to vector<7x1xf32>
    %395 = tpu.reciprocal %394 {approx = true} : vector<7x1xf32> -> vector<7x1xf32>
    %396 = vector.broadcast %395 : vector<7x1xf32> to vector<7x7xf32>
    %397 = arith.mulf %392, %396 : vector<7x7xf32>
    %cst_132 = arith.constant dense<0.000000e+00> : vector<7x32xf32>
    %398 = tpu.matmul %397, %317, %cst_132 {dimension_numbers = #tpu.dot_dimension_numbers<[1], [0], [0], [1], [0, 0, 1, 1], [], []>} : vector<7x7xf32>, vector<7x32xf32>, vector<7x32xf32> -> vector<7x32xf32>
    %399 = vector.extract_strided_slice %311 {offsets = [0, 32], sizes = [7, 32], strides = [1, 1]} : vector<7x256xf32> to vector<7x32xf32>
    %400 = arith.mulf %399, %399 : vector<7x32xf32>
    %cst_133 = arith.constant dense<0.000000e+00> : vector<7xf32>
    %401 = vector.multi_reduction <add>, %400, %cst_133 [1] : vector<7x32xf32> to vector<7xf32>
    %402 = vector.shape_cast %401 : vector<7xf32> to vector<7x1xf32>
    %cst_134 = arith.constant 9.99999996E-13 : f32
    %403 = vector.broadcast %cst_134 : f32 to vector<7x1xf32>
    %404 = arith.addf %402, %403 : vector<7x1xf32>
    %405 = math.rsqrt %404 : vector<7x1xf32>
    %406 = vector.broadcast %405 : vector<7x1xf32> to vector<7x32xf32>
    %407 = arith.mulf %399, %406 : vector<7x32xf32>
    %408 = vector.extract_strided_slice %313 {offsets = [1, 0], sizes = [1, 32], strides = [1, 1]} : vector<4x32xf32> to vector<1x32xf32>
    %409 = vector.broadcast %408 : vector<1x32xf32> to vector<7x32xf32>
    %410 = arith.mulf %407, %409 : vector<7x32xf32>
    %411 = vector.extract_strided_slice %410 {offsets = [0, 0], sizes = [7, 16], strides = [1, 1]} : vector<7x32xf32> to vector<7x16xf32>
    %412 = vector.extract_strided_slice %410 {offsets = [0, 16], sizes = [7, 16], strides = [1, 1]} : vector<7x32xf32> to vector<7x16xf32>
    %cst_135 = arith.constant 0.000000e+00 : f32
    %413 = vector.broadcast %cst_135 : f32 to vector<7x16xf32>
    %414 = arith.subf %413, %412 : vector<7x16xf32>
    %415 = tpu.concatenate %414, %411 in 1 : vector<7x16xf32>, vector<7x16xf32> -> vector<7x32xf32>
    %416 = arith.mulf %410, %2 : vector<7x32xf32>
    %417 = arith.mulf %415, %3 : vector<7x32xf32>
    %418 = arith.addf %416, %417 : vector<7x32xf32>
    %419 = arith.mulf %418, %4 : vector<7x32xf32>
    %420 = tpu.transpose %337, [1, 0] : vector<7x32xf32> -> vector<32x7xf32>
    %cst_136 = arith.constant dense<0.000000e+00> : vector<7x7xf32>
    %421 = tpu.matmul %419, %420, %cst_136 {dimension_numbers = #tpu.dot_dimension_numbers<[1], [0], [0], [1], [0, 0, 1, 1], [], []>} : vector<7x32xf32>, vector<32x7xf32>, vector<7x7xf32> -> vector<7x7xf32>
    %cst_137 = arith.constant 1.000000e+01 : f32
    %422 = vector.broadcast %cst_137 : f32 to vector<7x7xf32>
    %423 = arith.mulf %421, %422 : vector<7x7xf32>
    %c1_138 = arith.constant 1 : index
    %c0_139 = arith.constant 0 : index
    %c0_140 = arith.constant 0 : index
    %424 = vector.load %arg16[%c1_138, %c0_139, %c0_140] : memref<4x7x7xf32, #tpu.memory_space<vmem>>, vector<1x7x7xf32>
    %425 = vector.shape_cast %424 : vector<1x7x7xf32> to vector<7x7xf32>
    %426 = arith.addf %423, %425 : vector<7x7xf32>
    %cst_141 = arith.constant dense<0xFF800000> : vector<7xf32>
    %427 = vector.multi_reduction <maximumf>, %426, %cst_141 [1] : vector<7x7xf32> to vector<7xf32>
    %428 = vector.shape_cast %427 : vector<7xf32> to vector<7x1xf32>
    %429 = vector.broadcast %428 : vector<7x1xf32> to vector<7x7xf32>
    %430 = arith.subf %426, %429 : vector<7x7xf32>
    %431 = math.exp %430 : vector<7x7xf32>
    %cst_142 = arith.constant dense<0.000000e+00> : vector<7xf32>
    %432 = vector.multi_reduction <add>, %431, %cst_142 [1] : vector<7x7xf32> to vector<7xf32>
    %433 = vector.shape_cast %432 : vector<7xf32> to vector<7x1xf32>
    %434 = tpu.reciprocal %433 {approx = true} : vector<7x1xf32> -> vector<7x1xf32>
    %435 = vector.broadcast %434 : vector<7x1xf32> to vector<7x7xf32>
    %436 = arith.mulf %431, %435 : vector<7x7xf32>
    %cst_143 = arith.constant dense<0.000000e+00> : vector<7x32xf32>
    %437 = tpu.matmul %436, %317, %cst_143 {dimension_numbers = #tpu.dot_dimension_numbers<[1], [0], [0], [1], [0, 0, 1, 1], [], []>} : vector<7x7xf32>, vector<7x32xf32>, vector<7x32xf32> -> vector<7x32xf32>
    %438 = vector.extract_strided_slice %311 {offsets = [0, 64], sizes = [7, 32], strides = [1, 1]} : vector<7x256xf32> to vector<7x32xf32>
    %439 = arith.mulf %438, %438 : vector<7x32xf32>
    %cst_144 = arith.constant dense<0.000000e+00> : vector<7xf32>
    %440 = vector.multi_reduction <add>, %439, %cst_144 [1] : vector<7x32xf32> to vector<7xf32>
    %441 = vector.shape_cast %440 : vector<7xf32> to vector<7x1xf32>
    %cst_145 = arith.constant 9.99999996E-13 : f32
    %442 = vector.broadcast %cst_145 : f32 to vector<7x1xf32>
    %443 = arith.addf %441, %442 : vector<7x1xf32>
    %444 = math.rsqrt %443 : vector<7x1xf32>
    %445 = vector.broadcast %444 : vector<7x1xf32> to vector<7x32xf32>
    %446 = arith.mulf %438, %445 : vector<7x32xf32>
    %447 = vector.extract_strided_slice %313 {offsets = [2, 0], sizes = [1, 32], strides = [1, 1]} : vector<4x32xf32> to vector<1x32xf32>
    %448 = vector.broadcast %447 : vector<1x32xf32> to vector<7x32xf32>
    %449 = arith.mulf %446, %448 : vector<7x32xf32>
    %450 = vector.extract_strided_slice %449 {offsets = [0, 0], sizes = [7, 16], strides = [1, 1]} : vector<7x32xf32> to vector<7x16xf32>
    %451 = vector.extract_strided_slice %449 {offsets = [0, 16], sizes = [7, 16], strides = [1, 1]} : vector<7x32xf32> to vector<7x16xf32>
    %cst_146 = arith.constant 0.000000e+00 : f32
    %452 = vector.broadcast %cst_146 : f32 to vector<7x16xf32>
    %453 = arith.subf %452, %451 : vector<7x16xf32>
    %454 = tpu.concatenate %453, %450 in 1 : vector<7x16xf32>, vector<7x16xf32> -> vector<7x32xf32>
    %455 = arith.mulf %449, %2 : vector<7x32xf32>
    %456 = arith.mulf %454, %3 : vector<7x32xf32>
    %457 = arith.addf %455, %456 : vector<7x32xf32>
    %458 = arith.mulf %457, %4 : vector<7x32xf32>
    %459 = tpu.transpose %359, [1, 0] : vector<7x32xf32> -> vector<32x7xf32>
    %cst_147 = arith.constant dense<0.000000e+00> : vector<7x7xf32>
    %460 = tpu.matmul %458, %459, %cst_147 {dimension_numbers = #tpu.dot_dimension_numbers<[1], [0], [0], [1], [0, 0, 1, 1], [], []>} : vector<7x32xf32>, vector<32x7xf32>, vector<7x7xf32> -> vector<7x7xf32>
    %cst_148 = arith.constant 1.000000e+01 : f32
    %461 = vector.broadcast %cst_148 : f32 to vector<7x7xf32>
    %462 = arith.mulf %460, %461 : vector<7x7xf32>
    %c2_149 = arith.constant 2 : index
    %c0_150 = arith.constant 0 : index
    %c0_151 = arith.constant 0 : index
    %463 = vector.load %arg16[%c2_149, %c0_150, %c0_151] : memref<4x7x7xf32, #tpu.memory_space<vmem>>, vector<1x7x7xf32>
    %464 = vector.shape_cast %463 : vector<1x7x7xf32> to vector<7x7xf32>
    %465 = arith.addf %462, %464 : vector<7x7xf32>
    %cst_152 = arith.constant dense<0xFF800000> : vector<7xf32>
    %466 = vector.multi_reduction <maximumf>, %465, %cst_152 [1] : vector<7x7xf32> to vector<7xf32>
    %467 = vector.shape_cast %466 : vector<7xf32> to vector<7x1xf32>
    %468 = vector.broadcast %467 : vector<7x1xf32> to vector<7x7xf32>
    %469 = arith.subf %465, %468 : vector<7x7xf32>
    %470 = math.exp %469 : vector<7x7xf32>
    %cst_153 = arith.constant dense<0.000000e+00> : vector<7xf32>
    %471 = vector.multi_reduction <add>, %470, %cst_153 [1] : vector<7x7xf32> to vector<7xf32>
    %472 = vector.shape_cast %471 : vector<7xf32> to vector<7x1xf32>
    %473 = tpu.reciprocal %472 {approx = true} : vector<7x1xf32> -> vector<7x1xf32>
    %474 = vector.broadcast %473 : vector<7x1xf32> to vector<7x7xf32>
    %475 = arith.mulf %470, %474 : vector<7x7xf32>
    %cst_154 = arith.constant dense<0.000000e+00> : vector<7x32xf32>
    %476 = tpu.matmul %475, %339, %cst_154 {dimension_numbers = #tpu.dot_dimension_numbers<[1], [0], [0], [1], [0, 0, 1, 1], [], []>} : vector<7x7xf32>, vector<7x32xf32>, vector<7x32xf32> -> vector<7x32xf32>
    %477 = vector.extract_strided_slice %311 {offsets = [0, 96], sizes = [7, 32], strides = [1, 1]} : vector<7x256xf32> to vector<7x32xf32>
    %478 = arith.mulf %477, %477 : vector<7x32xf32>
    %cst_155 = arith.constant dense<0.000000e+00> : vector<7xf32>
    %479 = vector.multi_reduction <add>, %478, %cst_155 [1] : vector<7x32xf32> to vector<7xf32>
    %480 = vector.shape_cast %479 : vector<7xf32> to vector<7x1xf32>
    %cst_156 = arith.constant 9.99999996E-13 : f32
    %481 = vector.broadcast %cst_156 : f32 to vector<7x1xf32>
    %482 = arith.addf %480, %481 : vector<7x1xf32>
    %483 = math.rsqrt %482 : vector<7x1xf32>
    %484 = vector.broadcast %483 : vector<7x1xf32> to vector<7x32xf32>
    %485 = arith.mulf %477, %484 : vector<7x32xf32>
    %486 = vector.extract_strided_slice %313 {offsets = [3, 0], sizes = [1, 32], strides = [1, 1]} : vector<4x32xf32> to vector<1x32xf32>
    %487 = vector.broadcast %486 : vector<1x32xf32> to vector<7x32xf32>
    %488 = arith.mulf %485, %487 : vector<7x32xf32>
    %489 = vector.extract_strided_slice %488 {offsets = [0, 0], sizes = [7, 16], strides = [1, 1]} : vector<7x32xf32> to vector<7x16xf32>
    %490 = vector.extract_strided_slice %488 {offsets = [0, 16], sizes = [7, 16], strides = [1, 1]} : vector<7x32xf32> to vector<7x16xf32>
    %cst_157 = arith.constant 0.000000e+00 : f32
    %491 = vector.broadcast %cst_157 : f32 to vector<7x16xf32>
    %492 = arith.subf %491, %490 : vector<7x16xf32>
    %493 = tpu.concatenate %492, %489 in 1 : vector<7x16xf32>, vector<7x16xf32> -> vector<7x32xf32>
    %494 = arith.mulf %488, %2 : vector<7x32xf32>
    %495 = arith.mulf %493, %3 : vector<7x32xf32>
    %496 = arith.addf %494, %495 : vector<7x32xf32>
    %497 = arith.mulf %496, %4 : vector<7x32xf32>
    %498 = tpu.transpose %359, [1, 0] : vector<7x32xf32> -> vector<32x7xf32>
    %cst_158 = arith.constant dense<0.000000e+00> : vector<7x7xf32>
    %499 = tpu.matmul %497, %498, %cst_158 {dimension_numbers = #tpu.dot_dimension_numbers<[1], [0], [0], [1], [0, 0, 1, 1], [], []>} : vector<7x32xf32>, vector<32x7xf32>, vector<7x7xf32> -> vector<7x7xf32>
    %cst_159 = arith.constant 1.000000e+01 : f32
    %500 = vector.broadcast %cst_159 : f32 to vector<7x7xf32>
    %501 = arith.mulf %499, %500 : vector<7x7xf32>
    %c3_160 = arith.constant 3 : index
    %c0_161 = arith.constant 0 : index
    %c0_162 = arith.constant 0 : index
    %502 = vector.load %arg16[%c3_160, %c0_161, %c0_162] : memref<4x7x7xf32, #tpu.memory_space<vmem>>, vector<1x7x7xf32>
    %503 = vector.shape_cast %502 : vector<1x7x7xf32> to vector<7x7xf32>
    %504 = arith.addf %501, %503 : vector<7x7xf32>
    %cst_163 = arith.constant dense<0xFF800000> : vector<7xf32>
    %505 = vector.multi_reduction <maximumf>, %504, %cst_163 [1] : vector<7x7xf32> to vector<7xf32>
    %506 = vector.shape_cast %505 : vector<7xf32> to vector<7x1xf32>
    %507 = vector.broadcast %506 : vector<7x1xf32> to vector<7x7xf32>
    %508 = arith.subf %504, %507 : vector<7x7xf32>
    %509 = math.exp %508 : vector<7x7xf32>
    %cst_164 = arith.constant dense<0.000000e+00> : vector<7xf32>
    %510 = vector.multi_reduction <add>, %509, %cst_164 [1] : vector<7x7xf32> to vector<7xf32>
    %511 = vector.shape_cast %510 : vector<7xf32> to vector<7x1xf32>
    %512 = tpu.reciprocal %511 {approx = true} : vector<7x1xf32> -> vector<7x1xf32>
    %513 = vector.broadcast %512 : vector<7x1xf32> to vector<7x7xf32>
    %514 = arith.mulf %509, %513 : vector<7x7xf32>
    %cst_165 = arith.constant dense<0.000000e+00> : vector<7x32xf32>
    %515 = tpu.matmul %514, %339, %cst_165 {dimension_numbers = #tpu.dot_dimension_numbers<[1], [0], [0], [1], [0, 0, 1, 1], [], []>} : vector<7x7xf32>, vector<7x32xf32>, vector<7x32xf32> -> vector<7x32xf32>
    %516 = tpu.concatenate %398, %437, %476, %515 in 1 : vector<7x32xf32>, vector<7x32xf32>, vector<7x32xf32>, vector<7x32xf32> -> vector<7x128xf32>
    %517 = arith.truncf %516 : vector<7x128xf32> to vector<7x128xbf16>
    %c1_166 = arith.constant 1 : index
    %c0_167 = arith.constant 0 : index
    %c0_168 = arith.constant 0 : index
    %518 = vector.load %arg4[%c1_166, %c0_167, %c0_168] : memref<2x128x128xbf16, #tpu.memory_space<vmem>>, vector<1x128x128xbf16>
    %519 = vector.shape_cast %518 : vector<1x128x128xbf16> to vector<128x128xbf16>
    %cst_169 = arith.constant dense<0.000000e+00> : vector<7x128xf32>
    %520 = tpu.matmul %517, %519, %cst_169 {dimension_numbers = #tpu.dot_dimension_numbers<[1], [0], [0], [1], [0, 0, 1, 1], [], []>} : vector<7x128xbf16>, vector<128x128xbf16>, vector<7x128xf32> -> vector<7x128xf32>
    %521 = arith.addf %285, %520 : vector<7x128xf32>
    %c1_170 = arith.constant 1 : index
    %c0_171 = arith.constant 0 : index
    %c0_172 = arith.constant 0 : index
    %522 = vector.load %arg7[%c1_170, %c0_171, %c0_172] : memref<2x1x128xf32, #tpu.memory_space<vmem>>, vector<1x1x128xf32>
    %523 = vector.shape_cast %522 : vector<1x1x128xf32> to vector<1x128xf32>
    %cst_173 = arith.constant dense<0.000000e+00> : vector<7xf32>
    %524 = vector.multi_reduction <add>, %521, %cst_173 [1] : vector<7x128xf32> to vector<7xf32>
    %525 = vector.shape_cast %524 : vector<7xf32> to vector<7x1xf32>
    %cst_174 = arith.constant 1.280000e+02 : f32
    %526 = vector.broadcast %cst_174 : f32 to vector<7x1xf32>
    %527 = arith.divf %525, %526 : vector<7x1xf32>
    %528 = vector.broadcast %527 : vector<7x1xf32> to vector<7x128xf32>
    %529 = arith.subf %521, %528 : vector<7x128xf32>
    %530 = arith.mulf %529, %529 : vector<7x128xf32>
    %cst_175 = arith.constant dense<0.000000e+00> : vector<7xf32>
    %531 = vector.multi_reduction <add>, %530, %cst_175 [1] : vector<7x128xf32> to vector<7xf32>
    %532 = vector.shape_cast %531 : vector<7xf32> to vector<7x1xf32>
    %cst_176 = arith.constant 1.280000e+02 : f32
    %533 = vector.broadcast %cst_176 : f32 to vector<7x1xf32>
    %534 = arith.divf %532, %533 : vector<7x1xf32>
    %535 = vector.broadcast %527 : vector<7x1xf32> to vector<7x128xf32>
    %536 = arith.subf %521, %535 : vector<7x128xf32>
    %cst_177 = arith.constant 9.99999974E-6 : f32
    %537 = vector.broadcast %cst_177 : f32 to vector<7x1xf32>
    %538 = arith.addf %534, %537 : vector<7x1xf32>
    %539 = math.rsqrt %538 : vector<7x1xf32>
    %540 = vector.broadcast %539 : vector<7x1xf32> to vector<7x128xf32>
    %541 = arith.mulf %536, %540 : vector<7x128xf32>
    %542 = vector.broadcast %523 : vector<1x128xf32> to vector<7x128xf32>
    %543 = arith.mulf %541, %542 : vector<7x128xf32>
    %544 = arith.truncf %543 : vector<7x128xf32> to vector<7x128xbf16>
    %c1_178 = arith.constant 1 : index
    %c0_179 = arith.constant 0 : index
    %c0_180 = arith.constant 0 : index
    %545 = vector.load %arg8[%c1_178, %c0_179, %c0_180] : memref<2x128x512xbf16, #tpu.memory_space<vmem>>, vector<1x128x512xbf16>
    %546 = vector.shape_cast %545 : vector<1x128x512xbf16> to vector<128x512xbf16>
    %cst_181 = arith.constant dense<0.000000e+00> : vector<7x512xf32>
    %547 = tpu.matmul %544, %546, %cst_181 {dimension_numbers = #tpu.dot_dimension_numbers<[1], [0], [0], [1], [0, 0, 1, 1], [], []>} : vector<7x128xbf16>, vector<128x512xbf16>, vector<7x512xf32> -> vector<7x512xf32>
    %548 = arith.mulf %547, %547 : vector<7x512xf32>
    %549 = arith.mulf %547, %548 : vector<7x512xf32>
    %cst_182 = arith.constant 4.471500e-02 : f32
    %550 = vector.broadcast %cst_182 : f32 to vector<7x512xf32>
    %551 = arith.mulf %550, %549 : vector<7x512xf32>
    %552 = arith.addf %547, %551 : vector<7x512xf32>
    %cst_183 = arith.constant 0.797884583 : f32
    %553 = vector.broadcast %cst_183 : f32 to vector<7x512xf32>
    %554 = arith.mulf %553, %552 : vector<7x512xf32>
    %555 = math.tanh %554 : vector<7x512xf32>
    %cst_184 = arith.constant 1.000000e+00 : f32
    %556 = vector.broadcast %cst_184 : f32 to vector<7x512xf32>
    %557 = arith.addf %556, %555 : vector<7x512xf32>
    %cst_185 = arith.constant 5.000000e-01 : f32
    %558 = vector.broadcast %cst_185 : f32 to vector<7x512xf32>
    %559 = arith.mulf %558, %557 : vector<7x512xf32>
    %560 = arith.mulf %547, %559 : vector<7x512xf32>
    %561 = arith.truncf %560 : vector<7x512xf32> to vector<7x512xbf16>
    %c1_186 = arith.constant 1 : index
    %c0_187 = arith.constant 0 : index
    %c0_188 = arith.constant 0 : index
    %562 = vector.load %arg9[%c1_186, %c0_187, %c0_188] : memref<2x512x128xbf16, #tpu.memory_space<vmem>>, vector<1x512x128xbf16>
    %563 = vector.shape_cast %562 : vector<1x512x128xbf16> to vector<512x128xbf16>
    %cst_189 = arith.constant dense<0.000000e+00> : vector<7x128xf32>
    %564 = tpu.matmul %561, %563, %cst_189 {dimension_numbers = #tpu.dot_dimension_numbers<[1], [0], [0], [1], [0, 0, 1, 1], [], []>} : vector<7x512xbf16>, vector<512x128xbf16>, vector<7x128xf32> -> vector<7x128xf32>
    %565 = arith.addf %521, %564 : vector<7x128xf32>
    %c0_190 = arith.constant 0 : index
    %c0_191 = arith.constant 0 : index
    %566 = vector.load %arg10[%c0_190, %c0_191] : memref<1x128xf32, #tpu.memory_space<vmem>>, vector<1x128xf32>
    %cst_192 = arith.constant dense<0.000000e+00> : vector<7xf32>
    %567 = vector.multi_reduction <add>, %565, %cst_192 [1] : vector<7x128xf32> to vector<7xf32>
    %568 = vector.shape_cast %567 : vector<7xf32> to vector<7x1xf32>
    %cst_193 = arith.constant 1.280000e+02 : f32
    %569 = vector.broadcast %cst_193 : f32 to vector<7x1xf32>
    %570 = arith.divf %568, %569 : vector<7x1xf32>
    %571 = vector.broadcast %570 : vector<7x1xf32> to vector<7x128xf32>
    %572 = arith.subf %565, %571 : vector<7x128xf32>
    %573 = arith.mulf %572, %572 : vector<7x128xf32>
    %cst_194 = arith.constant dense<0.000000e+00> : vector<7xf32>
    %574 = vector.multi_reduction <add>, %573, %cst_194 [1] : vector<7x128xf32> to vector<7xf32>
    %575 = vector.shape_cast %574 : vector<7xf32> to vector<7x1xf32>
    %cst_195 = arith.constant 1.280000e+02 : f32
    %576 = vector.broadcast %cst_195 : f32 to vector<7x1xf32>
    %577 = arith.divf %575, %576 : vector<7x1xf32>
    %578 = vector.broadcast %570 : vector<7x1xf32> to vector<7x128xf32>
    %579 = arith.subf %565, %578 : vector<7x128xf32>
    %cst_196 = arith.constant 9.99999974E-6 : f32
    %580 = vector.broadcast %cst_196 : f32 to vector<7x1xf32>
    %581 = arith.addf %577, %580 : vector<7x1xf32>
    %582 = math.rsqrt %581 : vector<7x1xf32>
    %583 = vector.broadcast %582 : vector<7x1xf32> to vector<7x128xf32>
    %584 = arith.mulf %579, %583 : vector<7x128xf32>
    %585 = vector.broadcast %566 : vector<1x128xf32> to vector<7x128xf32>
    %586 = arith.mulf %584, %585 : vector<7x128xf32>
    %587 = arith.truncf %586 : vector<7x128xf32> to vector<7x128xbf16>
    %c0_197 = arith.constant 0 : index
    %c0_198 = arith.constant 0 : index
    %588 = vector.load %arg11[%c0_197, %c0_198] : memref<128x512xbf16, #tpu.memory_space<vmem>>, vector<128x512xbf16>
    %cst_199 = arith.constant dense<0.000000e+00> : vector<7x512xf32>
    %589 = tpu.matmul %587, %588, %cst_199 {dimension_numbers = #tpu.dot_dimension_numbers<[1], [0], [0], [1], [0, 0, 1, 1], [], []>} : vector<7x128xbf16>, vector<128x512xbf16>, vector<7x512xf32> -> vector<7x512xf32>
    %c0_200 = arith.constant 0 : index
    %c0_201 = arith.constant 0 : index
    %c0_202 = arith.constant 0 : index
    %590 = vector.load %arg17[%c0_200, %c0_201, %c0_202] : memref<1x7x512xf32, #tpu.memory_space<vmem>>, vector<1x7x512xf32>
    %591 = vector.shape_cast %590 : vector<1x7x512xf32> to vector<7x512xf32>
    %592 = vector.shape_cast %589 : vector<7x512xf32> to vector<1x7x512xf32>
    tpu.vector_store %arg17[%c0_200, %c0_201, %c0_202], %592 {strides = array<i32>} : memref<1x7x512xf32, #tpu.memory_space<vmem>>, vector<1x7x512xf32>,
    return
  }
  func.func @transform_0(%arg0: i32) -> (i32, i32, i32) {
    %c0_i32 = arith.constant 0 : i32
    %c0_i32_0 = arith.constant 0 : i32
    %c0_i32_1 = arith.constant 0 : i32
    return %arg0, %c0_i32, %c0_i32_0 : i32, i32, i32
  }
  func.func @transform_1(%arg0: i32) -> (i32, i32, i32) {
    %c0_i32 = arith.constant 0 : i32
    %c0_i32_0 = arith.constant 0 : i32
    %c0_i32_1 = arith.constant 0 : i32
    %c0_i32_2 = arith.constant 0 : i32
    return %c0_i32, %c0_i32_0, %c0_i32_1 : i32, i32, i32
  }
  func.func @transform_2(%arg0: i32) -> (i32, i32, i32) {
    %c0_i32 = arith.constant 0 : i32
    %c0_i32_0 = arith.constant 0 : i32
    %c0_i32_1 = arith.constant 0 : i32
    %c0_i32_2 = arith.constant 0 : i32
    return %c0_i32, %c0_i32_0, %c0_i32_1 : i32, i32, i32
  }
  func.func @transform_3(%arg0: i32) -> (i32, i32, i32) {
    %c0_i32 = arith.constant 0 : i32
    %c0_i32_0 = arith.constant 0 : i32
    %c0_i32_1 = arith.constant 0 : i32
    %c0_i32_2 = arith.constant 0 : i32
    return %c0_i32, %c0_i32_0, %c0_i32_1 : i32, i32, i32
  }
  func.func @transform_4(%arg0: i32) -> (i32, i32, i32) {
    %c0_i32 = arith.constant 0 : i32
    %c0_i32_0 = arith.constant 0 : i32
    %c0_i32_1 = arith.constant 0 : i32
    %c0_i32_2 = arith.constant 0 : i32
    return %c0_i32, %c0_i32_0, %c0_i32_1 : i32, i32, i32
  }
  func.func @transform_5(%arg0: i32) -> (i32, i32, i32) {
    %c0_i32 = arith.constant 0 : i32
    %c0_i32_0 = arith.constant 0 : i32
    %c0_i32_1 = arith.constant 0 : i32
    %c0_i32_2 = arith.constant 0 : i32
    return %c0_i32, %c0_i32_0, %c0_i32_1 : i32, i32, i32
  }
  func.func @transform_6(%arg0: i32) -> (i32, i32, i32) {
    %c0_i32 = arith.constant 0 : i32
    %c0_i32_0 = arith.constant 0 : i32
    %c0_i32_1 = arith.constant 0 : i32
    %c0_i32_2 = arith.constant 0 : i32
    return %c0_i32, %c0_i32_0, %c0_i32_1 : i32, i32, i32
  }
  func.func @transform_7(%arg0: i32) -> (i32, i32, i32) {
    %c0_i32 = arith.constant 0 : i32
    %c0_i32_0 = arith.constant 0 : i32
    %c0_i32_1 = arith.constant 0 : i32
    %c0_i32_2 = arith.constant 0 : i32
    return %c0_i32, %c0_i32_0, %c0_i32_1 : i32, i32, i32
  }
  func.func @transform_8(%arg0: i32) -> (i32, i32, i32) {
    %c0_i32 = arith.constant 0 : i32
    %c0_i32_0 = arith.constant 0 : i32
    %c0_i32_1 = arith.constant 0 : i32
    %c0_i32_2 = arith.constant 0 : i32
    return %c0_i32, %c0_i32_0, %c0_i32_1 : i32, i32, i32
  }
  func.func @transform_9(%arg0: i32) -> (i32, i32) {
    %c0_i32 = arith.constant 0 : i32
    %c0_i32_0 = arith.constant 0 : i32
    %c0_i32_1 = arith.constant 0 : i32
    return %c0_i32, %c0_i32_0 : i32, i32
  }
  func.func @transform_10(%arg0: i32) -> (i32, i32) {
    %c0_i32 = arith.constant 0 : i32
    %c0_i32_0 = arith.constant 0 : i32
    %c0_i32_1 = arith.constant 0 : i32
    return %c0_i32, %c0_i32_0 : i32, i32
  }
  func.func @transform_11(%arg0: i32) -> (i32, i32) {
    %c0_i32 = arith.constant 0 : i32
    %c0_i32_0 = arith.constant 0 : i32
    %c0_i32_1 = arith.constant 0 : i32
    return %c0_i32, %c0_i32_0 : i32, i32
  }
  func.func @transform_12(%arg0: i32) -> (i32, i32) {
    %c0_i32 = arith.constant 0 : i32
    %c0_i32_0 = arith.constant 0 : i32
    %c0_i32_1 = arith.constant 0 : i32
    return %c0_i32, %c0_i32_0 : i32, i32
  }
  func.func @transform_13(%arg0: i32) -> (i32, i32) {
    %c0_i32 = arith.constant 0 : i32
    %c0_i32_0 = arith.constant 0 : i32
    %c0_i32_1 = arith.constant 0 : i32
    return %c0_i32, %c0_i32_0 : i32, i32
  }
  func.func @transform_14(%arg0: i32) -> (i32, i32) {
    %c0_i32 = arith.constant 0 : i32
    %c0_i32_0 = arith.constant 0 : i32
    %c0_i32_1 = arith.constant 0 : i32
    return %c0_i32, %c0_i32_0 : i32, i32
  }
  func.func @transform_15(%arg0: i32) -> (i32, i32, i32) {
    %c0_i32 = arith.constant 0 : i32
    %c0_i32_0 = arith.constant 0 : i32
    %c0_i32_1 = arith.constant 0 : i32
    %c0_i32_2 = arith.constant 0 : i32
    return %c0_i32, %c0_i32_0, %c0_i32_1 : i32, i32, i32
  }
  func.func @transform_16(%arg0: i32) -> (i32, i32, i32) {
    %c0_i32 = arith.constant 0 : i32
    %c0_i32_0 = arith.constant 0 : i32
    %c0_i32_1 = arith.constant 0 : i32
    return %arg0, %c0_i32, %c0_i32_0 : i32, i32, i32
  }
}

</mosaic_0001>

<llo_original>
// kernel: nextgpt_forward.1
$region0: #{nextgpt_forward.1}
  #allocation0 [shape = 'u32[]', space=smem, size = 0x4, offset = 0x4, fixed_abs, tag = 'smem constant byte address 0x4 - core index']
  #allocation1 [shape = 'u32[144,128]{1,0:T(1,128)}', space=vmem, size = 0x12000, scoped, tag = 'internal scratch']
  %s0 = inlined_call_operand.vmem [shape: f32[2,7,128], index: 0, kind: input, shape index: {}]
  %s1 = inlined_call_operand.vmem [shape: f32[2,1,128], index: 1, kind: input, shape index: {}]
  %s2 = inlined_call_operand.vmem [shape: bf16[2,128,256], index: 2, kind: input, shape index: {}]
  %s3 = inlined_call_operand.vmem [shape: bf16[2,128,128], index: 3, kind: input, shape index: {}]
  %s4 = inlined_call_operand.vmem [shape: f32[2,4,32], index: 4, kind: input, shape index: {}]
  %s5 = inlined_call_operand.vmem [shape: f32[2,2,32], index: 5, kind: input, shape index: {}]
  %s6 = inlined_call_operand.vmem [shape: f32[2,1,128], index: 6, kind: input, shape index: {}]
  %s7 = inlined_call_operand.hbm [shape: bf16[2,128,512], index: 7, kind: input, shape index: {}]
  %s8 = inlined_call_operand.hbm [shape: bf16[2,512,128], index: 8, kind: input, shape index: {}]
  %s9 = inlined_call_operand.vmem [shape: f32[1,128], index: 9, kind: input, shape index: {}]
  %s10 = inlined_call_operand.hbm [shape: bf16[128,512], index: 10, kind: input, shape index: {}]
  %s11 = inlined_call_operand.vmem [shape: f32[7,32], index: 11, kind: input, shape index: {}]
  %s12 = inlined_call_operand.vmem [shape: f32[7,32], index: 12, kind: input, shape index: {}]
  %s13 = inlined_call_operand.vmem [shape: f32[7,32], index: 13, kind: input, shape index: {}]
  %s14 = inlined_call_operand.vmem [shape: f32[7,32], index: 14, kind: input, shape index: {}]
  %s15 = inlined_call_operand.vmem [shape: f32[4,7,7], index: 15, kind: input, shape index: {}]
  %s16 = inlined_call_operand.vmem [shape: f32[2,7,512], index: 16, kind: output, shape index: {}]
  %s17 = sld [smem:[#allocation0]]
  $region109: #{nextgpt_forward.1} parent=0
    _
  %s19 = ssub.s32 1, %s17
  %s20 = scalar_select 0, %s19, %s17
  $region1: #{nextgpt_forward.1} parent=0
    #allocation2 [shape = 'u8[262144]{0}', space=vmem, size = 0x40000, scoped, tag = 'input window, operand 7, single buffered']
    #allocation3 [shape = 's32[2]{0}', space=sflag, size = 0x8, scoped, tag = 'scoped memory for nextgpt_forward.1']
    #allocation4 [shape = 'u8[262144]{0}', space=vmem, size = 0x40000, scoped, tag = 'input window, operand 8, single buffered']
    #allocation5 [shape = 's32[1]{0}', space=sflag, size = 0x4, scoped, tag = 'scoped memory for nextgpt_forward.1']
    #allocation6 [shape = 'u8[131072]{0}', space=vmem, size = 0x20000, scoped, tag = 'input window, operand 10, single buffered']
    %21 = vsyncpa [#allocation3], 0
    %22 = vsyncpa [#allocation5], 0
    loop: start=0, step=1, limit=4
    $region2: #{nextgpt_forward.1} parent=1 // loop_pre_header
      _
    $region3: #{nextgpt_forward.1} parent=1 // loop_header
      %s24 = sphi 0, %s28
      %p25 = scmp.ge.s32.totalorder %s24, 4
      %s34 = sphi 0, %s36
      %s37 = sphi 0, %s34
      %s38 = sphi 0, %s37
      %s54 = sphi 0, %s38
      %s58 = sphi 0, %s58
      %s60 = sphi 0, %s58
      %s61 = sphi 0, %s60
      %s75 = sphi 0, %s61
      %s79 = sphi 0, %s79
      %s81 = sphi 0, %s79
      %s82 = sphi 0, %s81
      %s96 = sphi 0, %s82
      %s100 = sphi 0, %s100
      %s102 = sphi 0, %s100
      %s103 = sphi 0, %s102
      %s117 = sphi 0, %s103
      %s121 = sphi 0, %s121
      %s123 = sphi 0, %s121
      %s124 = sphi 0, %s123
      %s138 = sphi 0, %s124
      %s142 = sphi 0, %s142
      %s144 = sphi 0, %s142
      %s145 = sphi 0, %s144
      %s159 = sphi 0, %s145
      %s163 = sphi 0, %s163
      %s165 = sphi 0, %s163
      %s166 = sphi 0, %s165
      %s180 = sphi 0, %s166
      %s184 = sphi 0, %s184
      %s186 = sphi 0, %s184
      %s187 = sphi 0, %s186
      %s201 = sphi 0, %s187
      %s205 = sphi 0, %s205
      %s207 = sphi 0, %s205
      %s208 = sphi 0, %s207
      %s222 = sphi 0, %s208
      %s226 = sphi 0, %s226
      %s228 = sphi 0, %s226
      %s229 = sphi 0, %s228
      %s243 = sphi 0, %s229
      %s247 = sphi 0, %s247
      %s249 = sphi 0, %s247
      %s250 = sphi 0, %s249
      %s264 = sphi 0, %s250
      %s268 = sphi 0, %s268
      %s270 = sphi 0, %s268
      %s271 = sphi 0, %s270
      %s285 = sphi 0, %s271
      %s289 = sphi 0, %s289
      %s291 = sphi 0, %s289
      %s292 = sphi 0, %s291
      %s306 = sphi 0, %s292
      %s310 = sphi 0, %s310
      %s312 = sphi 0, %s310
      %s313 = sphi 0, %s312
      %s327 = sphi 0, %s313
      %s331 = sphi 0, %s331
      %s333 = sphi 0, %s331
      %s334 = sphi 0, %s333
      %s348 = sphi 0, %s334
      %s352 = sphi 0, %s352
      %s354 = sphi 0, %s352
      %s355 = sphi 0, %s354
      %s369 = sphi 0, %s355
      %s375 = sphi 0, %s377
      %s378 = sphi 0, %s375
      %s379 = sphi 0, %s378
      %s395 = sphi 0, %s379
    $region4: #{nextgpt_forward.1} parent=1 // loop_header_branch
      %27 = sbr.rel (%p25) target = $region8
    $region5: #{nextgpt_forward.1} parent=1 // loop_body
      %s29 = ssub.s32 %s24, 1
      %s30 = ssub.s32 %s24, 2
      %s31 = sadd.s32 %s24, 1
      %s32 = ssub.s32 %s24, %s31
      %p33 = scmp.eq.s32.totalorder %s32, 0
      %s35 = sadd.s32 %s34, 1
      %s36 = scalar_select %p33, %s34, %s35
      %p39 = pneg %p33
      %p40 = scmp.eq.s32.totalorder %s24, 1
      %p41 = por %p39, %p40
      %p42 = scmp.ne.s32.totalorder %s34, %s37
      %p43 = scmp.eq.s32.totalorder %s24, 0
      %p44 = por %p42, %p43
      %p45 = scmp.ne.s32.totalorder %s34, %s37
      %p46 = scmp.eq.s32.totalorder %s29, 1
      %p47 = por %p45, %p46
      %p48 = scmp.ne.s32.totalorder %s37, %s38
      %p49 = scmp.eq.s32.totalorder %s29, 0
      %p50 = por %p48, %p49
      %p51 = scmp.ne.s32.totalorder %s37, %s38
      %p52 = scmp.eq.s32.totalorder %s30, 1
      %p53 = por %p51, %p52
      %p55 = scmp.ne.s32.totalorder %s38, %s54
      %p56 = scmp.eq.s32.totalorder %s30, 0
      %p57 = por %p55, %p56
      %s59 = sadd.s32 %s58, 1
      %p62 = scmp.eq.s32.totalorder %s24, 1
      %p63 = scmp.ne.s32.totalorder %s58, %s60
      %p64 = scmp.eq.s32.totalorder %s24, 0
      %p65 = por %p63, %p64
      %p66 = scmp.ne.s32.totalorder %s58, %s60
      %p67 = scmp.eq.s32.totalorder %s29, 1
      %p68 = por %p66, %p67
      %p69 = scmp.ne.s32.totalorder %s60, %s61
      %p70 = scmp.eq.s32.totalorder %s29, 0
      %p71 = por %p69, %p70
      %p72 = scmp.ne.s32.totalorder %s60, %s61
      %p73 = scmp.eq.s32.totalorder %s30, 1
      %p74 = por %p72, %p73
      %p76 = scmp.ne.s32.totalorder %s61, %s75
      %p77 = scmp.eq.s32.totalorder %s30, 0
      %p78 = por %p76, %p77
      %s80 = sadd.s32 %s79, 1
      %p83 = scmp.eq.s32.totalorder %s24, 1
      %p84 = scmp.ne.s32.totalorder %s79, %s81
      %p85 = scmp.eq.s32.totalorder %s24, 0
      %p86 = por %p84, %p85
      %p87 = scmp.ne.s32.totalorder %s79, %s81
      %p88 = scmp.eq.s32.totalorder %s29, 1
      %p89 = por %p87, %p88
      %p90 = scmp.ne.s32.totalorder %s81, %s82
      %p91 = scmp.eq.s32.totalorder %s29, 0
      %p92 = por %p90, %p91
      %p93 = scmp.ne.s32.totalorder %s81, %s82
      %p94 = scmp.eq.s32.totalorder %s30, 1
      %p95 = por %p93, %p94
      %p97 = scmp.ne.s32.totalorder %s82, %s96
      %p98 = scmp.eq.s32.totalorder %s30, 0
      %p99 = por %p97, %p98
      %s101 = sadd.s32 %s100, 1
      %p104 = scmp.eq.s32.totalorder %s24, 1
      %p105 = scmp.ne.s32.totalorder %s100, %s102
      %p106 = scmp.eq.s32.totalorder %s24, 0
      %p107 = por %p105, %p106
      %p108 = scmp.ne.s32.totalorder %s100, %s102
      %p109 = scmp.eq.s32.totalorder %s29, 1
      %p110 = por %p108, %p109
      %p111 = scmp.ne.s32.totalorder %s102, %s103
      %p112 = scmp.eq.s32.totalorder %s29, 0
      %p113 = por %p111, %p112
      %p114 = scmp.ne.s32.totalorder %s102, %s103
      %p115 = scmp.eq.s32.totalorder %s30, 1
      %p116 = por %p114, %p115
      %p118 = scmp.ne.s32.totalorder %s103, %s117
      %p119 = scmp.eq.s32.totalorder %s30, 0
      %p120 = por %p118, %p119
      %s122 = sadd.s32 %s121, 1
      %p125 = scmp.eq.s32.totalorder %s24, 1
      %p126 = scmp.ne.s32.totalorder %s121, %s123
      %p127 = scmp.eq.s32.totalorder %s24, 0
      %p128 = por %p126, %p127
      %p129 = scmp.ne.s32.totalorder %s121, %s123
      %p130 = scmp.eq.s32.totalorder %s29, 1
      %p131 = por %p129, %p130
      %p132 = scmp.ne.s32.totalorder %s123, %s124
      %p133 = scmp.eq.s32.totalorder %s29, 0
      %p134 = por %p132, %p133
      %p135 = scmp.ne.s32.totalorder %s123, %s124
      %p136 = scmp.eq.s32.totalorder %s30, 1
      %p137 = por %p135, %p136
      %p139 = scmp.ne.s32.totalorder %s124, %s138
      %p140 = scmp.eq.s32.totalorder %s30, 0
      %p141 = por %p139, %p140
      %s143 = sadd.s32 %s142, 1
      %p146 = scmp.eq.s32.totalorder %s24, 1
      %p147 = scmp.ne.s32.totalorder %s142, %s144
      %p148 = scmp.eq.s32.totalorder %s24, 0
      %p149 = por %p147, %p148
      %p150 = scmp.ne.s32.totalorder %s142, %s144
      %p151 = scmp.eq.s32.totalorder %s29, 1
      %p152 = por %p150, %p151
      %p153 = scmp.ne.s32.totalorder %s144, %s145
      %p154 = scmp.eq.s32.totalorder %s29, 0
      %p155 = por %p153, %p154
      %p156 = scmp.ne.s32.totalorder %s144, %s145
      %p157 = scmp.eq.s32.totalorder %s30, 1
      %p158 = por %p156, %p157
      %p160 = scmp.ne.s32.totalorder %s145, %s159
      %p161 = scmp.eq.s32.totalorder %s30, 0
      %p162 = por %p160, %p161
      %s164 = sadd.s32 %s163, 1
      %p167 = scmp.eq.s32.totalorder %s24, 1
      %p168 = scmp.ne.s32.totalorder %s163, %s165
      %p169 = scmp.eq.s32.totalorder %s24, 0
      %p170 = por %p168, %p169
      %p171 = scmp.ne.s32.totalorder %s163, %s165
      %p172 = scmp.eq.s32.totalorder %s29, 1
      %p173 = por %p171, %p172
      %p174 = scmp.ne.s32.totalorder %s165, %s166
      %p175 = scmp.eq.s32.totalorder %s29, 0
      %p176 = por %p174, %p175
      %p177 = scmp.ne.s32.totalorder %s165, %s166
      %p178 = scmp.eq.s32.totalorder %s30, 1
      %p179 = por %p177, %p178
      %p181 = scmp.ne.s32.totalorder %s166, %s180
      %p182 = scmp.eq.s32.totalorder %s30, 0
      %p183 = por %p181, %p182
      %s185 = sadd.s32 %s184, 1
      %p188 = scmp.eq.s32.totalorder %s24, 1
      %p189 = scmp.ne.s32.totalorder %s184, %s186
      %p190 = scmp.eq.s32.totalorder %s24, 0
      %p191 = por %p189, %p190
      %p192 = scmp.ne.s32.totalorder %s184, %s186
      %p193 = scmp.eq.s32.totalorder %s29, 1
      %p194 = por %p192, %p193
      %p195 = scmp.ne.s32.totalorder %s186, %s187
      %p196 = scmp.eq.s32.totalorder %s29, 0
      %p197 = por %p195, %p196
      %p198 = scmp.ne.s32.totalorder %s186, %s187
      %p199 = scmp.eq.s32.totalorder %s30, 1
      %p200 = por %p198, %p199
      %p202 = scmp.ne.s32.totalorder %s187, %s201
      %p203 = scmp.eq.s32.totalorder %s30, 0
      %p204 = por %p202, %p203
      %s206 = sadd.s32 %s205, 1
      %p209 = scmp.eq.s32.totalorder %s24, 1
      %p210 = scmp.ne.s32.totalorder %s205, %s207
      %p211 = scmp.eq.s32.totalorder %s24, 0
      %p212 = por %p210, %p211
      %p213 = scmp.ne.s32.totalorder %s205, %s207
      %p214 = scmp.eq.s32.totalorder %s29, 1
      %p215 = por %p213, %p214
      %p216 = scmp.ne.s32.totalorder %s207, %s208
      %p217 = scmp.eq.s32.totalorder %s29, 0
      %p218 = por %p216, %p217
      %p219 = scmp.ne.s32.totalorder %s207, %s208
      %p220 = scmp.eq.s32.totalorder %s30, 1
      %p221 = por %p219, %p220
      %p223 = scmp.ne.s32.totalorder %s208, %s222
      %p224 = scmp.eq.s32.totalorder %s30, 0
      %p225 = por %p223, %p224
      %s227 = sadd.s32 %s226, 1
      %p230 = scmp.eq.s32.totalorder %s24, 1
      %p231 = scmp.ne.s32.totalorder %s226, %s228
      %p232 = scmp.eq.s32.totalorder %s24, 0
      %p233 = por %p231, %p232
      %p234 = scmp.ne.s32.totalorder %s226, %s228
      %p235 = scmp.eq.s32.totalorder %s29, 1
      %p236 = por %p234, %p235
      %p237 = scmp.ne.s32.totalorder %s228, %s229
      %p238 = scmp.eq.s32.totalorder %s29, 0
      %p239 = por %p237, %p238
      %p240 = scmp.ne.s32.totalorder %s228, %s229
      %p241 = scmp.eq.s32.totalorder %s30, 1
      %p242 = por %p240, %p241
      %p244 = scmp.ne.s32.totalorder %s229, %s243
      %p245 = scmp.eq.s32.totalorder %s30, 0
      %p246 = por %p244, %p245
      %s248 = sadd.s32 %s247, 1
      %p251 = scmp.eq.s32.totalorder %s24, 1
      %p252 = scmp.ne.s32.totalorder %s247, %s249
      %p253 = scmp.eq.s32.totalorder %s24, 0
      %p254 = por %p252, %p253
      %p255 = scmp.ne.s32.totalorder %s247, %s249
      %p256 = scmp.eq.s32.totalorder %s29, 1
      %p257 = por %p255, %p256
      %p258 = scmp.ne.s32.totalorder %s249, %s250
      %p259 = scmp.eq.s32.totalorder %s29, 0
      %p260 = por %p258, %p259
      %p261 = scmp.ne.s32.totalorder %s249, %s250
      %p262 = scmp.eq.s32.totalorder %s30, 1
      %p263 = por %p261, %p262
      %p265 = scmp.ne.s32.totalorder %s250, %s264
      %p266 = scmp.eq.s32.totalorder %s30, 0
      %p267 = por %p265, %p266
      %s269 = sadd.s32 %s268, 1
      %p272 = scmp.eq.s32.totalorder %s24, 1
      %p273 = scmp.ne.s32.totalorder %s268, %s270
      %p274 = scmp.eq.s32.totalorder %s24, 0
      %p275 = por %p273, %p274
      %p276 = scmp.ne.s32.totalorder %s268, %s270
      %p277 = scmp.eq.s32.totalorder %s29, 1
      %p278 = por %p276, %p277
      %p279 = scmp.ne.s32.totalorder %s270, %s271
      %p280 = scmp.eq.s32.totalorder %s29, 0
      %p281 = por %p279, %p280
      %p282 = scmp.ne.s32.totalorder %s270, %s271
      %p283 = scmp.eq.s32.totalorder %s30, 1
      %p284 = por %p282, %p283
      %p286 = scmp.ne.s32.totalorder %s271, %s285
      %p287 = scmp.eq.s32.totalorder %s30, 0
      %p288 = por %p286, %p287
      %s290 = sadd.s32 %s289, 1
      %p293 = scmp.eq.s32.totalorder %s24, 1
      %p294 = scmp.ne.s32.totalorder %s289, %s291
      %p295 = scmp.eq.s32.totalorder %s24, 0
      %p296 = por %p294, %p295
      %p297 = scmp.ne.s32.totalorder %s289, %s291
      %p298 = scmp.eq.s32.totalorder %s29, 1
      %p299 = por %p297, %p298
      %p300 = scmp.ne.s32.totalorder %s291, %s292
      %p301 = scmp.eq.s32.totalorder %s29, 0
      %p302 = por %p300, %p301
      %p303 = scmp.ne.s32.totalorder %s291, %s292
      %p304 = scmp.eq.s32.totalorder %s30, 1
      %p305 = por %p303, %p304
      %p307 = scmp.ne.s32.totalorder %s292, %s306
      %p308 = scmp.eq.s32.totalorder %s30, 0
      %p309 = por %p307, %p308
      %s311 = sadd.s32 %s310, 1
      %p314 = scmp.eq.s32.totalorder %s24, 1
      %p315 = scmp.ne.s32.totalorder %s310, %s312
      %p316 = scmp.eq.s32.totalorder %s24, 0
      %p317 = por %p315, %p316
      %p318 = scmp.ne.s32.totalorder %s310, %s312
      %p319 = scmp.eq.s32.totalorder %s29, 1
      %p320 = por %p318, %p319
      %p321 = scmp.ne.s32.totalorder %s312, %s313
      %p322 = scmp.eq.s32.totalorder %s29, 0
      %p323 = por %p321, %p322
      %p324 = scmp.ne.s32.totalorder %s312, %s313
      %p325 = scmp.eq.s32.totalorder %s30, 1
      %p326 = por %p324, %p325
      %p328 = scmp.ne.s32.totalorder %s313, %s327
      %p329 = scmp.eq.s32.totalorder %s30, 0
      %p330 = por %p328, %p329
      %s332 = sadd.s32 %s331, 1
      %p335 = scmp.eq.s32.totalorder %s24, 1
      %p336 = scmp.ne.s32.totalorder %s331, %s333
      %p337 = scmp.eq.s32.totalorder %s24, 0
      %p338 = por %p336, %p337
      %p339 = scmp.ne.s32.totalorder %s331, %s333
      %p340 = scmp.eq.s32.totalorder %s29, 1
      %p341 = por %p339, %p340
      %p342 = scmp.ne.s32.totalorder %s333, %s334
      %p343 = scmp.eq.s32.totalorder %s29, 0
      %p344 = por %p342, %p343
      %p345 = scmp.ne.s32.totalorder %s333, %s334
      %p346 = scmp.eq.s32.totalorder %s30, 1
      %p347 = por %p345, %p346
      %p349 = scmp.ne.s32.totalorder %s334, %s348
      %p350 = scmp.eq.s32.totalorder %s30, 0
      %p351 = por %p349, %p350
      %s353 = sadd.s32 %s352, 1
      %p356 = scmp.eq.s32.totalorder %s24, 1
      %p357 = scmp.ne.s32.totalorder %s352, %s354
      %p358 = scmp.eq.s32.totalorder %s24, 0
      %p359 = por %p357, %p358
      %p360 = scmp.ne.s32.totalorder %s352, %s354
      %p361 = scmp.eq.s32.totalorder %s29, 1
      %p362 = por %p360, %p361
      %p363 = scmp.ne.s32.totalorder %s354, %s355
      %p364 = scmp.eq.s32.totalorder %s29, 0
      %p365 = por %p363, %p364
      %p366 = scmp.ne.s32.totalorder %s354, %s355
      %p367 = scmp.eq.s32.totalorder %s30, 1
      %p368 = por %p366, %p367
      %p370 = scmp.ne.s32.totalorder %s355, %s369
      %p371 = scmp.eq.s32.totalorder %s30, 0
      %p372 = por %p370, %p371
      %s373 = ssub.s32 %s24, %s31
      %p374 = scmp.eq.s32.totalorder %s373, 0
      %s376 = sadd.s32 %s375, 1
      %s377 = scalar_select %p374, %s375, %s376
      %p380 = pneg %p374
      %p381 = scmp.eq.s32.totalorder %s24, 1
      %p382 = por %p380, %p381
      %p383 = scmp.ne.s32.totalorder %s375, %s378
      %p384 = scmp.eq.s32.totalorder %s24, 0
      %p385 = por %p383, %p384
      %p386 = scmp.ne.s32.totalorder %s375, %s378
      %p387 = scmp.eq.s32.totalorder %s29, 1
      %p388 = por %p386, %p387
      %p389 = scmp.ne.s32.totalorder %s378, %s379
      %p390 = scmp.eq.s32.totalorder %s29, 0
      %p391 = por %p389, %p390
      %p392 = scmp.ne.s32.totalorder %s378, %s379
      %p393 = scmp.eq.s32.totalorder %s30, 1
      %p394 = por %p392, %p393
      %p396 = scmp.ne.s32.totalorder %s379, %s395
      %p397 = scmp.eq.s32.totalorder %s30, 0
      %p398 = por %p396, %p397
      %p399 = scmp.le.s32.totalorder 1, %s24
      %p400 = scmp.lt.s32.totalorder %s24, 3
      %p401 = pnand %p399, %p400
      %p402 = pneg %p401
      // Predicated region
      $region9: #{nextgpt_forward.1} parent=5 // pred_check
        _
      $region10: #{nextgpt_forward.1} parent=5 // pred_check_branch
        %404 = sbr.rel (%p401) target = $region12
      $region11: #{nextgpt_forward.1} parent=5 // pred_region
        %s405 = ssub.s32 %s24, 1
        // Predicated region
        $region13: #{nextgpt_forward.1} parent=11 // pred_check
          %p406 = pneg %p71
        $region14: #{nextgpt_forward.1} parent=11 // pred_check_branch
          %408 = sbr.rel (%p406) target = $region16
        $region15: #{nextgpt_forward.1} parent=11 // pred_region
          _
        $region16: #{nextgpt_forward.1} parent=11 // pred_fallthru
          _
        // Predicated region
        $region17: #{nextgpt_forward.1} parent=11 // pred_check
          %p409 = pneg %p92
        $region18: #{nextgpt_forward.1} parent=11 // pred_check_branch
          %411 = sbr.rel (%p409) target = $region20
        $region19: #{nextgpt_forward.1} parent=11 // pred_region
          _
        $region20: #{nextgpt_forward.1} parent=11 // pred_fallthru
          _
        // Predicated region
        $region21: #{nextgpt_forward.1} parent=11 // pred_check
          %p412 = pneg %p113
        $region22: #{nextgpt_forward.1} parent=11 // pred_check_branch
          %414 = sbr.rel (%p412) target = $region24
        $region23: #{nextgpt_forward.1} parent=11 // pred_region
          _
        $region24: #{nextgpt_forward.1} parent=11 // pred_fallthru
          _
        // Predicated region
        $region25: #{nextgpt_forward.1} parent=11 // pred_check
          %p415 = pneg %p134
        $region26: #{nextgpt_forward.1} parent=11 // pred_check_branch
          %417 = sbr.rel (%p415) target = $region28
        $region27: #{nextgpt_forward.1} parent=11 // pred_region
          _
        $region28: #{nextgpt_forward.1} parent=11 // pred_fallthru
          _
        // Predicated region
        $region29: #{nextgpt_forward.1} parent=11 // pred_check
          %p418 = pneg %p155
        $region30: #{nextgpt_forward.1} parent=11 // pred_check_branch
          %420 = sbr.rel (%p418) target = $region32
        $region31: #{nextgpt_forward.1} parent=11 // pred_region
          _
        $region32: #{nextgpt_forward.1} parent=11 // pred_fallthru
          _
        // Predicated region
        $region33: #{nextgpt_forward.1} parent=11 // pred_check
          %p421 = pneg %p176
        $region34: #{nextgpt_forward.1} parent=11 // pred_check_branch
          %423 = sbr.rel (%p421) target = $region36
        $region35: #{nextgpt_forward.1} parent=11 // pred_region
          _
        $region36: #{nextgpt_forward.1} parent=11 // pred_fallthru
          _
        // Predicated region
        $region37: #{nextgpt_forward.1} parent=11 // pred_check
          %p424 = pneg %p197
        $region38: #{nextgpt_forward.1} parent=11 // pred_check_branch
          %426 = sbr.rel (%p424) target = $region40
        $region39: #{nextgpt_forward.1} parent=11 // pred_region
          %s428 = ssub.s32 8192, 8192
          %429 = vsyncadd [#allocation3], %s428
          %s430 = sshll.u32 [#allocation2], 4
          %s431 = int_to_ptr.vmem [resolvable:$true] %s430
          %436 = dma.hbm_to_vmem [thread:$0]  %s7, 8192, %s431, [#allocation3], 256, 256, 16
        $region40: #{nextgpt_forward.1} parent=11 // pred_fallthru
          _
        // Predicated region
        $region41: #{nextgpt_forward.1} parent=11 // pred_check
          %p437 = pneg %p218
        $region42: #{nextgpt_forward.1} parent=11 // pred_check_branch
          %439 = sbr.rel (%p437) target = $region44
        $region43: #{nextgpt_forward.1} parent=11 // pred_region
          %s441 = ssub.s32 8192, 8192
          %442 = vsyncadd [#allocation5], %s441
          %s443 = sshll.u32 [#allocation4], 4
          %s444 = int_to_ptr.vmem [resolvable:$true] %s443
          %449 = dma.hbm_to_vmem [thread:$0]  %s8, 8192, %s444, [#allocation5], 64, 64, 4
        $region44: #{nextgpt_forward.1} parent=11 // pred_fallthru
          _
        // Predicated region
        $region45: #{nextgpt_forward.1} parent=11 // pred_check
          %p450 = pneg %p239
        $region46: #{nextgpt_forward.1} parent=11 // pred_check_branch
          %452 = sbr.rel (%p450) target = $region48
        $region47: #{nextgpt_forward.1} parent=11 // pred_region
          _
        $region48: #{nextgpt_forward.1} parent=11 // pred_fallthru
          _
        // Predicated region
        $region49: #{nextgpt_forward.1} parent=11 // pred_check
          %p453 = pneg %p260
        $region50: #{nextgpt_forward.1} parent=11 // pred_check_branch
          %455 = sbr.rel (%p453) target = $region52
        $region51: #{nextgpt_forward.1} parent=11 // pred_region
          %s457 = ssub.s32 4096, 4096
          %458 = vsyncadd [#allocation5], %s457
          %s459 = sshll.u32 [#allocation6], 4
          %s460 = int_to_ptr.vmem [resolvable:$true] %s459
          %465 = dma.hbm_to_vmem [thread:$0]  %s10, 4096, %s460, [#allocation5], 256, 256, 16
        $region52: #{nextgpt_forward.1} parent=11 // pred_fallthru
          _
        // Predicated region
        $region53: #{nextgpt_forward.1} parent=11 // pred_check
          %p466 = pneg %p281
        $region54: #{nextgpt_forward.1} parent=11 // pred_check_branch
          %468 = sbr.rel (%p466) target = $region56
        $region55: #{nextgpt_forward.1} parent=11 // pred_region
          _
        $region56: #{nextgpt_forward.1} parent=11 // pred_fallthru
          _
        // Predicated region
        $region57: #{nextgpt_forward.1} parent=11 // pred_check
          %p469 = pneg %p302
        $region58: #{nextgpt_forward.1} parent=11 // pred_check_branch
          %471 = sbr.rel (%p469) target = $region60
        $region59: #{nextgpt_forward.1} parent=11 // pred_region
          _
        $region60: #{nextgpt_forward.1} parent=11 // pred_fallthru
          _
        // Predicated region
        $region61: #{nextgpt_forward.1} parent=11 // pred_check
          %p472 = pneg %p323
        $region62: #{nextgpt_forward.1} parent=11 // pred_check_branch
          %474 = sbr.rel (%p472) target = $region64
        $region63: #{nextgpt_forward.1} parent=11 // pred_region
          _
        $region64: #{nextgpt_forward.1} parent=11 // pred_fallthru
          _
        // Predicated region
        $region65: #{nextgpt_forward.1} parent=11 // pred_check
          %p475 = pneg %p344
        $region66: #{nextgpt_forward.1} parent=11 // pred_check_branch
          %477 = sbr.rel (%p475) target = $region68
        $region67: #{nextgpt_forward.1} parent=11 // pred_region
          _
        $region68: #{nextgpt_forward.1} parent=11 // pred_fallthru
          _
        // Predicated region
        $region69: #{nextgpt_forward.1} parent=11 // pred_check
          %p478 = pneg %p365
        $region70: #{nextgpt_forward.1} parent=11 // pred_check_branch
          %480 = sbr.rel (%p478) target = $region72
        $region71: #{nextgpt_forward.1} parent=11 // pred_region
          _
        $region72: #{nextgpt_forward.1} parent=11 // pred_fallthru
          _
      $region12: #{nextgpt_forward.1} parent=5 // pred_fallthru
        _
      %p481 = scmp.lt.s32.totalorder %s24, 2
      // Predicated region
      $region73: #{nextgpt_forward.1} parent=5 // pred_check
        %p482 = pneg %p481
      $region74: #{nextgpt_forward.1} parent=5 // pred_check_branch
        %484 = sbr.rel (%p482) target = $region76
      $region75: #{nextgpt_forward.1} parent=5 // pred_region
        // Predicated region
        $region77: #{nextgpt_forward.1} parent=75 // pred_check
          %p485 = pneg %p44
        $region78: #{nextgpt_forward.1} parent=75 // pred_check_branch
          %487 = sbr.rel (%p485) target = $region80
        $region79: #{nextgpt_forward.1} parent=75 // pred_region
          %p488 = scmp.lt.s32.totalorder %s24, 1
          %s489 = scalar_select %p488, %s24, 1
          %s490 = smul.addr %s489, 8
          %s491 = scalar_lea.vmem %s0, %s490
        $region80: #{nextgpt_forward.1} parent=75 // pred_fallthru
          _
      $region76: #{nextgpt_forward.1} parent=5 // pred_fallthru
        _
      %p492 = scmp.le.s32.totalorder 1, %s24
      %p493 = scmp.lt.s32.totalorder %s24, 3
      %p494 = pnand %p492, %p493
      %p495 = pneg %p494
      // Predicated region
      $region81: #{nextgpt_forward.1} parent=5 // pred_check
        _
      $region82: #{nextgpt_forward.1} parent=5 // pred_check_branch
        %497 = sbr.rel (%p494) target = $region84
      $region83: #{nextgpt_forward.1} parent=5 // pred_region
        %s498 = ssub.s32 %s24, 1
        // Predicated region
        $region85: #{nextgpt_forward.1} parent=83 // pred_check
          %p499 = pneg %p197
        $region86: #{nextgpt_forward.1} parent=83 // pred_check_branch
          %501 = sbr.rel (%p499) target = $region88
        $region87: #{nextgpt_forward.1} parent=83 // pred_region
          %502 = dma.done [#allocation3], 8192
        $region88: #{nextgpt_forward.1} parent=83 // pred_fallthru
          _
        // Predicated region
        $region89: #{nextgpt_forward.1} parent=83 // pred_check
          %p503 = pneg %p218
        $region90: #{nextgpt_forward.1} parent=83 // pred_check_branch
          %505 = sbr.rel (%p503) target = $region92
        $region91: #{nextgpt_forward.1} parent=83 // pred_region
          %506 = dma.done [#allocation5], 8192
        $region92: #{nextgpt_forward.1} parent=83 // pred_fallthru
          _
        // Predicated region
        $region93: #{nextgpt_forward.1} parent=83 // pred_check
          %p507 = pneg %p260
        $region94: #{nextgpt_forward.1} parent=83 // pred_check_branch
          %509 = sbr.rel (%p507) target = $region96
        $region95: #{nextgpt_forward.1} parent=83 // pred_region
          %510 = dma.done [#allocation5], 4096
        $region96: #{nextgpt_forward.1} parent=83 // pred_fallthru
          _
        %p511 = scmp.lt.s32.totalorder %s29, 1
        %s512 = scalar_select %p511, %s29, 1
        %s513 = smul.addr %s512, 8
        %s514 = scalar_lea.vmem %s0, %s513
        %p515 = pneg %p50
        %p516 = pneg %p47
        %p517 = pneg %p71
        %p518 = pneg %p68
        %p519 = pneg %p92
        %p520 = pneg %p89
        %p521 = pneg %p113
        %p522 = pneg %p110
        %p523 = pneg %p134
        %p524 = pneg %p131
        %p525 = pneg %p155
        %p526 = pneg %p152
        %p527 = pneg %p176
        %p528 = pneg %p173
        %p529 = pneg %p197
        %p530 = pneg %p194
        %p531 = pneg %p218
        %p532 = pneg %p215
        %p533 = pneg %p239
        %p534 = pneg %p236
        %p535 = pneg %p260
        %p536 = pneg %p257
        %p537 = pneg %p281
        %p538 = pneg %p278
        %p539 = pneg %p302
        %p540 = pneg %p299
        %p541 = pneg %p323
        %p542 = pneg %p320
        %p543 = pneg %p344
        %p544 = pneg %p341
        %p545 = pneg %p365
        %p546 = pneg %p362
        %p547 = pneg %p391
        %p548 = pneg %p388
        %p549 = scmp.lt.s32.totalorder %s29, 1
        %s550 = scalar_select %p549, %s29, 1
        %s551 = smul.addr %s550, 4
        %s552 = smul.addr %s551, 8
        %s553 = scalar_lea.vmem %s16, %s552
        %p554 = scmp.lt.s32.totalorder %s29, 1
        %s555 = scalar_select %p554, %s29, 1
        %s556 = smul.addr %s555, 8
        %s557 = scalar_lea.vmem %s0, %s556
        %p558 = scmp.lt.s32.totalorder %s29, 1
        %s559 = scalar_select %p558, %s29, 1
        %s560 = smul.addr %s559, 4
        %s561 = smul.addr %s560, 8
        %s562 = scalar_lea.vmem %s16, %s561
        %v564 = vld [vmem:[%s557] sm:$0x7f]
        %v565 = vld [vmem:[%s11] sm:$0x7f]
        %v566 = vld [vmem:[%s12] sm:$0x7f]
        %v567 = vld [vmem:[%s13] sm:$0x7f]
        %v568 = vld [vmem:[%s14] sm:$0x7f]
        %v569 = vld [vmem:[%s1] sm:$0x1]
        %vm570 = vcmask 1046528
        %v571 = vsel %vm570, %v564, 0.0
        %572 = vadd.xlane.f32.xlu0 %v571
        %v573 = vpop.xlane.xlu0 %572
        %v574 = vrcp.pop 128.0
        %v575 = vmul.f32 %v573, %v574
        %v576 = vsub.f32 %v564, %v575
        %v577 = vmul.f32 %v576, %v576
        %v578 = vsel %vm570, %v577, 0.0
        %579 = vadd.xlane.f32.xlu0 %v578
        %v580 = vpop.xlane.xlu0 %579
        %v581 = vmul.f32 %v580, %v574
        %v582 = vadd.f32 %v581, 1e-05
        %v583 = vrsqrt.pop %v582
        %v584 = vmul.f32 %v576, %v583
        %v586 = vlaneseq
        %v587 = vshrl.u32 %v586, 7
        %v588 = vsub.s32 0, %v587
        %v589 = vrot.slane %v569, %v588
        %v591 = vmul.f32 %v584, %v589
        %v592 = vpack.c.bf16 %v591, %v591
        %v593 = vld [vmem:[%s2] sm:$0xff]
        %v594 = vld [vmem:[%s2 + $0x8] sm:$0xff]
        %v595 = vld [vmem:[%s2 + $0x10] sm:$0xff]
        %v596 = vld [vmem:[%s2 + $0x18] sm:$0xff]
        %v597 = vld [vmem:[%s2 + $0x20] sm:$0xff]
        %v598 = vld [vmem:[%s2 + $0x28] sm:$0xff]
        %v599 = vld [vmem:[%s2 + $0x30] sm:$0xff]
        %v600 = vld [vmem:[%s2 + $0x38] sm:$0xff]
        %v601 = vld [vmem:[%s2 + $0x40] sm:$0xff]
        %v602 = vld [vmem:[%s2 + $0x48] sm:$0xff]
        %v603 = vld [vmem:[%s2 + $0x50] sm:$0xff]
        %v604 = vld [vmem:[%s2 + $0x58] sm:$0xff]
        %v605 = vld [vmem:[%s2 + $0x60] sm:$0xff]
        %v606 = vld [vmem:[%s2 + $0x68] sm:$0xff]
        %v607 = vld [vmem:[%s2 + $0x70] sm:$0xff]
        %v608 = vld [vmem:[%s2 + $0x78] sm:$0xff]
        %v625 = vunpack.c.l.b16 %v593
        %v626 = vunpack.c.h.b16 %v593
        %v627 = vunpack.c.l.b16 %v594
        %v628 = vunpack.c.h.b16 %v594
        %v629 = vunpack.c.l.b16 %v595
        %v630 = vunpack.c.h.b16 %v595
        %v631 = vunpack.c.l.b16 %v596
        %v632 = vunpack.c.h.b16 %v596
        %v633 = vunpack.c.l.b16 %v597
        %v634 = vunpack.c.h.b16 %v597
        %v635 = vunpack.c.l.b16 %v598
        %v636 = vunpack.c.h.b16 %v598
        %v637 = vunpack.c.l.b16 %v599
        %v638 = vunpack.c.h.b16 %v599
        %v639 = vunpack.c.l.b16 %v600
        %v640 = vunpack.c.h.b16 %v600
        %v641 = vunpack.c.l.b16 %v601
        %v642 = vunpack.c.h.b16 %v601
        %v643 = vunpack.c.l.b16 %v602
        %v644 = vunpack.c.h.b16 %v602
        %v645 = vunpack.c.l.b16 %v603
        %v646 = vunpack.c.h.b16 %v603
        %v647 = vunpack.c.l.b16 %v604
        %v648 = vunpack.c.h.b16 %v604
        %v649 = vunpack.c.l.b16 %v605
        %v650 = vunpack.c.h.b16 %v605
        %v651 = vunpack.c.l.b16 %v606
        %v652 = vunpack.c.h.b16 %v606
        %v653 = vunpack.c.l.b16 %v607
        %v654 = vunpack.c.h.b16 %v607
        %v655 = vunpack.c.l.b16 %v608
        %v656 = vunpack.c.h.b16 %v608
        %v657 = vpack.c.b16 %v627, %v625
        %v658 = vpack.c.b16 %v628, %v626
        %v659 = vpack.c.b16 %v631, %v629
        %v660 = vpack.c.b16 %v632, %v630
        %v661 = vpack.c.b16 %v635, %v633
        %v662 = vpack.c.b16 %v636, %v634
        %v663 = vpack.c.b16 %v639, %v637
        %v664 = vpack.c.b16 %v640, %v638
        %v665 = vpack.c.b16 %v643, %v641
        %v666 = vpack.c.b16 %v644, %v642
        %v667 = vpack.c.b16 %v647, %v645
        %v668 = vpack.c.b16 %v648, %v646
        %v669 = vpack.c.b16 %v651, %v649
        %v670 = vpack.c.b16 %v652, %v650
        %v671 = vpack.c.b16 %v655, %v653
        %v672 = vpack.c.b16 %v656, %v654
        %689 = vmatprep.subr.bf16.mxu0 %v672
        %690 = vmatpush1.bf16.msra.mxu0 %v671
        %691 = vmatprep.subr.bf16.mxu0 %v670
        %692 = vmatpush1.bf16.msra.mxu0 %v669
        %693 = vmatprep.subr.bf16.mxu0 %v668
        %694 = vmatpush1.bf16.msra.mxu0 %v667
        %695 = vmatprep.subr.bf16.mxu0 %v666
        %696 = vmatpush1.bf16.msra.mxu0 %v665
        %697 = vmatprep.subr.bf16.mxu0 %v664
        %698 = vmatpush1.bf16.msra.mxu0 %v663
        %699 = vmatprep.subr.bf16.mxu0 %v662
        %700 = vmatpush1.bf16.msra.mxu0 %v661
        %701 = vmatprep.subr.bf16.mxu0 %v660
        %702 = vmatpush1.bf16.msra.mxu0 %v659
        %703 = vmatprep.subr.bf16.mxu0 %v658
        %704 = vmatpush1.bf16.msra.mxu0 %v657
        %705 = vmatprep.subr.bf16.mxu0 0
        %706 = vmatpush2.bf16.msra.mxu0 0
        %707 = vmatprep.subr.bf16.mxu0 0
        %708 = vmatpush2.bf16.msra.mxu0 0
        %709 = vmatprep.subr.bf16.mxu0 0
        %710 = vmatpush2.bf16.msra.mxu0 0
        %711 = vmatprep.subr.bf16.mxu0 0
        %712 = vmatpush2.bf16.msra.mxu0 0
        %713 = vmatprep.subr.bf16.mxu0 0
        %714 = vmatpush2.bf16.msra.mxu0 0
        %715 = vmatprep.subr.bf16.mxu0 0
        %716 = vmatpush2.bf16.msra.mxu0 0
        %717 = vmatprep.subr.bf16.mxu0 0
        %718 = vmatpush2.bf16.msra.mxu0 0
        %719 = vmatprep.subr.bf16.mxu0 0
        %720 = vmatpush2.bf16.msra.mxu0 0
        %721 = vmatprep.mubr.bf16.mxu0 0
        %722 = vmatmul.mubr.bf16.gmra.mxu0 %v592
        %v723 = vpop.f32.mrf.mxu0
        %v724 = vadd.f32 0.0, %v723
        %v725 = vpop.f32.mrf.mxu0
        %v726 = vadd.f32 0.0, %v725
        %v727 = vpop.f32.mrf.mxu0
        %v728 = vpop.f32.mrf.mxu0
        %729 = vdwg.mxu0
        %v730 = vld [vmem:[%s4] sm:$0xf]
        %v731 = vld [vmem:[%s5] sm:$0x3]
        %v732 = vmul.f32 %v726, %v726
        %vm733 = vcmask 260096
        %v734 = vsel %vm733, %v732, 0.0
        %735 = vadd.xlane.f32.xlu0 %v734
        %v736 = vpop.xlane.xlu0 %735
        %v737 = vadd.f32 %v736, 1e-12
        %v738 = vrsqrt.pop %v737
        %v739 = vmul.f32 %v726, %v738
        %v740 = vlaneseq
        %v741 = vshrl.u32 %v740, 7
        %v742 = vsub.s32 0, %v741
        %v743 = vrot.slane %v731, %v742
        %v744 = vmul.f32 %v739, %v743
        %v745 = vsub.f32 0.0, %v744
        %747 = vrot.lane.b32.xlu0 %v745, 112
        %v748 = vpop.permute.xlu0 %747
        %751 = vrot.lane.b32.xlu0 %v744, 16
        %v752 = vpop.permute.xlu0 %751
        %vm754 = vcmask 130048
        %v755 = vsel %vm754, %v748, %v752
        %v756 = vmul.f32 %v744, %v565
        %v757 = vmul.f32 %v755, %v566
        %v758 = vadd.f32 %v756, %v757
        %v759 = vmul.f32 %v758, %v568
        %761 = vrot.lane.b32.xlu0 %v732, 96
        %v762 = vpop.permute.xlu0 %761
        %v764 = vsel %vm733, %v762, 0.0
        %765 = vadd.xlane.f32.xlu0 %v764
        %v766 = vpop.xlane.xlu0 %765
        %v767 = vadd.f32 %v766, 1e-12
        %v768 = vrsqrt.pop %v767
        %v769 = vmul.f32 %v726, %v768
        %v770 = vlaneseq
        %v771 = vshrl.u32 %v770, 7
        %v772 = vsub.s32 1, %v771
        %v773 = vrot.slane %v731, %v772
        %775 = vrot.lane.b32.xlu0 %v773, 32
        %v776 = vpop.permute.xlu0 %775
        %v778 = vmul.f32 %v769, %v776
        %v779 = vsub.f32 0.0, %v778
        %781 = vrot.lane.b32.xlu0 %v779, 80
        %v782 = vpop.permute.xlu0 %781
        %785 = vrot.lane.b32.xlu0 %v778, 112
        %v786 = vpop.permute.xlu0 %785
        %v788 = vsel %vm754, %v782, %v786
        %790 = vrot.lane.b32.xlu0 %v565, 32
        %v791 = vpop.permute.xlu0 %790
        %v793 = vmul.f32 %v778, %v791
        %v794 = vmul.f32 %v788, %v566
        %796 = vrot.lane.b32.xlu0 %v794, 32
        %v797 = vpop.permute.xlu0 %796
        %v799 = vadd.f32 %v793, %v797
        %801 = vrot.lane.b32.xlu0 %v568, 32
        %v802 = vpop.permute.xlu0 %801
        %v804 = vmul.f32 %v799, %v802
        %v805 = vmul.f32 %v724, %v724
        %v806 = vsel %vm733, %v805, 0.0
        %807 = vadd.xlane.f32.xlu0 %v806
        %v808 = vpop.xlane.xlu0 %807
        %v809 = vadd.f32 %v808, 1e-12
        %v810 = vrsqrt.pop %v809
        %v811 = vmul.f32 %v724, %v810
        %v812 = vlaneseq
        %v813 = vshrl.u32 %v812, 7
        %v814 = vsub.s32 0, %v813
        %v815 = vrot.slane %v730, %v814
        %v816 = vmul.f32 %v811, %v815
        %v817 = vsub.f32 0.0, %v816
        %819 = vrot.lane.b32.xlu0 %v817, 112
        %v820 = vpop.permute.xlu0 %819
        %823 = vrot.lane.b32.xlu0 %v816, 16
        %v824 = vpop.permute.xlu0 %823
        %v826 = vsel %vm754, %v820, %v824
        %v827 = vmul.f32 %v816, %v565
        %v828 = vmul.f32 %v826, %v566
        %v829 = vadd.f32 %v827, %v828
        %v830 = vmul.f32 %v829, %v567
        %vm831 = vcmask 261120
        %v833 = vsel %vm831, %v830, 0
        %v836 = vsel %vm831, %v759, 0
        %838 = vmatprep.subr.mxu0 0.0
        %839 = vmatpush1.xpose.msra.mxu0 0.0
        %840 = vmatprep.subr.mxu0 0.0
        %841 = vmatpush1.xpose.msra.mxu0 0.0
        %842 = vmatprep.subr.mxu0 0.0
        %843 = vmatpush1.xpose.msra.mxu0 0.0
        %844 = vmatprep.subr.mxu0 0.0
        %845 = vmatpush1.xpose.msra.mxu0 0.0
        %846 = vmatprep.subr.mxu0 0.0
        %847 = vmatpush1.xpose.msra.mxu0 0.0
        %848 = vmatprep.subr.mxu0 0.0
        %849 = vmatpush1.xpose.msra.mxu0 0.0
        %850 = vmatprep.subr.mxu0 0.0
        %851 = vmatpush1.xpose.msra.mxu0 0.0
        %852 = vmatprep.subr.mxu0 0.0
        %853 = vmatpush1.xpose.msra.mxu0 0.0
        %854 = vmatprep.subr.mxu0 0.0
        %855 = vmatpush1.xpose.msra.mxu0 0.0
        %856 = vmatprep.subr.mxu0 0.0
        %857 = vmatpush1.xpose.msra.mxu0 0.0
        %858 = vmatprep.subr.mxu0 0.0
        %859 = vmatpush1.xpose.msra.mxu0 0.0
        %860 = vmatprep.subr.mxu0 0.0
        %861 = vmatpush1.xpose.msra.mxu0 0.0
        %862 = vmatprep.subr.mxu0 0.0
        %863 = vmatpush1.xpose.msra.mxu0 0.0
        %864 = vmatprep.subr.mxu0 0.0
        %865 = vmatpush1.xpose.msra.mxu0 0.0
        %866 = vmatprep.subr.mxu0 0.0
        %867 = vmatpush1.xpose.msra.mxu0 0.0
        %868 = vmatprep.subr.mxu0 0.0
        %869 = vmatpush1.xpose.msra.mxu0 %v836
        %870 = vmatprep.subr.mxu0 0.0
        %871 = vmatpush2.xpose.msra.mxu0 0.0
        %872 = vmatprep.subr.mxu0 0.0
        %873 = vmatpush2.xpose.msra.mxu0 0.0
        %874 = vmatprep.subr.mxu0 0.0
        %875 = vmatpush2.xpose.msra.mxu0 0.0
        %876 = vmatprep.subr.mxu0 0.0
        %877 = vmatpush2.xpose.msra.mxu0 0.0
        %878 = vmatprep.subr.mxu0 0.0
        %879 = vmatpush2.xpose.msra.mxu0 0.0
        %880 = vmatprep.subr.mxu0 0.0
        %881 = vmatpush2.xpose.msra.mxu0 0.0
        %882 = vmatprep.subr.mxu0 0.0
        %883 = vmatpush2.xpose.msra.mxu0 0.0
        %884 = vmatprep.subr.mxu0 0.0
        %885 = vmatpush2.xpose.msra.mxu0 0.0
        %886 = vmatprep.subr.mxu0 0.0
        %887 = vmatpush2.xpose.msra.mxu0 0.0
        %888 = vmatprep.subr.mxu0 0.0
        %889 = vmatpush2.xpose.msra.mxu0 0.0
        %890 = vmatprep.subr.mxu0 0.0
        %891 = vmatpush2.xpose.msra.mxu0 0.0
        %892 = vmatprep.subr.mxu0 0.0
        %893 = vmatpush2.xpose.msra.mxu0 0.0
        %894 = vmatprep.subr.mxu0 0.0
        %895 = vmatpush2.xpose.msra.mxu0 0.0
        %896 = vmatprep.subr.mxu0 0.0
        %897 = vmatpush2.xpose.msra.mxu0 0.0
        %898 = vmatprep.subr.mxu0 0.0
        %899 = vmatpush2.xpose.msra.mxu0 0.0
        %900 = vmatprep.subr.mxu0 0.0
        %901 = vmatpush2.xpose.msra.mxu0 0.0
        %902 = vmatprep.mubr.f32.mxu0 0.0
        %903 = vmatmul.mubr.f32.gmra.mxu0 %v833
        %v904 = vpop.f32.mrf.mxu0
        %v905 = vadd.f32 0.0, %v904
        %v906 = vpop.f32.mrf.mxu0
        %907 = vdwg.mxu0
        %v908 = vmul.f32 %v905, 10.0
        %v909 = vld [vmem:[%s15] sm:$0x7f]
        %v910 = vadd.f32 %v908, %v909
        %vm911 = vcmask 55296
        %v912 = vsel %vm911, %v910, -inf
        %913 = vmax.xlane.f32.xlu0 %v912
        %v914 = vpop.xlane.xlu0 %913
        %v915 = vsub.f32 %v910, %v914
        %v916 = vmul.f32 %v915, 1.442695
        %v917 = vpow.pop %v916
        %v918 = vsel %vm911, %v917, 0.0
        %919 = vadd.xlane.f32.xlu0 %v918
        %v920 = vpop.xlane.xlu0 %919
        %v921 = vrcp.pop %v920
        %v922 = vmul.f32 %v917, %v921
        %924 = vrot.lane.b32.xlu0 %v726, 64
        %v925 = vpop.permute.xlu0 %924
        %vm926 = vcmask 56320
        %v928 = vsel %vm926, %v922, 0
        %v930 = vsel %vm570, %v925, 0
        %932 = vmatprep.subr.mxu0 0.0
        %933 = vmatpush1.msra.mxu0 0.0
        %934 = vmatprep.subr.mxu0 0.0
        %935 = vmatpush1.msra.mxu0 0.0
        %936 = vmatprep.subr.mxu0 0.0
        %937 = vmatpush1.msra.mxu0 0.0
        %938 = vmatprep.subr.mxu0 0.0
        %939 = vmatpush1.msra.mxu0 0.0
        %940 = vmatprep.subr.mxu0 0.0
        %941 = vmatpush1.msra.mxu0 0.0
        %942 = vmatprep.subr.mxu0 0.0
        %943 = vmatpush1.msra.mxu0 0.0
        %944 = vmatprep.subr.mxu0 0.0
        %945 = vmatpush1.msra.mxu0 0.0
        %946 = vmatprep.subr.mxu0 0.0
        %947 = vmatpush1.msra.mxu0 0.0
        %948 = vmatprep.subr.mxu0 0.0
        %949 = vmatpush1.msra.mxu0 0.0
        %950 = vmatprep.subr.mxu0 0.0
        %951 = vmatpush1.msra.mxu0 0.0
        %952 = vmatprep.subr.mxu0 0.0
        %953 = vmatpush1.msra.mxu0 0.0
        %954 = vmatprep.subr.mxu0 0.0
        %955 = vmatpush1.msra.mxu0 0.0
        %956 = vmatprep.subr.mxu0 0.0
        %957 = vmatpush1.msra.mxu0 0.0
        %958 = vmatprep.subr.mxu0 0.0
        %959 = vmatpush1.msra.mxu0 0.0
        %960 = vmatprep.subr.mxu0 0.0
        %961 = vmatpush1.msra.mxu0 0.0
        %962 = vmatprep.subr.mxu0 0.0
        %963 = vmatpush1.msra.mxu0 %v930
        %964 = vmatprep.subr.mxu0 0.0
        %965 = vmatpush2.msra.mxu0 0.0
        %966 = vmatprep.subr.mxu0 0.0
        %967 = vmatpush2.msra.mxu0 0.0
        %968 = vmatprep.subr.mxu0 0.0
        %969 = vmatpush2.msra.mxu0 0.0
        %970 = vmatprep.subr.mxu0 0.0
        %971 = vmatpush2.msra.mxu0 0.0
        %972 = vmatprep.subr.mxu0 0.0
        %973 = vmatpush2.msra.mxu0 0.0
        %974 = vmatprep.subr.mxu0 0.0
        %975 = vmatpush2.msra.mxu0 0.0
        %976 = vmatprep.subr.mxu0 0.0
        %977 = vmatpush2.msra.mxu0 0.0
        %978 = vmatprep.subr.mxu0 0.0
        %979 = vmatpush2.msra.mxu0 0.0
        %980 = vmatprep.subr.mxu0 0.0
        %981 = vmatpush2.msra.mxu0 0.0
        %982 = vmatprep.subr.mxu0 0.0
        %983 = vmatpush2.msra.mxu0 0.0
        %984 = vmatprep.subr.mxu0 0.0
        %985 = vmatpush2.msra.mxu0 0.0
        %986 = vmatprep.subr.mxu0 0.0
        %987 = vmatpush2.msra.mxu0 0.0
        %988 = vmatprep.subr.mxu0 0.0
        %989 = vmatpush2.msra.mxu0 0.0
        %990 = vmatprep.subr.mxu0 0.0
        %991 = vmatpush2.msra.mxu0 0.0
        %992 = vmatprep.subr.mxu0 0.0
        %993 = vmatpush2.msra.mxu0 0.0
        %994 = vmatprep.subr.mxu0 0.0
        %995 = vmatpush2.msra.mxu0 0.0
        %996 = vmatprep.mubr.f32.mxu0 0.0
        %997 = vmatmul.mubr.f32.gmra.mxu0 %v928
        %v998 = vpop.f32.mrf.mxu0
        %v999 = vadd.f32 0.0, %v998
        %v1000 = vpop.f32.mrf.mxu0
        %1001 = vdwg.mxu0
        %1003 = vrot.lane.b32.xlu0 %v805, 96
        %v1004 = vpop.permute.xlu0 %1003
        %v1006 = vsel %vm733, %v1004, 0.0
        %1007 = vadd.xlane.f32.xlu0 %v1006
        %v1008 = vpop.xlane.xlu0 %1007
        %v1009 = vadd.f32 %v1008, 1e-12
        %v1010 = vrsqrt.pop %v1009
        %v1011 = vmul.f32 %v724, %v1010
        %v1012 = vlaneseq
        %v1013 = vshrl.u32 %v1012, 7
        %v1014 = vsub.s32 1, %v1013
        %v1015 = vrot.slane %v730, %v1014
        %1017 = vrot.lane.b32.xlu0 %v1015, 32
        %v1018 = vpop.permute.xlu0 %1017
        %v1020 = vmul.f32 %v1011, %v1018
        %v1021 = vsub.f32 0.0, %v1020
        %1023 = vrot.lane.b32.xlu0 %v1021, 80
        %v1024 = vpop.permute.xlu0 %1023
        %1027 = vrot.lane.b32.xlu0 %v1020, 112
        %v1028 = vpop.permute.xlu0 %1027
        %v1030 = vsel %vm754, %v1024, %v1028
        %v1031 = vmul.f32 %v1020, %v791
        %v1032 = vmul.f32 %v1030, %v566
        %1034 = vrot.lane.b32.xlu0 %v1032, 32
        %v1035 = vpop.permute.xlu0 %1034
        %v1037 = vadd.f32 %v1031, %v1035
        %1039 = vrot.lane.b32.xlu0 %v567, 32
        %v1040 = vpop.permute.xlu0 %1039
        %v1042 = vmul.f32 %v1037, %v1040
        %1044 = vrot.lane.b32.xlu0 %v1042, 96
        %v1045 = vpop.permute.xlu0 %1044
        %v1046 = vsel %vm831, %v1045, 0
        %1048 = vmatprep.subr.mxu0 0.0
        %1049 = vmatpush1.xpose.msra.mxu0 0.0
        %1050 = vmatprep.subr.mxu0 0.0
        %1051 = vmatpush1.xpose.msra.mxu0 0.0
        %1052 = vmatprep.subr.mxu0 0.0
        %1053 = vmatpush1.xpose.msra.mxu0 0.0
        %1054 = vmatprep.subr.mxu0 0.0
        %1055 = vmatpush1.xpose.msra.mxu0 0.0
        %1056 = vmatprep.subr.mxu0 0.0
        %1057 = vmatpush1.xpose.msra.mxu0 0.0
        %1058 = vmatprep.subr.mxu0 0.0
        %1059 = vmatpush1.xpose.msra.mxu0 0.0
        %1060 = vmatprep.subr.mxu0 0.0
        %1061 = vmatpush1.xpose.msra.mxu0 0.0
        %1062 = vmatprep.subr.mxu0 0.0
        %1063 = vmatpush1.xpose.msra.mxu0 0.0
        %1064 = vmatprep.subr.mxu0 0.0
        %1065 = vmatpush1.xpose.msra.mxu0 0.0
        %1066 = vmatprep.subr.mxu0 0.0
        %1067 = vmatpush1.xpose.msra.mxu0 0.0
        %1068 = vmatprep.subr.mxu0 0.0
        %1069 = vmatpush1.xpose.msra.mxu0 0.0
        %1070 = vmatprep.subr.mxu0 0.0
        %1071 = vmatpush1.xpose.msra.mxu0 0.0
        %1072 = vmatprep.subr.mxu0 0.0
        %1073 = vmatpush1.xpose.msra.mxu0 0.0
        %1074 = vmatprep.subr.mxu0 0.0
        %1075 = vmatpush1.xpose.msra.mxu0 0.0
        %1076 = vmatprep.subr.mxu0 0.0
        %1077 = vmatpush1.xpose.msra.mxu0 0.0
        %1078 = vmatprep.subr.mxu0 0.0
        %1079 = vmatpush1.xpose.msra.mxu0 %v836
        %1080 = vmatprep.subr.mxu0 0.0
        %1081 = vmatpush2.xpose.msra.mxu0 0.0
        %1082 = vmatprep.subr.mxu0 0.0
        %1083 = vmatpush2.xpose.msra.mxu0 0.0
        %1084 = vmatprep.subr.mxu0 0.0
        %1085 = vmatpush2.xpose.msra.mxu0 0.0
        %1086 = vmatprep.subr.mxu0 0.0
        %1087 = vmatpush2.xpose.msra.mxu0 0.0
        %1088 = vmatprep.subr.mxu0 0.0
        %1089 = vmatpush2.xpose.msra.mxu0 0.0
        %1090 = vmatprep.subr.mxu0 0.0
        %1091 = vmatpush2.xpose.msra.mxu0 0.0
        %1092 = vmatprep.subr.mxu0 0.0
        %1093 = vmatpush2.xpose.msra.mxu0 0.0
        %1094 = vmatprep.subr.mxu0 0.0
        %1095 = vmatpush2.xpose.msra.mxu0 0.0
        %1096 = vmatprep.subr.mxu0 0.0
        %1097 = vmatpush2.xpose.msra.mxu0 0.0
        %1098 = vmatprep.subr.mxu0 0.0
        %1099 = vmatpush2.xpose.msra.mxu0 0.0
        %1100 = vmatprep.subr.mxu0 0.0
        %1101 = vmatpush2.xpose.msra.mxu0 0.0
        %1102 = vmatprep.subr.mxu0 0.0
        %1103 = vmatpush2.xpose.msra.mxu0 0.0
        %1104 = vmatprep.subr.mxu0 0.0
        %1105 = vmatpush2.xpose.msra.mxu0 0.0
        %1106 = vmatprep.subr.mxu0 0.0
        %1107 = vmatpush2.xpose.msra.mxu0 0.0
        %1108 = vmatprep.subr.mxu0 0.0
        %1109 = vmatpush2.xpose.msra.mxu0 0.0
        %1110 = vmatprep.subr.mxu0 0.0
        %1111 = vmatpush2.xpose.msra.mxu0 0.0
        %1112 = vmatprep.mubr.f32.mxu0 0.0
        %1113 = vmatmul.mubr.f32.gmra.mxu0 %v1046
        %v1114 = vpop.f32.mrf.mxu0
        %v1115 = vadd.f32 0.0, %v1114
        %v1116 = vpop.f32.mrf.mxu0
        %1117 = vdwg.mxu0
        %v1118 = vmul.f32 %v1115, 10.0
        %s1119 = scalar_lea.vmem %s15, 8
        %v1120 = vld [vmem:[%s1119] sm:$0x7f]
        %v1121 = vadd.f32 %v1118, %v1120
        %v1122 = vsel %vm911, %v1121, -inf
        %1123 = vmax.xlane.f32.xlu0 %v1122
        %v1124 = vpop.xlane.xlu0 %1123
        %v1125 = vsub.f32 %v1121, %v1124
        %v1126 = vmul.f32 %v1125, 1.442695
        %v1127 = vpow.pop %v1126
        %v1128 = vsel %vm911, %v1127, 0.0
        %1129 = vadd.xlane.f32.xlu0 %v1128
        %v1130 = vpop.xlane.xlu0 %1129
        %v1131 = vrcp.pop %v1130
        %v1132 = vmul.f32 %v1127, %v1131
        %v1134 = vsel %vm926, %v1132, 0
        %1136 = vmatprep.subr.mxu0 0.0
        %1137 = vmatpush1.msra.mxu0 0.0
        %1138 = vmatprep.subr.mxu0 0.0
        %1139 = vmatpush1.msra.mxu0 0.0
        %1140 = vmatprep.subr.mxu0 0.0
        %1141 = vmatpush1.msra.mxu0 0.0
        %1142 = vmatprep.subr.mxu0 0.0
        %1143 = vmatpush1.msra.mxu0 0.0
        %1144 = vmatprep.subr.mxu0 0.0
        %1145 = vmatpush1.msra.mxu0 0.0
        %1146 = vmatprep.subr.mxu0 0.0
        %1147 = vmatpush1.msra.mxu0 0.0
        %1148 = vmatprep.subr.mxu0 0.0
        %1149 = vmatpush1.msra.mxu0 0.0
        %1150 = vmatprep.subr.mxu0 0.0
        %1151 = vmatpush1.msra.mxu0 0.0
        %1152 = vmatprep.subr.mxu0 0.0
        %1153 = vmatpush1.msra.mxu0 0.0
        %1154 = vmatprep.subr.mxu0 0.0
        %1155 = vmatpush1.msra.mxu0 0.0
        %1156 = vmatprep.subr.mxu0 0.0
        %1157 = vmatpush1.msra.mxu0 0.0
        %1158 = vmatprep.subr.mxu0 0.0
        %1159 = vmatpush1.msra.mxu0 0.0
        %1160 = vmatprep.subr.mxu0 0.0
        %1161 = vmatpush1.msra.mxu0 0.0
        %1162 = vmatprep.subr.mxu0 0.0
        %1163 = vmatpush1.msra.mxu0 0.0
        %1164 = vmatprep.subr.mxu0 0.0
        %1165 = vmatpush1.msra.mxu0 0.0
        %1166 = vmatprep.subr.mxu0 0.0
        %1167 = vmatpush1.msra.mxu0 %v930
        %1168 = vmatprep.subr.mxu0 0.0
        %1169 = vmatpush2.msra.mxu0 0.0
        %1170 = vmatprep.subr.mxu0 0.0
        %1171 = vmatpush2.msra.mxu0 0.0
        %1172 = vmatprep.subr.mxu0 0.0
        %1173 = vmatpush2.msra.mxu0 0.0
        %1174 = vmatprep.subr.mxu0 0.0
        %1175 = vmatpush2.msra.mxu0 0.0
        %1176 = vmatprep.subr.mxu0 0.0
        %1177 = vmatpush2.msra.mxu0 0.0
        %1178 = vmatprep.subr.mxu0 0.0
        %1179 = vmatpush2.msra.mxu0 0.0
        %1180 = vmatprep.subr.mxu0 0.0
        %1181 = vmatpush2.msra.mxu0 0.0
        %1182 = vmatprep.subr.mxu0 0.0
        %1183 = vmatpush2.msra.mxu0 0.0
        %1184 = vmatprep.subr.mxu0 0.0
        %1185 = vmatpush2.msra.mxu0 0.0
        %1186 = vmatprep.subr.mxu0 0.0
        %1187 = vmatpush2.msra.mxu0 0.0
        %1188 = vmatprep.subr.mxu0 0.0
        %1189 = vmatpush2.msra.mxu0 0.0
        %1190 = vmatprep.subr.mxu0 0.0
        %1191 = vmatpush2.msra.mxu0 0.0
        %1192 = vmatprep.subr.mxu0 0.0
        %1193 = vmatpush2.msra.mxu0 0.0
        %1194 = vmatprep.subr.mxu0 0.0
        %1195 = vmatpush2.msra.mxu0 0.0
        %1196 = vmatprep.subr.mxu0 0.0
        %1197 = vmatpush2.msra.mxu0 0.0
        %1198 = vmatprep.subr.mxu0 0.0
        %1199 = vmatpush2.msra.mxu0 0.0
        %1200 = vmatprep.mubr.f32.mxu0 0.0
        %1201 = vmatmul.mubr.f32.gmra.mxu0 %v1134
        %v1202 = vpop.f32.mrf.mxu0
        %v1203 = vadd.f32 0.0, %v1202
        %v1204 = vpop.f32.mrf.mxu0
        %1205 = vdwg.mxu0
        %1206 = vrot.lane.b32.xlu0 %v805, 64
        %v1207 = vpop.permute.xlu0 %1206
        %v1209 = vsel %vm733, %v1207, 0.0
        %1210 = vadd.xlane.f32.xlu0 %v1209
        %v1211 = vpop.xlane.xlu0 %1210
        %v1212 = vadd.f32 %v1211, 1e-12
        %v1213 = vrsqrt.pop %v1212
        %v1214 = vmul.f32 %v724, %v1213
        %v1215 = vlaneseq
        %v1216 = vshrl.u32 %v1215, 7
        %v1217 = vsub.s32 2, %v1216
        %v1218 = vrot.slane %v730, %v1217
        %1220 = vrot.lane.b32.xlu0 %v1218, 64
        %v1221 = vpop.permute.xlu0 %1220
        %v1223 = vmul.f32 %v1214, %v1221
        %v1224 = vsub.f32 0.0, %v1223
        %1226 = vrot.lane.b32.xlu0 %v1224, 48
        %v1227 = vpop.permute.xlu0 %1226
        %1230 = vrot.lane.b32.xlu0 %v1223, 80
        %v1231 = vpop.permute.xlu0 %1230
        %v1233 = vsel %vm754, %v1227, %v1231
        %1234 = vrot.lane.b32.xlu0 %v565, 64
        %v1235 = vpop.permute.xlu0 %1234
        %v1237 = vmul.f32 %v1223, %v1235
        %v1238 = vmul.f32 %v1233, %v566
        %1240 = vrot.lane.b32.xlu0 %v1238, 64
        %v1241 = vpop.permute.xlu0 %1240
        %v1243 = vadd.f32 %v1237, %v1241
        %1244 = vrot.lane.b32.xlu0 %v567, 64
        %v1245 = vpop.permute.xlu0 %1244
        %v1247 = vmul.f32 %v1243, %v1245
        %1249 = vrot.lane.b32.xlu0 %v1247, 64
        %v1250 = vpop.permute.xlu0 %1249
        %1252 = vrot.lane.b32.xlu0 %v804, 96
        %v1253 = vpop.permute.xlu0 %1252
        %v1254 = vsel %vm831, %v1250, 0
        %v1256 = vsel %vm831, %v1253, 0
        %1258 = vmatprep.subr.mxu0 0.0
        %1259 = vmatpush1.xpose.msra.mxu0 0.0
        %1260 = vmatprep.subr.mxu0 0.0
        %1261 = vmatpush1.xpose.msra.mxu0 0.0
        %1262 = vmatprep.subr.mxu0 0.0
        %1263 = vmatpush1.xpose.msra.mxu0 0.0
        %1264 = vmatprep.subr.mxu0 0.0
        %1265 = vmatpush1.xpose.msra.mxu0 0.0
        %1266 = vmatprep.subr.mxu0 0.0
        %1267 = vmatpush1.xpose.msra.mxu0 0.0
        %1268 = vmatprep.subr.mxu0 0.0
        %1269 = vmatpush1.xpose.msra.mxu0 0.0
        %1270 = vmatprep.subr.mxu0 0.0
        %1271 = vmatpush1.xpose.msra.mxu0 0.0
        %1272 = vmatprep.subr.mxu0 0.0
        %1273 = vmatpush1.xpose.msra.mxu0 0.0
        %1274 = vmatprep.subr.mxu0 0.0
        %1275 = vmatpush1.xpose.msra.mxu0 0.0
        %1276 = vmatprep.subr.mxu0 0.0
        %1277 = vmatpush1.xpose.msra.mxu0 0.0
        %1278 = vmatprep.subr.mxu0 0.0
        %1279 = vmatpush1.xpose.msra.mxu0 0.0
        %1280 = vmatprep.subr.mxu0 0.0
        %1281 = vmatpush1.xpose.msra.mxu0 0.0
        %1282 = vmatprep.subr.mxu0 0.0
        %1283 = vmatpush1.xpose.msra.mxu0 0.0
        %1284 = vmatprep.subr.mxu0 0.0
        %1285 = vmatpush1.xpose.msra.mxu0 0.0
        %1286 = vmatprep.subr.mxu0 0.0
        %1287 = vmatpush1.xpose.msra.mxu0 0.0
        %1288 = vmatprep.subr.mxu0 0.0
        %1289 = vmatpush1.xpose.msra.mxu0 %v1256
        %1290 = vmatprep.subr.mxu0 0.0
        %1291 = vmatpush2.xpose.msra.mxu0 0.0
        %1292 = vmatprep.subr.mxu0 0.0
        %1293 = vmatpush2.xpose.msra.mxu0 0.0
        %1294 = vmatprep.subr.mxu0 0.0
        %1295 = vmatpush2.xpose.msra.mxu0 0.0
        %1296 = vmatprep.subr.mxu0 0.0
        %1297 = vmatpush2.xpose.msra.mxu0 0.0
        %1298 = vmatprep.subr.mxu0 0.0
        %1299 = vmatpush2.xpose.msra.mxu0 0.0
        %1300 = vmatprep.subr.mxu0 0.0
        %1301 = vmatpush2.xpose.msra.mxu0 0.0
        %1302 = vmatprep.subr.mxu0 0.0
        %1303 = vmatpush2.xpose.msra.mxu0 0.0
        %1304 = vmatprep.subr.mxu0 0.0
        %1305 = vmatpush2.xpose.msra.mxu0 0.0
        %1306 = vmatprep.subr.mxu0 0.0
        %1307 = vmatpush2.xpose.msra.mxu0 0.0
        %1308 = vmatprep.subr.mxu0 0.0
        %1309 = vmatpush2.xpose.msra.mxu0 0.0
        %1310 = vmatprep.subr.mxu0 0.0
        %1311 = vmatpush2.xpose.msra.mxu0 0.0
        %1312 = vmatprep.subr.mxu0 0.0
        %1313 = vmatpush2.xpose.msra.mxu0 0.0
        %1314 = vmatprep.subr.mxu0 0.0
        %1315 = vmatpush2.xpose.msra.mxu0 0.0
        %1316 = vmatprep.subr.mxu0 0.0
        %1317 = vmatpush2.xpose.msra.mxu0 0.0
        %1318 = vmatprep.subr.mxu0 0.0
        %1319 = vmatpush2.xpose.msra.mxu0 0.0
        %1320 = vmatprep.subr.mxu0 0.0
        %1321 = vmatpush2.xpose.msra.mxu0 0.0
        %1322 = vmatprep.mubr.f32.mxu0 0.0
        %1323 = vmatmul.mubr.f32.gmra.mxu0 %v1254
        %v1324 = vpop.f32.mrf.mxu0
        %v1325 = vadd.f32 0.0, %v1324
        %v1326 = vpop.f32.mrf.mxu0
        %1327 = vdwg.mxu0
        %v1328 = vmul.f32 %v1325, 10.0
        %s1329 = scalar_lea.vmem %s15, 16
        %v1330 = vld [vmem:[%s1329] sm:$0x7f]
        %v1331 = vadd.f32 %v1328, %v1330
        %v1332 = vsel %vm911, %v1331, -inf
        %1333 = vmax.xlane.f32.xlu0 %v1332
        %v1334 = vpop.xlane.xlu0 %1333
        %v1335 = vsub.f32 %v1331, %v1334
        %v1336 = vmul.f32 %v1335, 1.442695
        %v1337 = vpow.pop %v1336
        %v1338 = vsel %vm911, %v1337, 0.0
        %1339 = vadd.xlane.f32.xlu0 %v1338
        %v1340 = vpop.xlane.xlu0 %1339
        %v1341 = vrcp.pop %v1340
        %v1342 = vmul.f32 %v1337, %v1341
        %1343 = vrot.lane.b32.xlu0 %v726, 32
        %v1344 = vpop.permute.xlu0 %1343
        %v1346 = vsel %vm926, %v1342, 0
        %v1348 = vsel %vm570, %v1344, 0
        %1350 = vmatprep.subr.mxu0 0.0
        %1351 = vmatpush1.msra.mxu0 0.0
        %1352 = vmatprep.subr.mxu0 0.0
        %1353 = vmatpush1.msra.mxu0 0.0
        %1354 = vmatprep.subr.mxu0 0.0
        %1355 = vmatpush1.msra.mxu0 0.0
        %1356 = vmatprep.subr.mxu0 0.0
        %1357 = vmatpush1.msra.mxu0 0.0
        %1358 = vmatprep.subr.mxu0 0.0
        %1359 = vmatpush1.msra.mxu0 0.0
        %1360 = vmatprep.subr.mxu0 0.0
        %1361 = vmatpush1.msra.mxu0 0.0
        %1362 = vmatprep.subr.mxu0 0.0
        %1363 = vmatpush1.msra.mxu0 0.0
        %1364 = vmatprep.subr.mxu0 0.0
        %1365 = vmatpush1.msra.mxu0 0.0
        %1366 = vmatprep.subr.mxu0 0.0
        %1367 = vmatpush1.msra.mxu0 0.0
        %1368 = vmatprep.subr.mxu0 0.0
        %1369 = vmatpush1.msra.mxu0 0.0
        %1370 = vmatprep.subr.mxu0 0.0
        %1371 = vmatpush1.msra.mxu0 0.0
        %1372 = vmatprep.subr.mxu0 0.0
        %1373 = vmatpush1.msra.mxu0 0.0
        %1374 = vmatprep.subr.mxu0 0.0
        %1375 = vmatpush1.msra.mxu0 0.0
        %1376 = vmatprep.subr.mxu0 0.0
        %1377 = vmatpush1.msra.mxu0 0.0
        %1378 = vmatprep.subr.mxu0 0.0
        %1379 = vmatpush1.msra.mxu0 0.0
        %1380 = vmatprep.subr.mxu0 0.0
        %1381 = vmatpush1.msra.mxu0 %v1348
        %1382 = vmatprep.subr.mxu0 0.0
        %1383 = vmatpush2.msra.mxu0 0.0
        %1384 = vmatprep.subr.mxu0 0.0
        %1385 = vmatpush2.msra.mxu0 0.0
        %1386 = vmatprep.subr.mxu0 0.0
        %1387 = vmatpush2.msra.mxu0 0.0
        %1388 = vmatprep.subr.mxu0 0.0
        %1389 = vmatpush2.msra.mxu0 0.0
        %1390 = vmatprep.subr.mxu0 0.0
        %1391 = vmatpush2.msra.mxu0 0.0
        %1392 = vmatprep.subr.mxu0 0.0
        %1393 = vmatpush2.msra.mxu0 0.0
        %1394 = vmatprep.subr.mxu0 0.0
        %1395 = vmatpush2.msra.mxu0 0.0
        %1396 = vmatprep.subr.mxu0 0.0
        %1397 = vmatpush2.msra.mxu0 0.0
        %1398 = vmatprep.subr.mxu0 0.0
        %1399 = vmatpush2.msra.mxu0 0.0
        %1400 = vmatprep.subr.mxu0 0.0
        %1401 = vmatpush2.msra.mxu0 0.0
        %1402 = vmatprep.subr.mxu0 0.0
        %1403 = vmatpush2.msra.mxu0 0.0
        %1404 = vmatprep.subr.mxu0 0.0
        %1405 = vmatpush2.msra.mxu0 0.0
        %1406 = vmatprep.subr.mxu0 0.0
        %1407 = vmatpush2.msra.mxu0 0.0
        %1408 = vmatprep.subr.mxu0 0.0
        %1409 = vmatpush2.msra.mxu0 0.0
        %1410 = vmatprep.subr.mxu0 0.0
        %1411 = vmatpush2.msra.mxu0 0.0
        %1412 = vmatprep.subr.mxu0 0.0
        %1413 = vmatpush2.msra.mxu0 0.0
        %1414 = vmatprep.mubr.f32.mxu0 0.0
        %1415 = vmatmul.mubr.f32.gmra.mxu0 %v1346
        %v1416 = vpop.f32.mrf.mxu0
        %v1417 = vadd.f32 0.0, %v1416
        %v1418 = vpop.f32.mrf.mxu0
        %1419 = vdwg.mxu0
        %1420 = vrot.lane.b32.xlu0 %v805, 32
        %v1421 = vpop.permute.xlu0 %1420
        %v1423 = vsel %vm733, %v1421, 0.0
        %1424 = vadd.xlane.f32.xlu0 %v1423
        %v1425 = vpop.xlane.xlu0 %1424
        %v1426 = vadd.f32 %v1425, 1e-12
        %v1427 = vrsqrt.pop %v1426
        %v1428 = vmul.f32 %v724, %v1427
        %v1429 = vlaneseq
        %v1430 = vshrl.u32 %v1429, 7
        %v1431 = vsub.s32 3, %v1430
        %v1432 = vrot.slane %v730, %v1431
        %1434 = vrot.lane.b32.xlu0 %v1432, 96
        %v1435 = vpop.permute.xlu0 %1434
        %v1437 = vmul.f32 %v1428, %v1435
        %v1438 = vsub.f32 0.0, %v1437
        %1440 = vrot.lane.b32.xlu0 %v1438, 16
        %v1441 = vpop.permute.xlu0 %1440
        %1444 = vrot.lane.b32.xlu0 %v1437, 48
        %v1445 = vpop.permute.xlu0 %1444
        %v1447 = vsel %vm754, %v1441, %v1445
        %1448 = vrot.lane.b32.xlu0 %v565, 96
        %v1449 = vpop.permute.xlu0 %1448
        %v1451 = vmul.f32 %v1437, %v1449
        %v1452 = vmul.f32 %v1447, %v566
        %1454 = vrot.lane.b32.xlu0 %v1452, 96
        %v1455 = vpop.permute.xlu0 %1454
        %v1457 = vadd.f32 %v1451, %v1455
        %1458 = vrot.lane.b32.xlu0 %v567, 96
        %v1459 = vpop.permute.xlu0 %1458
        %v1461 = vmul.f32 %v1457, %v1459
        %1463 = vrot.lane.b32.xlu0 %v1461, 32
        %v1464 = vpop.permute.xlu0 %1463
        %v1465 = vsel %vm831, %v1464, 0
        %1467 = vmatprep.subr.mxu0 0.0
        %1468 = vmatpush1.xpose.msra.mxu0 0.0
        %1469 = vmatprep.subr.mxu0 0.0
        %1470 = vmatpush1.xpose.msra.mxu0 0.0
        %1471 = vmatprep.subr.mxu0 0.0
        %1472 = vmatpush1.xpose.msra.mxu0 0.0
        %1473 = vmatprep.subr.mxu0 0.0
        %1474 = vmatpush1.xpose.msra.mxu0 0.0
        %1475 = vmatprep.subr.mxu0 0.0
        %1476 = vmatpush1.xpose.msra.mxu0 0.0
        %1477 = vmatprep.subr.mxu0 0.0
        %1478 = vmatpush1.xpose.msra.mxu0 0.0
        %1479 = vmatprep.subr.mxu0 0.0
        %1480 = vmatpush1.xpose.msra.mxu0 0.0
        %1481 = vmatprep.subr.mxu0 0.0
        %1482 = vmatpush1.xpose.msra.mxu0 0.0
        %1483 = vmatprep.subr.mxu0 0.0
        %1484 = vmatpush1.xpose.msra.mxu0 0.0
        %1485 = vmatprep.subr.mxu0 0.0
        %1486 = vmatpush1.xpose.msra.mxu0 0.0
        %1487 = vmatprep.subr.mxu0 0.0
        %1488 = vmatpush1.xpose.msra.mxu0 0.0
        %1489 = vmatprep.subr.mxu0 0.0
        %1490 = vmatpush1.xpose.msra.mxu0 0.0
        %1491 = vmatprep.subr.mxu0 0.0
        %1492 = vmatpush1.xpose.msra.mxu0 0.0
        %1493 = vmatprep.subr.mxu0 0.0
        %1494 = vmatpush1.xpose.msra.mxu0 0.0
        %1495 = vmatprep.subr.mxu0 0.0
        %1496 = vmatpush1.xpose.msra.mxu0 0.0
        %1497 = vmatprep.subr.mxu0 0.0
        %1498 = vmatpush1.xpose.msra.mxu0 %v1256
        %1499 = vmatprep.subr.mxu0 0.0
        %1500 = vmatpush2.xpose.msra.mxu0 0.0
        %1501 = vmatprep.subr.mxu0 0.0
        %1502 = vmatpush2.xpose.msra.mxu0 0.0
        %1503 = vmatprep.subr.mxu0 0.0
        %1504 = vmatpush2.xpose.msra.mxu0 0.0
        %1505 = vmatprep.subr.mxu0 0.0
        %1506 = vmatpush2.xpose.msra.mxu0 0.0
        %1507 = vmatprep.subr.mxu0 0.0
        %1508 = vmatpush2.xpose.msra.mxu0 0.0
        %1509 = vmatprep.subr.mxu0 0.0
        %1510 = vmatpush2.xpose.msra.mxu0 0.0
        %1511 = vmatprep.subr.mxu0 0.0
        %1512 = vmatpush2.xpose.msra.mxu0 0.0
        %1513 = vmatprep.subr.mxu0 0.0
        %1514 = vmatpush2.xpose.msra.mxu0 0.0
        %1515 = vmatprep.subr.mxu0 0.0
        %1516 = vmatpush2.xpose.msra.mxu0 0.0
        %1517 = vmatprep.subr.mxu0 0.0
        %1518 = vmatpush2.xpose.msra.mxu0 0.0
        %1519 = vmatprep.subr.mxu0 0.0
        %1520 = vmatpush2.xpose.msra.mxu0 0.0
        %1521 = vmatprep.subr.mxu0 0.0
        %1522 = vmatpush2.xpose.msra.mxu0 0.0
        %1523 = vmatprep.subr.mxu0 0.0
        %1524 = vmatpush2.xpose.msra.mxu0 0.0
        %1525 = vmatprep.subr.mxu0 0.0
        %1526 = vmatpush2.xpose.msra.mxu0 0.0
        %1527 = vmatprep.subr.mxu0 0.0
        %1528 = vmatpush2.xpose.msra.mxu0 0.0
        %1529 = vmatprep.subr.mxu0 0.0
        %1530 = vmatpush2.xpose.msra.mxu0 0.0
        %1531 = vmatprep.mubr.f32.mxu0 0.0
        %1532 = vmatmul.mubr.f32.gmra.mxu0 %v1465
        %v1533 = vpop.f32.mrf.mxu0
        %v1534 = vadd.f32 0.0, %v1533
        %v1535 = vpop.f32.mrf.mxu0
        %1536 = vdwg.mxu0
        %v1537 = vmul.f32 %v1534, 10.0
        %s1538 = scalar_lea.vmem %s15, 24
        %v1539 = vld [vmem:[%s1538] sm:$0x7f]
        %v1540 = vadd.f32 %v1537, %v1539
        %v1541 = vsel %vm911, %v1540, -inf
        %1542 = vmax.xlane.f32.xlu0 %v1541
        %v1543 = vpop.xlane.xlu0 %1542
        %v1544 = vsub.f32 %v1540, %v1543
        %v1545 = vmul.f32 %v1544, 1.442695
        %v1546 = vpow.pop %v1545
        %v1547 = vsel %vm911, %v1546, 0.0
        %1548 = vadd.xlane.f32.xlu0 %v1547
        %v1549 = vpop.xlane.xlu0 %1548
        %v1550 = vrcp.pop %v1549
        %v1551 = vmul.f32 %v1546, %v1550
        %v1553 = vsel %vm926, %v1551, 0
        %1555 = vmatprep.subr.mxu0 0.0
        %1556 = vmatpush1.msra.mxu0 0.0
        %1557 = vmatprep.subr.mxu0 0.0
        %1558 = vmatpush1.msra.mxu0 0.0
        %1559 = vmatprep.subr.mxu0 0.0
        %1560 = vmatpush1.msra.mxu0 0.0
        %1561 = vmatprep.subr.mxu0 0.0
        %1562 = vmatpush1.msra.mxu0 0.0
        %1563 = vmatprep.subr.mxu0 0.0
        %1564 = vmatpush1.msra.mxu0 0.0
        %1565 = vmatprep.subr.mxu0 0.0
        %1566 = vmatpush1.msra.mxu0 0.0
        %1567 = vmatprep.subr.mxu0 0.0
        %1568 = vmatpush1.msra.mxu0 0.0
        %1569 = vmatprep.subr.mxu0 0.0
        %1570 = vmatpush1.msra.mxu0 0.0
        %1571 = vmatprep.subr.mxu0 0.0
        %1572 = vmatpush1.msra.mxu0 0.0
        %1573 = vmatprep.subr.mxu0 0.0
        %1574 = vmatpush1.msra.mxu0 0.0
        %1575 = vmatprep.subr.mxu0 0.0
        %1576 = vmatpush1.msra.mxu0 0.0
        %1577 = vmatprep.subr.mxu0 0.0
        %1578 = vmatpush1.msra.mxu0 0.0
        %1579 = vmatprep.subr.mxu0 0.0
        %1580 = vmatpush1.msra.mxu0 0.0
        %1581 = vmatprep.subr.mxu0 0.0
        %1582 = vmatpush1.msra.mxu0 0.0
        %1583 = vmatprep.subr.mxu0 0.0
        %1584 = vmatpush1.msra.mxu0 0.0
        %1585 = vmatprep.subr.mxu0 0.0
        %1586 = vmatpush1.msra.mxu0 %v1348
        %1587 = vmatprep.subr.mxu0 0.0
        %1588 = vmatpush2.msra.mxu0 0.0
        %1589 = vmatprep.subr.mxu0 0.0
        %1590 = vmatpush2.msra.mxu0 0.0
        %1591 = vmatprep.subr.mxu0 0.0
        %1592 = vmatpush2.msra.mxu0 0.0
        %1593 = vmatprep.subr.mxu0 0.0
        %1594 = vmatpush2.msra.mxu0 0.0
        %1595 = vmatprep.subr.mxu0 0.0
        %1596 = vmatpush2.msra.mxu0 0.0
        %1597 = vmatprep.subr.mxu0 0.0
        %1598 = vmatpush2.msra.mxu0 0.0
        %1599 = vmatprep.subr.mxu0 0.0
        %1600 = vmatpush2.msra.mxu0 0.0
        %1601 = vmatprep.subr.mxu0 0.0
        %1602 = vmatpush2.msra.mxu0 0.0
        %1603 = vmatprep.subr.mxu0 0.0
        %1604 = vmatpush2.msra.mxu0 0.0
        %1605 = vmatprep.subr.mxu0 0.0
        %1606 = vmatpush2.msra.mxu0 0.0
        %1607 = vmatprep.subr.mxu0 0.0
        %1608 = vmatpush2.msra.mxu0 0.0
        %1609 = vmatprep.subr.mxu0 0.0
        %1610 = vmatpush2.msra.mxu0 0.0
        %1611 = vmatprep.subr.mxu0 0.0
        %1612 = vmatpush2.msra.mxu0 0.0
        %1613 = vmatprep.subr.mxu0 0.0
        %1614 = vmatpush2.msra.mxu0 0.0
        %1615 = vmatprep.subr.mxu0 0.0
        %1616 = vmatpush2.msra.mxu0 0.0
        %1617 = vmatprep.subr.mxu0 0.0
        %1618 = vmatpush2.msra.mxu0 0.0
        %1619 = vmatprep.mubr.f32.mxu0 0.0
        %1620 = vmatmul.mubr.f32.gmra.mxu0 %v1553
        %v1621 = vpop.f32.mrf.mxu0
        %v1622 = vadd.f32 0.0, %v1621
        %v1623 = vpop.f32.mrf.mxu0
        %1624 = vdwg.mxu0
        %1626 = vrot.lane.b32.xlu0 %v1203, 32
        %v1627 = vpop.permute.xlu0 %1626
        %1630 = vrot.lane.b32.xlu0 %v1417, 64
        %v1631 = vpop.permute.xlu0 %1630
        %1634 = vrot.lane.b32.xlu0 %v1622, 96
        %v1635 = vpop.permute.xlu0 %1634
        %v1637 = vsel %vm831, %v999, %v1627
        %vm1638 = vcmask 523264
        %v1639 = vsel %vm1638, %v1637, %v1631
        %vm1640 = vcmask 785408
        %v1641 = vsel %vm1640, %v1639, %v1635
        %v1642 = vpack.c.bf16 %v1641, %v1641
        %v1643 = vld [vmem:[%s3] sm:$0xf]
        %v1644 = vld [vmem:[%s3 + $0x4] sm:$0xf]
        %v1645 = vld [vmem:[%s3 + $0x8] sm:$0xf]
        %v1646 = vld [vmem:[%s3 + $0xc] sm:$0xf]
        %v1647 = vld [vmem:[%s3 + $0x10] sm:$0xf]
        %v1648 = vld [vmem:[%s3 + $0x14] sm:$0xf]
        %v1649 = vld [vmem:[%s3 + $0x18] sm:$0xf]
        %v1650 = vld [vmem:[%s3 + $0x1c] sm:$0xf]
        %v1651 = vld [vmem:[%s3 + $0x20] sm:$0xf]
        %v1652 = vld [vmem:[%s3 + $0x24] sm:$0xf]
        %v1653 = vld [vmem:[%s3 + $0x28] sm:$0xf]
        %v1654 = vld [vmem:[%s3 + $0x2c] sm:$0xf]
        %v1655 = vld [vmem:[%s3 + $0x30] sm:$0xf]
        %v1656 = vld [vmem:[%s3 + $0x34] sm:$0xf]
        %v1657 = vld [vmem:[%s3 + $0x38] sm:$0xf]
        %v1658 = vld [vmem:[%s3 + $0x3c] sm:$0xf]
        %v1675 = vunpack.c.l.b16 %v1643
        %v1676 = vunpack.c.l.b16 %v1644
        %v1677 = vunpack.c.l.b16 %v1645
        %v1678 = vunpack.c.l.b16 %v1646
        %v1679 = vunpack.c.l.b16 %v1647
        %v1680 = vunpack.c.l.b16 %v1648
        %v1681 = vunpack.c.l.b16 %v1649
        %v1682 = vunpack.c.l.b16 %v1650
        %v1683 = vunpack.c.l.b16 %v1651
        %v1684 = vunpack.c.l.b16 %v1652
        %v1685 = vunpack.c.l.b16 %v1653
        %v1686 = vunpack.c.l.b16 %v1654
        %v1687 = vunpack.c.l.b16 %v1655
        %v1688 = vunpack.c.l.b16 %v1656
        %v1689 = vunpack.c.l.b16 %v1657
        %v1690 = vunpack.c.l.b16 %v1658
        %v1691 = vpack.c.b16 %v1676, %v1675
        %v1692 = vpack.c.b16 %v1678, %v1677
        %v1693 = vpack.c.b16 %v1680, %v1679
        %v1694 = vpack.c.b16 %v1682, %v1681
        %v1695 = vpack.c.b16 %v1684, %v1683
        %v1696 = vpack.c.b16 %v1686, %v1685
        %v1697 = vpack.c.b16 %v1688, %v1687
        %v1698 = vpack.c.b16 %v1690, %v1689
        %1707 = vmatprep.subr.bf16.mxu0 0
        %1708 = vmatpush1.bf16.msra.mxu0 %v1698
        %1709 = vmatprep.subr.bf16.mxu0 0
        %1710 = vmatpush1.bf16.msra.mxu0 %v1697
        %1711 = vmatprep.subr.bf16.mxu0 0
        %1712 = vmatpush1.bf16.msra.mxu0 %v1696
        %1713 = vmatprep.subr.bf16.mxu0 0
        %1714 = vmatpush1.bf16.msra.mxu0 %v1695
        %1715 = vmatprep.subr.bf16.mxu0 0
        %1716 = vmatpush1.bf16.msra.mxu0 %v1694
        %1717 = vmatprep.subr.bf16.mxu0 0
        %1718 = vmatpush1.bf16.msra.mxu0 %v1693
        %1719 = vmatprep.subr.bf16.mxu0 0
        %1720 = vmatpush1.bf16.msra.mxu0 %v1692
        %1721 = vmatprep.subr.bf16.mxu0 0
        %1722 = vmatpush1.bf16.msra.mxu0 %v1691
        %1723 = vmatprep.subr.bf16.mxu0 0
        %1724 = vmatpush2.bf16.msra.mxu0 0
        %1725 = vmatprep.subr.bf16.mxu0 0
        %1726 = vmatpush2.bf16.msra.mxu0 0
        %1727 = vmatprep.subr.bf16.mxu0 0
        %1728 = vmatpush2.bf16.msra.mxu0 0
        %1729 = vmatprep.subr.bf16.mxu0 0
        %1730 = vmatpush2.bf16.msra.mxu0 0
        %1731 = vmatprep.subr.bf16.mxu0 0
        %1732 = vmatpush2.bf16.msra.mxu0 0
        %1733 = vmatprep.subr.bf16.mxu0 0
        %1734 = vmatpush2.bf16.msra.mxu0 0
        %1735 = vmatprep.subr.bf16.mxu0 0
        %1736 = vmatpush2.bf16.msra.mxu0 0
        %1737 = vmatprep.subr.bf16.mxu0 0
        %1738 = vmatpush2.bf16.msra.mxu0 0
        %1739 = vmatprep.mubr.bf16.mxu0 0
        %1740 = vmatmul.mubr.bf16.gmra.mxu0 %v1642
        %v1741 = vpop.f32.mrf.mxu0
        %v1742 = vadd.f32 0.0, %v1741
        %v1743 = vpop.f32.mrf.mxu0
        %v1744 = vpop.f32.mrf.mxu0
        %v1745 = vpop.f32.mrf.mxu0
        %1746 = vdwg.mxu0
        %v1747 = vadd.f32 %v564, %v1742
        %v1748 = vld [vmem:[%s6] sm:$0x1]
        %v1749 = vsel %vm570, %v1747, 0.0
        %1750 = vadd.xlane.f32.xlu0 %v1749
        %v1751 = vpop.xlane.xlu0 %1750
        %v1752 = vmul.f32 %v1751, %v574
        %v1753 = vsub.f32 %v1747, %v1752
        %v1754 = vmul.f32 %v1753, %v1753
        %v1755 = vsel %vm570, %v1754, 0.0
        %1756 = vadd.xlane.f32.xlu0 %v1755
        %v1757 = vpop.xlane.xlu0 %1756
        %v1758 = vmul.f32 %v1757, %v574
        %v1759 = vadd.f32 %v1758, 1e-05
        %v1760 = vrsqrt.pop %v1759
        %v1761 = vmul.f32 %v1753, %v1760
        %v1763 = vlaneseq
        %v1764 = vshrl.u32 %v1763, 7
        %v1765 = vsub.s32 0, %v1764
        %v1766 = vrot.slane %v1748, %v1765
        %v1768 = vmul.f32 %v1761, %v1766
        %v1769 = vpack.c.bf16 %v1768, %v1768
        %v1770 = vld [vmem:[#allocation2] sm:$0xff]
        %v1771 = vld [vmem:[#allocation2 + $0x8] sm:$0xff]
        %v1772 = vld [vmem:[#allocation2 + $0x10] sm:$0xff]
        %v1773 = vld [vmem:[#allocation2 + $0x18] sm:$0xff]
        %v1774 = vld [vmem:[#allocation2 + $0x20] sm:$0xff]
        %v1775 = vld [vmem:[#allocation2 + $0x28] sm:$0xff]
        %v1776 = vld [vmem:[#allocation2 + $0x30] sm:$0xff]
        %v1777 = vld [vmem:[#allocation2 + $0x38] sm:$0xff]
        %v1778 = vld [vmem:[#allocation2 + $0x40] sm:$0xff]
        %v1779 = vld [vmem:[#allocation2 + $0x48] sm:$0xff]
        %v1780 = vld [vmem:[#allocation2 + $0x50] sm:$0xff]
        %v1781 = vld [vmem:[#allocation2 + $0x58] sm:$0xff]
        %v1782 = vld [vmem:[#allocation2 + $0x60] sm:$0xff]
        %v1783 = vld [vmem:[#allocation2 + $0x68] sm:$0xff]
        %v1784 = vld [vmem:[#allocation2 + $0x70] sm:$0xff]
        %v1785 = vld [vmem:[#allocation2 + $0x78] sm:$0xff]
        %v1786 = vld [vmem:[#allocation2 + $0x80] sm:$0xff]
        %v1787 = vld [vmem:[#allocation2 + $0x88] sm:$0xff]
        %v1788 = vld [vmem:[#allocation2 + $0x90] sm:$0xff]
        %v1789 = vld [vmem:[#allocation2 + $0x98] sm:$0xff]
        %v1790 = vld [vmem:[#allocation2 + $0xa0] sm:$0xff]
        %v1791 = vld [vmem:[#allocation2 + $0xa8] sm:$0xff]
        %v1792 = vld [vmem:[#allocation2 + $0xb0] sm:$0xff]
        %v1793 = vld [vmem:[#allocation2 + $0xb8] sm:$0xff]
        %v1794 = vld [vmem:[#allocation2 + $0xc0] sm:$0xff]
        %v1795 = vld [vmem:[#allocation2 + $0xc8] sm:$0xff]
        %v1796 = vld [vmem:[#allocation2 + $0xd0] sm:$0xff]
        %v1797 = vld [vmem:[#allocation2 + $0xd8] sm:$0xff]
        %v1798 = vld [vmem:[#allocation2 + $0xe0] sm:$0xff]
        %v1799 = vld [vmem:[#allocation2 + $0xe8] sm:$0xff]
        %v1800 = vld [vmem:[#allocation2 + $0xf0] sm:$0xff]
        %v1801 = vld [vmem:[#allocation2 + $0xf8] sm:$0xff]
        %v1834 = vunpack.c.l.b16 %v1770
        %v1835 = vunpack.c.h.b16 %v1770
        %v1836 = vunpack.c.l.b16 %v1771
        %v1837 = vunpack.c.h.b16 %v1771
        %v1838 = vunpack.c.l.b16 %v1772
        %v1839 = vunpack.c.h.b16 %v1772
        %v1840 = vunpack.c.l.b16 %v1773
        %v1841 = vunpack.c.h.b16 %v1773
        %v1842 = vunpack.c.l.b16 %v1774
        %v1843 = vunpack.c.h.b16 %v1774
        %v1844 = vunpack.c.l.b16 %v1775
        %v1845 = vunpack.c.h.b16 %v1775
        %v1846 = vunpack.c.l.b16 %v1776
        %v1847 = vunpack.c.h.b16 %v1776
        %v1848 = vunpack.c.l.b16 %v1777
        %v1849 = vunpack.c.h.b16 %v1777
        %v1850 = vunpack.c.l.b16 %v1778
        %v1851 = vunpack.c.h.b16 %v1778
        %v1852 = vunpack.c.l.b16 %v1779
        %v1853 = vunpack.c.h.b16 %v1779
        %v1854 = vunpack.c.l.b16 %v1780
        %v1855 = vunpack.c.h.b16 %v1780
        %v1856 = vunpack.c.l.b16 %v1781
        %v1857 = vunpack.c.h.b16 %v1781
        %v1858 = vunpack.c.l.b16 %v1782
        %v1859 = vunpack.c.h.b16 %v1782
        %v1860 = vunpack.c.l.b16 %v1783
        %v1861 = vunpack.c.h.b16 %v1783
        %v1862 = vunpack.c.l.b16 %v1784
        %v1863 = vunpack.c.h.b16 %v1784
        %v1864 = vunpack.c.l.b16 %v1785
        %v1865 = vunpack.c.h.b16 %v1785
        %v1866 = vunpack.c.l.b16 %v1786
        %v1867 = vunpack.c.h.b16 %v1786
        %v1868 = vunpack.c.l.b16 %v1787
        %v1869 = vunpack.c.h.b16 %v1787
        %v1870 = vunpack.c.l.b16 %v1788
        %v1871 = vunpack.c.h.b16 %v1788
        %v1872 = vunpack.c.l.b16 %v1789
        %v1873 = vunpack.c.h.b16 %v1789
        %v1874 = vunpack.c.l.b16 %v1790
        %v1875 = vunpack.c.h.b16 %v1790
        %v1876 = vunpack.c.l.b16 %v1791
        %v1877 = vunpack.c.h.b16 %v1791
        %v1878 = vunpack.c.l.b16 %v1792
        %v1879 = vunpack.c.h.b16 %v1792
        %v1880 = vunpack.c.l.b16 %v1793
        %v1881 = vunpack.c.h.b16 %v1793
        %v1882 = vunpack.c.l.b16 %v1794
        %v1883 = vunpack.c.h.b16 %v1794
        %v1884 = vunpack.c.l.b16 %v1795
        %v1885 = vunpack.c.h.b16 %v1795
        %v1886 = vunpack.c.l.b16 %v1796
        %v1887 = vunpack.c.h.b16 %v1796
        %v1888 = vunpack.c.l.b16 %v1797
        %v1889 = vunpack.c.h.b16 %v1797
        %v1890 = vunpack.c.l.b16 %v1798
        %v1891 = vunpack.c.h.b16 %v1798
        %v1892 = vunpack.c.l.b16 %v1799
        %v1893 = vunpack.c.h.b16 %v1799
        %v1894 = vunpack.c.l.b16 %v1800
        %v1895 = vunpack.c.h.b16 %v1800
        %v1896 = vunpack.c.l.b16 %v1801
        %v1897 = vunpack.c.h.b16 %v1801
        %v1898 = vpack.c.b16 %v1838, %v1834
        %v1899 = vpack.c.b16 %v1839, %v1835
        %v1900 = vpack.c.b16 %v1840, %v1836
        %v1901 = vpack.c.b16 %v1841, %v1837
        %v1902 = vpack.c.b16 %v1846, %v1842
        %v1903 = vpack.c.b16 %v1847, %v1843
        %v1904 = vpack.c.b16 %v1848, %v1844
        %v1905 = vpack.c.b16 %v1849, %v1845
        %v1906 = vpack.c.b16 %v1854, %v1850
        %v1907 = vpack.c.b16 %v1855, %v1851
        %v1908 = vpack.c.b16 %v1856, %v1852
        %v1909 = vpack.c.b16 %v1857, %v1853
        %v1910 = vpack.c.b16 %v1862, %v1858
        %v1911 = vpack.c.b16 %v1863, %v1859
        %v1912 = vpack.c.b16 %v1864, %v1860
        %v1913 = vpack.c.b16 %v1865, %v1861
        %v1914 = vpack.c.b16 %v1870, %v1866
        %v1915 = vpack.c.b16 %v1871, %v1867
        %v1916 = vpack.c.b16 %v1872, %v1868
        %v1917 = vpack.c.b16 %v1873, %v1869
        %v1918 = vpack.c.b16 %v1878, %v1874
        %v1919 = vpack.c.b16 %v1879, %v1875
        %v1920 = vpack.c.b16 %v1880, %v1876
        %v1921 = vpack.c.b16 %v1881, %v1877
        %v1922 = vpack.c.b16 %v1886, %v1882
        %v1923 = vpack.c.b16 %v1887, %v1883
        %v1924 = vpack.c.b16 %v1888, %v1884
        %v1925 = vpack.c.b16 %v1889, %v1885
        %v1926 = vpack.c.b16 %v1894, %v1890
        %v1927 = vpack.c.b16 %v1895, %v1891
        %v1928 = vpack.c.b16 %v1896, %v1892
        %v1929 = vpack.c.b16 %v1897, %v1893
        %1962 = vmatprep.subr.bf16.mxu0 %v1927
        %1963 = vmatpush1.bf16.msra.mxu0 %v1926
        %1964 = vmatprep.subr.bf16.mxu0 %v1923
        %1965 = vmatpush1.bf16.msra.mxu0 %v1922
        %1966 = vmatprep.subr.bf16.mxu0 %v1919
        %1967 = vmatpush1.bf16.msra.mxu0 %v1918
        %1968 = vmatprep.subr.bf16.mxu0 %v1915
        %1969 = vmatpush1.bf16.msra.mxu0 %v1914
        %1970 = vmatprep.subr.bf16.mxu0 %v1911
        %1971 = vmatpush1.bf16.msra.mxu0 %v1910
        %1972 = vmatprep.subr.bf16.mxu0 %v1907
        %1973 = vmatpush1.bf16.msra.mxu0 %v1906
        %1974 = vmatprep.subr.bf16.mxu0 %v1903
        %1975 = vmatpush1.bf16.msra.mxu0 %v1902
        %1976 = vmatprep.subr.bf16.mxu0 %v1899
        %1977 = vmatpush1.bf16.msra.mxu0 %v1898
        %1978 = vmatprep.subr.bf16.mxu0 0
        %1979 = vmatpush2.bf16.msra.mxu0 0
        %1980 = vmatprep.subr.bf16.mxu0 0
        %1981 = vmatpush2.bf16.msra.mxu0 0
        %1982 = vmatprep.subr.bf16.mxu0 0
        %1983 = vmatpush2.bf16.msra.mxu0 0
        %1984 = vmatprep.subr.bf16.mxu0 0
        %1985 = vmatpush2.bf16.msra.mxu0 0
        %1986 = vmatprep.subr.bf16.mxu0 0
        %1987 = vmatpush2.bf16.msra.mxu0 0
        %1988 = vmatprep.subr.bf16.mxu0 0
        %1989 = vmatpush2.bf16.msra.mxu0 0
        %1990 = vmatprep.subr.bf16.mxu0 0
        %1991 = vmatpush2.bf16.msra.mxu0 0
        %1992 = vmatprep.subr.bf16.mxu0 0
        %1993 = vmatpush2.bf16.msra.mxu0 0
        %1994 = vmatprep.mubr.bf16.mxu0 0
        %1995 = vmatmul.mubr.bf16.gmra.mxu0 %v1769
        %v1996 = vpop.f32.mrf.mxu0
        %v1997 = vadd.f32 0.0, %v1996
        %v1998 = vpop.f32.mrf.mxu0
        %v1999 = vadd.f32 0.0, %v1998
        %v2000 = vpop.f32.mrf.mxu0
        %v2001 = vpop.f32.mrf.mxu0
        %2002 = vdwg.mxu0
        %2003 = vmatprep.subr.bf16.mxu0 %v1929
        %2004 = vmatpush1.bf16.msra.mxu0 %v1928
        %2005 = vmatprep.subr.bf16.mxu0 %v1925
        %2006 = vmatpush1.bf16.msra.mxu0 %v1924
        %2007 = vmatprep.subr.bf16.mxu0 %v1921
        %2008 = vmatpush1.bf16.msra.mxu0 %v1920
        %2009 = vmatprep.subr.bf16.mxu0 %v1917
        %2010 = vmatpush1.bf16.msra.mxu0 %v1916
        %2011 = vmatprep.subr.bf16.mxu0 %v1913
        %2012 = vmatpush1.bf16.msra.mxu0 %v1912
        %2013 = vmatprep.subr.bf16.mxu0 %v1909
        %2014 = vmatpush1.bf16.msra.mxu0 %v1908
        %2015 = vmatprep.subr.bf16.mxu0 %v1905
        %2016 = vmatpush1.bf16.msra.mxu0 %v1904
        %2017 = vmatprep.subr.bf16.mxu0 %v1901
        %2018 = vmatpush1.bf16.msra.mxu0 %v1900
        %2019 = vmatprep.subr.bf16.mxu0 0
        %2020 = vmatpush2.bf16.msra.mxu0 0
        %2021 = vmatprep.subr.bf16.mxu0 0
        %2022 = vmatpush2.bf16.msra.mxu0 0
        %2023 = vmatprep.subr.bf16.mxu0 0
        %2024 = vmatpush2.bf16.msra.mxu0 0
        %2025 = vmatprep.subr.bf16.mxu0 0
        %2026 = vmatpush2.bf16.msra.mxu0 0
        %2027 = vmatprep.subr.bf16.mxu0 0
        %2028 = vmatpush2.bf16.msra.mxu0 0
        %2029 = vmatprep.subr.bf16.mxu0 0
        %2030 = vmatpush2.bf16.msra.mxu0 0
        %2031 = vmatprep.subr.bf16.mxu0 0
        %2032 = vmatpush2.bf16.msra.mxu0 0
        %2033 = vmatprep.subr.bf16.mxu0 0
        %2034 = vmatpush2.bf16.msra.mxu0 0
        %2035 = vmatprep.mubr.bf16.mxu0 0
        %2036 = vmatmul.mubr.bf16.gmra.mxu0 %v1769
        %v2037 = vpop.f32.mrf.mxu0
        %v2038 = vadd.f32 0.0, %v2037
        %v2039 = vpop.f32.mrf.mxu0
        %v2040 = vadd.f32 0.0, %v2039
        %v2041 = vpop.f32.mrf.mxu0
        %v2042 = vpop.f32.mrf.mxu0
        %2043 = vdwg.mxu0
        %v2044 = vmul.f32 %v1997, %v1997
        %v2045 = vmul.f32 %v1999, %v1999
        %v2046 = vmul.f32 %v2038, %v2038
        %v2047 = vmul.f32 %v2040, %v2040
        %v2048 = vmul.f32 %v1997, %v2044
        %v2049 = vmul.f32 %v1999, %v2045
        %v2050 = vmul.f32 %v2038, %v2046
        %v2051 = vmul.f32 %v2040, %v2047
        %v2052 = vmul.f32 %v2048, 0.044715
        %v2053 = vmul.f32 %v2049, 0.044715
        %v2054 = vmul.f32 %v2050, 0.044715
        %v2055 = vmul.f32 %v2051, 0.044715
        %v2056 = vadd.f32 %v1997, %v2052
        %v2057 = vadd.f32 %v1999, %v2053
        %v2058 = vadd.f32 %v2038, %v2054
        %v2059 = vadd.f32 %v2040, %v2055
        %v2060 = vmul.f32 %v2056, 0.7978846
        %v2061 = vmul.f32 %v2057, 0.7978846
        %v2062 = vmul.f32 %v2058, 0.7978846
        %v2063 = vmul.f32 %v2059, 0.7978846
        %v2064 = vtanh.pop %v2060
        %v2065 = vtanh.pop %v2061
        %v2066 = vtanh.pop %v2062
        %v2067 = vtanh.pop %v2063
        %v2068 = vadd.f32 %v2064, 1.0
        %v2069 = vadd.f32 %v2065, 1.0
        %v2070 = vadd.f32 %v2066, 1.0
        %v2071 = vadd.f32 %v2067, 1.0
        %v2072 = vmul.f32 %v2068, 0.5
        %v2073 = vmul.f32 %v2069, 0.5
        %v2074 = vmul.f32 %v2070, 0.5
        %v2075 = vmul.f32 %v2071, 0.5
        %v2076 = vmul.f32 %v1997, %v2072
        %v2077 = vmul.f32 %v1999, %v2073
        %v2078 = vmul.f32 %v2038, %v2074
        %v2079 = vmul.f32 %v2040, %v2075
        %v2080 = vpack.c.bf16 %v2076, %v2076
        %v2081 = vpack.c.bf16 %v2077, %v2077
        %v2082 = vpack.c.bf16 %v2078, %v2078
        %v2083 = vpack.c.bf16 %v2079, %v2079
        %v2084 = vld [vmem:[#allocation4] sm:$0xf]
        %v2085 = vld [vmem:[#allocation4 + $0x4] sm:$0xf]
        %v2086 = vld [vmem:[#allocation4 + $0x8] sm:$0xf]
        %v2087 = vld [vmem:[#allocation4 + $0xc] sm:$0xf]
        %v2088 = vld [vmem:[#allocation4 + $0x10] sm:$0xf]
        %v2089 = vld [vmem:[#allocation4 + $0x14] sm:$0xf]
        %v2090 = vld [vmem:[#allocation4 + $0x18] sm:$0xf]
        %v2091 = vld [vmem:[#allocation4 + $0x1c] sm:$0xf]
        %v2092 = vld [vmem:[#allocation4 + $0x20] sm:$0xf]
        %v2093 = vld [vmem:[#allocation4 + $0x24] sm:$0xf]
        %v2094 = vld [vmem:[#allocation4 + $0x28] sm:$0xf]
        %v2095 = vld [vmem:[#allocation4 + $0x2c] sm:$0xf]
        %v2096 = vld [vmem:[#allocation4 + $0x30] sm:$0xf]
        %v2097 = vld [vmem:[#allocation4 + $0x34] sm:$0xf]
        %v2098 = vld [vmem:[#allocation4 + $0x38] sm:$0xf]
        %v2099 = vld [vmem:[#allocation4 + $0x3c] sm:$0xf]
        %v2100 = vld [vmem:[#allocation4 + $0x40] sm:$0xf]
        %v2101 = vld [vmem:[#allocation4 + $0x44] sm:$0xf]
        %v2102 = vld [vmem:[#allocation4 + $0x48] sm:$0xf]
        %v2103 = vld [vmem:[#allocation4 + $0x4c] sm:$0xf]
        %v2104 = vld [vmem:[#allocation4 + $0x50] sm:$0xf]
        %v2105 = vld [vmem:[#allocation4 + $0x54] sm:$0xf]
        %v2106 = vld [vmem:[#allocation4 + $0x58] sm:$0xf]
        %v2107 = vld [vmem:[#allocation4 + $0x5c] sm:$0xf]
        %v2108 = vld [vmem:[#allocation4 + $0x60] sm:$0xf]
        %v2109 = vld [vmem:[#allocation4 + $0x64] sm:$0xf]
        %v2110 = vld [vmem:[#allocation4 + $0x68] sm:$0xf]
        %v2111 = vld [vmem:[#allocation4 + $0x6c] sm:$0xf]
        %v2112 = vld [vmem:[#allocation4 + $0x70] sm:$0xf]
        %v2113 = vld [vmem:[#allocation4 + $0x74] sm:$0xf]
        %v2114 = vld [vmem:[#allocation4 + $0x78] sm:$0xf]
        %v2115 = vld [vmem:[#allocation4 + $0x7c] sm:$0xf]
        %v2116 = vld [vmem:[#allocation4 + $0x80] sm:$0xf]
        %v2117 = vld [vmem:[#allocation4 + $0x84] sm:$0xf]
        %v2118 = vld [vmem:[#allocation4 + $0x88] sm:$0xf]
        %v2119 = vld [vmem:[#allocation4 + $0x8c] sm:$0xf]
        %v2120 = vld [vmem:[#allocation4 + $0x90] sm:$0xf]
        %v2121 = vld [vmem:[#allocation4 + $0x94] sm:$0xf]
        %v2122 = vld [vmem:[#allocation4 + $0x98] sm:$0xf]
        %v2123 = vld [vmem:[#allocation4 + $0x9c] sm:$0xf]
        %v2124 = vld [vmem:[#allocation4 + $0xa0] sm:$0xf]
        %v2125 = vld [vmem:[#allocation4 + $0xa4] sm:$0xf]
        %v2126 = vld [vmem:[#allocation4 + $0xa8] sm:$0xf]
        %v2127 = vld [vmem:[#allocation4 + $0xac] sm:$0xf]
        %v2128 = vld [vmem:[#allocation4 + $0xb0] sm:$0xf]
        %v2129 = vld [vmem:[#allocation4 + $0xb4] sm:$0xf]
        %v2130 = vld [vmem:[#allocation4 + $0xb8] sm:$0xf]
        %v2131 = vld [vmem:[#allocation4 + $0xbc] sm:$0xf]
        %v2132 = vld [vmem:[#allocation4 + $0xc0] sm:$0xf]
        %v2133 = vld [vmem:[#allocation4 + $0xc4] sm:$0xf]
        %v2134 = vld [vmem:[#allocation4 + $0xc8] sm:$0xf]
        %v2135 = vld [vmem:[#allocation4 + $0xcc] sm:$0xf]
        %v2136 = vld [vmem:[#allocation4 + $0xd0] sm:$0xf]
        %v2137 = vld [vmem:[#allocation4 + $0xd4] sm:$0xf]
        %v2138 = vld [vmem:[#allocation4 + $0xd8] sm:$0xf]
        %v2139 = vld [vmem:[#allocation4 + $0xdc] sm:$0xf]
        %v2140 = vld [vmem:[#allocation4 + $0xe0] sm:$0xf]
        %v2141 = vld [vmem:[#allocation4 + $0xe4] sm:$0xf]
        %v2142 = vld [vmem:[#allocation4 + $0xe8] sm:$0xf]
        %v2143 = vld [vmem:[#allocation4 + $0xec] sm:$0xf]
        %v2144 = vld [vmem:[#allocation4 + $0xf0] sm:$0xf]
        %v2145 = vld [vmem:[#allocation4 + $0xf4] sm:$0xf]
        %v2146 = vld [vmem:[#allocation4 + $0xf8] sm:$0xf]
        %v2147 = vld [vmem:[#allocation4 + $0xfc] sm:$0xf]
        %v2212 = vunpack.c.l.b16 %v2084
        %v2213 = vunpack.c.l.b16 %v2085
        %v2214 = vunpack.c.l.b16 %v2086
        %v2215 = vunpack.c.l.b16 %v2087
        %v2216 = vunpack.c.l.b16 %v2088
        %v2217 = vunpack.c.l.b16 %v2089
        %v2218 = vunpack.c.l.b16 %v2090
        %v2219 = vunpack.c.l.b16 %v2091
        %v2220 = vunpack.c.l.b16 %v2092
        %v2221 = vunpack.c.l.b16 %v2093
        %v2222 = vunpack.c.l.b16 %v2094
        %v2223 = vunpack.c.l.b16 %v2095
        %v2224 = vunpack.c.l.b16 %v2096
        %v2225 = vunpack.c.l.b16 %v2097
        %v2226 = vunpack.c.l.b16 %v2098
        %v2227 = vunpack.c.l.b16 %v2099
        %v2228 = vunpack.c.l.b16 %v2100
        %v2229 = vunpack.c.l.b16 %v2101
        %v2230 = vunpack.c.l.b16 %v2102
        %v2231 = vunpack.c.l.b16 %v2103
        %v2232 = vunpack.c.l.b16 %v2104
        %v2233 = vunpack.c.l.b16 %v2105
        %v2234 = vunpack.c.l.b16 %v2106
        %v2235 = vunpack.c.l.b16 %v2107
        %v2236 = vunpack.c.l.b16 %v2108
        %v2237 = vunpack.c.l.b16 %v2109
        %v2238 = vunpack.c.l.b16 %v2110
        %v2239 = vunpack.c.l.b16 %v2111
        %v2240 = vunpack.c.l.b16 %v2112
        %v2241 = vunpack.c.l.b16 %v2113
        %v2242 = vunpack.c.l.b16 %v2114
        %v2243 = vunpack.c.l.b16 %v2115
        %v2244 = vunpack.c.l.b16 %v2116
        %v2245 = vunpack.c.l.b16 %v2117
        %v2246 = vunpack.c.l.b16 %v2118
        %v2247 = vunpack.c.l.b16 %v2119
        %v2248 = vunpack.c.l.b16 %v2120
        %v2249 = vunpack.c.l.b16 %v2121
        %v2250 = vunpack.c.l.b16 %v2122
        %v2251 = vunpack.c.l.b16 %v2123
        %v2252 = vunpack.c.l.b16 %v2124
        %v2253 = vunpack.c.l.b16 %v2125
        %v2254 = vunpack.c.l.b16 %v2126
        %v2255 = vunpack.c.l.b16 %v2127
        %v2256 = vunpack.c.l.b16 %v2128
        %v2257 = vunpack.c.l.b16 %v2129
        %v2258 = vunpack.c.l.b16 %v2130
        %v2259 = vunpack.c.l.b16 %v2131
        %v2260 = vunpack.c.l.b16 %v2132
        %v2261 = vunpack.c.l.b16 %v2133
        %v2262 = vunpack.c.l.b16 %v2134
        %v2263 = vunpack.c.l.b16 %v2135
        %v2264 = vunpack.c.l.b16 %v2136
        %v2265 = vunpack.c.l.b16 %v2137
        %v2266 = vunpack.c.l.b16 %v2138
        %v2267 = vunpack.c.l.b16 %v2139
        %v2268 = vunpack.c.l.b16 %v2140
        %v2269 = vunpack.c.l.b16 %v2141
        %v2270 = vunpack.c.l.b16 %v2142
        %v2271 = vunpack.c.l.b16 %v2143
        %v2272 = vunpack.c.l.b16 %v2144
        %v2273 = vunpack.c.l.b16 %v2145
        %v2274 = vunpack.c.l.b16 %v2146
        %v2275 = vunpack.c.l.b16 %v2147
        %v2276 = vpack.c.b16 %v2213, %v2212
        %v2277 = vpack.c.b16 %v2215, %v2214
        %v2278 = vpack.c.b16 %v2217, %v2216
        %v2279 = vpack.c.b16 %v2219, %v2218
        %v2280 = vpack.c.b16 %v2221, %v2220
        %v2281 = vpack.c.b16 %v2223, %v2222
        %v2282 = vpack.c.b16 %v2225, %v2224
        %v2283 = vpack.c.b16 %v2227, %v2226
        %v2284 = vpack.c.b16 %v2229, %v2228
        %v2285 = vpack.c.b16 %v2231, %v2230
        %v2286 = vpack.c.b16 %v2233, %v2232
        %v2287 = vpack.c.b16 %v2235, %v2234
        %v2288 = vpack.c.b16 %v2237, %v2236
        %v2289 = vpack.c.b16 %v2239, %v2238
        %v2290 = vpack.c.b16 %v2241, %v2240
        %v2291 = vpack.c.b16 %v2243, %v2242
        %v2292 = vpack.c.b16 %v2245, %v2244
        %v2293 = vpack.c.b16 %v2247, %v2246
        %v2294 = vpack.c.b16 %v2249, %v2248
        %v2295 = vpack.c.b16 %v2251, %v2250
        %v2296 = vpack.c.b16 %v2253, %v2252
        %v2297 = vpack.c.b16 %v2255, %v2254
        %v2298 = vpack.c.b16 %v2257, %v2256
        %v2299 = vpack.c.b16 %v2259, %v2258
        %v2300 = vpack.c.b16 %v2261, %v2260
        %v2301 = vpack.c.b16 %v2263, %v2262
        %v2302 = vpack.c.b16 %v2265, %v2264
        %v2303 = vpack.c.b16 %v2267, %v2266
        %v2304 = vpack.c.b16 %v2269, %v2268
        %v2305 = vpack.c.b16 %v2271, %v2270
        %v2306 = vpack.c.b16 %v2273, %v2272
        %v2307 = vpack.c.b16 %v2275, %v2274
        %2340 = vmatprep.subr.bf16.mxu0 0
        %2341 = vmatpush1.bf16.msra.mxu0 %v2283
        %2342 = vmatprep.subr.bf16.mxu0 0
        %2343 = vmatpush1.bf16.msra.mxu0 %v2282
        %2344 = vmatprep.subr.bf16.mxu0 0
        %2345 = vmatpush1.bf16.msra.mxu0 %v2281
        %2346 = vmatprep.subr.bf16.mxu0 0
        %2347 = vmatpush1.bf16.msra.mxu0 %v2280
        %2348 = vmatprep.subr.bf16.mxu0 0
        %2349 = vmatpush1.bf16.msra.mxu0 %v2279
        %2350 = vmatprep.subr.bf16.mxu0 0
        %2351 = vmatpush1.bf16.msra.mxu0 %v2278
        %2352 = vmatprep.subr.bf16.mxu0 0
        %2353 = vmatpush1.bf16.msra.mxu0 %v2277
        %2354 = vmatprep.subr.bf16.mxu0 0
        %2355 = vmatpush1.bf16.msra.mxu0 %v2276
        %2356 = vmatprep.subr.bf16.mxu0 0
        %2357 = vmatpush2.bf16.msra.mxu0 %v2291
        %2358 = vmatprep.subr.bf16.mxu0 0
        %2359 = vmatpush2.bf16.msra.mxu0 %v2290
        %2360 = vmatprep.subr.bf16.mxu0 0
        %2361 = vmatpush2.bf16.msra.mxu0 %v2289
        %2362 = vmatprep.subr.bf16.mxu0 0
        %2363 = vmatpush2.bf16.msra.mxu0 %v2288
        %2364 = vmatprep.subr.bf16.mxu0 0
        %2365 = vmatpush2.bf16.msra.mxu0 %v2287
        %2366 = vmatprep.subr.bf16.mxu0 0
        %2367 = vmatpush2.bf16.msra.mxu0 %v2286
        %2368 = vmatprep.subr.bf16.mxu0 0
        %2369 = vmatpush2.bf16.msra.mxu0 %v2285
        %2370 = vmatprep.subr.bf16.mxu0 0
        %2371 = vmatpush2.bf16.msra.mxu0 %v2284
        %2372 = vmatprep.mubr.bf16.mxu0 %v2081
        %2373 = vmatmul.mubr.bf16.gmra.mxu0 %v2080
        %v2374 = vpop.f32.mrf.mxu0
        %v2375 = vadd.f32 0.0, %v2374
        %v2376 = vpop.f32.mrf.mxu0
        %v2377 = vpop.f32.mrf.mxu0
        %v2378 = vpop.f32.mrf.mxu0
        %2379 = vdwg.mxu0
        %2380 = vmatprep.subr.bf16.mxu0 0
        %2381 = vmatpush1.bf16.msra.mxu0 %v2299
        %2382 = vmatprep.subr.bf16.mxu0 0
        %2383 = vmatpush1.bf16.msra.mxu0 %v2298
        %2384 = vmatprep.subr.bf16.mxu0 0
        %2385 = vmatpush1.bf16.msra.mxu0 %v2297
        %2386 = vmatprep.subr.bf16.mxu0 0
        %2387 = vmatpush1.bf16.msra.mxu0 %v2296
        %2388 = vmatprep.subr.bf16.mxu0 0
        %2389 = vmatpush1.bf16.msra.mxu0 %v2295
        %2390 = vmatprep.subr.bf16.mxu0 0
        %2391 = vmatpush1.bf16.msra.mxu0 %v2294
        %2392 = vmatprep.subr.bf16.mxu0 0
        %2393 = vmatpush1.bf16.msra.mxu0 %v2293
        %2394 = vmatprep.subr.bf16.mxu0 0
        %2395 = vmatpush1.bf16.msra.mxu0 %v2292
        %2396 = vmatprep.subr.bf16.mxu0 0
        %2397 = vmatpush2.bf16.msra.mxu0 %v2307
        %2398 = vmatprep.subr.bf16.mxu0 0
        %2399 = vmatpush2.bf16.msra.mxu0 %v2306
        %2400 = vmatprep.subr.bf16.mxu0 0
        %2401 = vmatpush2.bf16.msra.mxu0 %v2305
        %2402 = vmatprep.subr.bf16.mxu0 0
        %2403 = vmatpush2.bf16.msra.mxu0 %v2304
        %2404 = vmatprep.subr.bf16.mxu0 0
        %2405 = vmatpush2.bf16.msra.mxu0 %v2303
        %2406 = vmatprep.subr.bf16.mxu0 0
        %2407 = vmatpush2.bf16.msra.mxu0 %v2302
        %2408 = vmatprep.subr.bf16.mxu0 0
        %2409 = vmatpush2.bf16.msra.mxu0 %v2301
        %2410 = vmatprep.subr.bf16.mxu0 0
        %2411 = vmatpush2.bf16.msra.mxu0 %v2300
        %2412 = vmatprep.mubr.bf16.mxu0 %v2083
        %2413 = vmatmul.mubr.bf16.gmra.mxu0 %v2082
        %v2414 = vpop.f32.mrf.mxu0
        %v2415 = vadd.f32 %v2375, %v2414
        %v2416 = vpop.f32.mrf.mxu0
        %v2417 = vpop.f32.mrf.mxu0
        %v2418 = vpop.f32.mrf.mxu0
        %2419 = vdwg.mxu0
        %v2420 = vadd.f32 %v1747, %v2415
        %s2421 = scalar_lea.vmem %s1, 1
        %v2422 = vld [vmem:[%s2421] sm:$0x1]
        %v2423 = vsel %vm570, %v2420, 0.0
        %2424 = vadd.xlane.f32.xlu0 %v2423
        %v2425 = vpop.xlane.xlu0 %2424
        %v2426 = vmul.f32 %v2425, %v574
        %v2427 = vsub.f32 %v2420, %v2426
        %v2428 = vmul.f32 %v2427, %v2427
        %v2429 = vsel %vm570, %v2428, 0.0
        %2430 = vadd.xlane.f32.xlu0 %v2429
        %v2431 = vpop.xlane.xlu0 %2430
        %v2432 = vmul.f32 %v2431, %v574
        %v2433 = vadd.f32 %v2432, 1e-05
        %v2434 = vrsqrt.pop %v2433
        %v2435 = vmul.f32 %v2427, %v2434
        %v2437 = vlaneseq
        %v2438 = vshrl.u32 %v2437, 7
        %v2439 = vsub.s32 0, %v2438
        %v2440 = vrot.slane %v2422, %v2439
        %v2442 = vmul.f32 %v2435, %v2440
        %v2443 = vpack.c.bf16 %v2442, %v2442
        %s2444 = scalar_lea.vmem %s2, 128
        %v2445 = vld [vmem:[%s2444] sm:$0xff]
        %v2446 = vld [vmem:[%s2444 + $0x8] sm:$0xff]
        %v2447 = vld [vmem:[%s2444 + $0x10] sm:$0xff]
        %v2448 = vld [vmem:[%s2444 + $0x18] sm:$0xff]
        %v2449 = vld [vmem:[%s2444 + $0x20] sm:$0xff]
        %v2450 = vld [vmem:[%s2444 + $0x28] sm:$0xff]
        %v2451 = vld [vmem:[%s2444 + $0x30] sm:$0xff]
        %v2452 = vld [vmem:[%s2444 + $0x38] sm:$0xff]
        %v2453 = vld [vmem:[%s2444 + $0x40] sm:$0xff]
        %v2454 = vld [vmem:[%s2444 + $0x48] sm:$0xff]
        %v2455 = vld [vmem:[%s2444 + $0x50] sm:$0xff]
        %v2456 = vld [vmem:[%s2444 + $0x58] sm:$0xff]
        %v2457 = vld [vmem:[%s2444 + $0x60] sm:$0xff]
        %v2458 = vld [vmem:[%s2444 + $0x68] sm:$0xff]
        %v2459 = vld [vmem:[%s2444 + $0x70] sm:$0xff]
        %v2460 = vld [vmem:[%s2444 + $0x78] sm:$0xff]
        %v2477 = vunpack.c.l.b16 %v2445
        %v2478 = vunpack.c.h.b16 %v2445
        %v2479 = vunpack.c.l.b16 %v2446
        %v2480 = vunpack.c.h.b16 %v2446
        %v2481 = vunpack.c.l.b16 %v2447
        %v2482 = vunpack.c.h.b16 %v2447
        %v2483 = vunpack.c.l.b16 %v2448
        %v2484 = vunpack.c.h.b16 %v2448
        %v2485 = vunpack.c.l.b16 %v2449
        %v2486 = vunpack.c.h.b16 %v2449
        %v2487 = vunpack.c.l.b16 %v2450
        %v2488 = vunpack.c.h.b16 %v2450
        %v2489 = vunpack.c.l.b16 %v2451
        %v2490 = vunpack.c.h.b16 %v2451
        %v2491 = vunpack.c.l.b16 %v2452
        %v2492 = vunpack.c.h.b16 %v2452
        %v2493 = vunpack.c.l.b16 %v2453
        %v2494 = vunpack.c.h.b16 %v2453
        %v2495 = vunpack.c.l.b16 %v2454
        %v2496 = vunpack.c.h.b16 %v2454
        %v2497 = vunpack.c.l.b16 %v2455
        %v2498 = vunpack.c.h.b16 %v2455
        %v2499 = vunpack.c.l.b16 %v2456
        %v2500 = vunpack.c.h.b16 %v2456
        %v2501 = vunpack.c.l.b16 %v2457
        %v2502 = vunpack.c.h.b16 %v2457
        %v2503 = vunpack.c.l.b16 %v2458
        %v2504 = vunpack.c.h.b16 %v2458
        %v2505 = vunpack.c.l.b16 %v2459
        %v2506 = vunpack.c.h.b16 %v2459
        %v2507 = vunpack.c.l.b16 %v2460
        %v2508 = vunpack.c.h.b16 %v2460
        %v2509 = vpack.c.b16 %v2479, %v2477
        %v2510 = vpack.c.b16 %v2480, %v2478
        %v2511 = vpack.c.b16 %v2483, %v2481
        %v2512 = vpack.c.b16 %v2484, %v2482
        %v2513 = vpack.c.b16 %v2487, %v2485
        %v2514 = vpack.c.b16 %v2488, %v2486
        %v2515 = vpack.c.b16 %v2491, %v2489
        %v2516 = vpack.c.b16 %v2492, %v2490
        %v2517 = vpack.c.b16 %v2495, %v2493
        %v2518 = vpack.c.b16 %v2496, %v2494
        %v2519 = vpack.c.b16 %v2499, %v2497
        %v2520 = vpack.c.b16 %v2500, %v2498
        %v2521 = vpack.c.b16 %v2503, %v2501
        %v2522 = vpack.c.b16 %v2504, %v2502
        %v2523 = vpack.c.b16 %v2507, %v2505
        %v2524 = vpack.c.b16 %v2508, %v2506
        %2541 = vmatprep.subr.bf16.mxu0 %v2524
        %2542 = vmatpush1.bf16.msra.mxu0 %v2523
        %2543 = vmatprep.subr.bf16.mxu0 %v2522
        %2544 = vmatpush1.bf16.msra.mxu0 %v2521
        %2545 = vmatprep.subr.bf16.mxu0 %v2520
        %2546 = vmatpush1.bf16.msra.mxu0 %v2519
        %2547 = vmatprep.subr.bf16.mxu0 %v2518
        %2548 = vmatpush1.bf16.msra.mxu0 %v2517
        %2549 = vmatprep.subr.bf16.mxu0 %v2516
        %2550 = vmatpush1.bf16.msra.mxu0 %v2515
        %2551 = vmatprep.subr.bf16.mxu0 %v2514
        %2552 = vmatpush1.bf16.msra.mxu0 %v2513
        %2553 = vmatprep.subr.bf16.mxu0 %v2512
        %2554 = vmatpush1.bf16.msra.mxu0 %v2511
        %2555 = vmatprep.subr.bf16.mxu0 %v2510
        %2556 = vmatpush1.bf16.msra.mxu0 %v2509
        %2557 = vmatprep.subr.bf16.mxu0 0
        %2558 = vmatpush2.bf16.msra.mxu0 0
        %2559 = vmatprep.subr.bf16.mxu0 0
        %2560 = vmatpush2.bf16.msra.mxu0 0
        %2561 = vmatprep.subr.bf16.mxu0 0
        %2562 = vmatpush2.bf16.msra.mxu0 0
        %2563 = vmatprep.subr.bf16.mxu0 0
        %2564 = vmatpush2.bf16.msra.mxu0 0
        %2565 = vmatprep.subr.bf16.mxu0 0
        %2566 = vmatpush2.bf16.msra.mxu0 0
        %2567 = vmatprep.subr.bf16.mxu0 0
        %2568 = vmatpush2.bf16.msra.mxu0 0
        %2569 = vmatprep.subr.bf16.mxu0 0
        %2570 = vmatpush2.bf16.msra.mxu0 0
        %2571 = vmatprep.subr.bf16.mxu0 0
        %2572 = vmatpush2.bf16.msra.mxu0 0
        %2573 = vmatprep.mubr.bf16.mxu0 0
        %2574 = vmatmul.mubr.bf16.gmra.mxu0 %v2443
        %v2575 = vpop.f32.mrf.mxu0
        %v2576 = vadd.f32 0.0, %v2575
        %v2577 = vpop.f32.mrf.mxu0
        %v2578 = vadd.f32 0.0, %v2577
        %v2579 = vpop.f32.mrf.mxu0
        %v2580 = vpop.f32.mrf.mxu0
        %2581 = vdwg.mxu0
        %s2582 = scalar_lea.vmem %s4, 4
        %v2583 = vld [vmem:[%s2582] sm:$0xf]
        %s2584 = scalar_lea.vmem %s5, 2
        %v2585 = vld [vmem:[%s2584] sm:$0x3]
        %v2586 = vmul.f32 %v2578, %v2578
        %v2587 = vsel %vm733, %v2586, 0.0
        %2588 = vadd.xlane.f32.xlu0 %v2587
        %v2589 = vpop.xlane.xlu0 %2588
        %v2590 = vadd.f32 %v2589, 1e-12
        %v2591 = vrsqrt.pop %v2590
        %v2592 = vmul.f32 %v2578, %v2591
        %v2593 = vlaneseq
        %v2594 = vshrl.u32 %v2593, 7
        %v2595 = vsub.s32 0, %v2594
        %v2596 = vrot.slane %v2585, %v2595
        %v2597 = vmul.f32 %v2592, %v2596
        %v2598 = vsub.f32 0.0, %v2597
        %2600 = vrot.lane.b32.xlu0 %v2598, 112
        %v2601 = vpop.permute.xlu0 %2600
        %2604 = vrot.lane.b32.xlu0 %v2597, 16
        %v2605 = vpop.permute.xlu0 %2604
        %v2607 = vsel %vm754, %v2601, %v2605
        %v2608 = vmul.f32 %v2597, %v565
        %v2609 = vmul.f32 %v2607, %v566
        %v2610 = vadd.f32 %v2608, %v2609
        %v2611 = vmul.f32 %v2610, %v568
        %2613 = vrot.lane.b32.xlu0 %v2586, 96
        %v2614 = vpop.permute.xlu0 %2613
        %v2616 = vsel %vm733, %v2614, 0.0
        %2617 = vadd.xlane.f32.xlu0 %v2616
        %v2618 = vpop.xlane.xlu0 %2617
        %v2619 = vadd.f32 %v2618, 1e-12
        %v2620 = vrsqrt.pop %v2619
        %v2621 = vmul.f32 %v2578, %v2620
        %v2622 = vlaneseq
        %v2623 = vshrl.u32 %v2622, 7
        %v2624 = vsub.s32 1, %v2623
        %v2625 = vrot.slane %v2585, %v2624
        %2627 = vrot.lane.b32.xlu0 %v2625, 32
        %v2628 = vpop.permute.xlu0 %2627
        %v2630 = vmul.f32 %v2621, %v2628
        %v2631 = vsub.f32 0.0, %v2630
        %2633 = vrot.lane.b32.xlu0 %v2631, 80
        %v2634 = vpop.permute.xlu0 %2633
        %2637 = vrot.lane.b32.xlu0 %v2630, 112
        %v2638 = vpop.permute.xlu0 %2637
        %v2640 = vsel %vm754, %v2634, %v2638
        %v2641 = vmul.f32 %v2630, %v791
        %v2642 = vmul.f32 %v2640, %v566
        %2644 = vrot.lane.b32.xlu0 %v2642, 32
        %v2645 = vpop.permute.xlu0 %2644
        %v2647 = vadd.f32 %v2641, %v2645
        %v2648 = vmul.f32 %v2647, %v802
        %v2649 = vmul.f32 %v2576, %v2576
        %v2650 = vsel %vm733, %v2649, 0.0
        %2651 = vadd.xlane.f32.xlu0 %v2650
        %v2652 = vpop.xlane.xlu0 %2651
        %v2653 = vadd.f32 %v2652, 1e-12
        %v2654 = vrsqrt.pop %v2653
        %v2655 = vmul.f32 %v2576, %v2654
        %v2656 = vlaneseq
        %v2657 = vshrl.u32 %v2656, 7
        %v2658 = vsub.s32 0, %v2657
        %v2659 = vrot.slane %v2583, %v2658
        %v2660 = vmul.f32 %v2655, %v2659
        %v2661 = vsub.f32 0.0, %v2660
        %2663 = vrot.lane.b32.xlu0 %v2661, 112
        %v2664 = vpop.permute.xlu0 %2663
        %2667 = vrot.lane.b32.xlu0 %v2660, 16
        %v2668 = vpop.permute.xlu0 %2667
        %v2670 = vsel %vm754, %v2664, %v2668
        %v2671 = vmul.f32 %v2660, %v565
        %v2672 = vmul.f32 %v2670, %v566
        %v2673 = vadd.f32 %v2671, %v2672
        %v2674 = vmul.f32 %v2673, %v567
        %v2676 = vsel %vm831, %v2674, 0
        %v2679 = vsel %vm831, %v2611, 0
        %2681 = vmatprep.subr.mxu0 0.0
        %2682 = vmatpush1.xpose.msra.mxu0 0.0
        %2683 = vmatprep.subr.mxu0 0.0
        %2684 = vmatpush1.xpose.msra.mxu0 0.0
        %2685 = vmatprep.subr.mxu0 0.0
        %2686 = vmatpush1.xpose.msra.mxu0 0.0
        %2687 = vmatprep.subr.mxu0 0.0
        %2688 = vmatpush1.xpose.msra.mxu0 0.0
        %2689 = vmatprep.subr.mxu0 0.0
        %2690 = vmatpush1.xpose.msra.mxu0 0.0
        %2691 = vmatprep.subr.mxu0 0.0
        %2692 = vmatpush1.xpose.msra.mxu0 0.0
        %2693 = vmatprep.subr.mxu0 0.0
        %2694 = vmatpush1.xpose.msra.mxu0 0.0
        %2695 = vmatprep.subr.mxu0 0.0
        %2696 = vmatpush1.xpose.msra.mxu0 0.0
        %2697 = vmatprep.subr.mxu0 0.0
        %2698 = vmatpush1.xpose.msra.mxu0 0.0
        %2699 = vmatprep.subr.mxu0 0.0
        %2700 = vmatpush1.xpose.msra.mxu0 0.0
        %2701 = vmatprep.subr.mxu0 0.0
        %2702 = vmatpush1.xpose.msra.mxu0 0.0
        %2703 = vmatprep.subr.mxu0 0.0
        %2704 = vmatpush1.xpose.msra.mxu0 0.0
        %2705 = vmatprep.subr.mxu0 0.0
        %2706 = vmatpush1.xpose.msra.mxu0 0.0
        %2707 = vmatprep.subr.mxu0 0.0
        %2708 = vmatpush1.xpose.msra.mxu0 0.0
        %2709 = vmatprep.subr.mxu0 0.0
        %2710 = vmatpush1.xpose.msra.mxu0 0.0
        %2711 = vmatprep.subr.mxu0 0.0
        %2712 = vmatpush1.xpose.msra.mxu0 %v2679
        %2713 = vmatprep.subr.mxu0 0.0
        %2714 = vmatpush2.xpose.msra.mxu0 0.0
        %2715 = vmatprep.subr.mxu0 0.0
        %2716 = vmatpush2.xpose.msra.mxu0 0.0
        %2717 = vmatprep.subr.mxu0 0.0
        %2718 = vmatpush2.xpose.msra.mxu0 0.0
        %2719 = vmatprep.subr.mxu0 0.0
        %2720 = vmatpush2.xpose.msra.mxu0 0.0
        %2721 = vmatprep.subr.mxu0 0.0
        %2722 = vmatpush2.xpose.msra.mxu0 0.0
        %2723 = vmatprep.subr.mxu0 0.0
        %2724 = vmatpush2.xpose.msra.mxu0 0.0
        %2725 = vmatprep.subr.mxu0 0.0
        %2726 = vmatpush2.xpose.msra.mxu0 0.0
        %2727 = vmatprep.subr.mxu0 0.0
        %2728 = vmatpush2.xpose.msra.mxu0 0.0
        %2729 = vmatprep.subr.mxu0 0.0
        %2730 = vmatpush2.xpose.msra.mxu0 0.0
        %2731 = vmatprep.subr.mxu0 0.0
        %2732 = vmatpush2.xpose.msra.mxu0 0.0
        %2733 = vmatprep.subr.mxu0 0.0
        %2734 = vmatpush2.xpose.msra.mxu0 0.0
        %2735 = vmatprep.subr.mxu0 0.0
        %2736 = vmatpush2.xpose.msra.mxu0 0.0
        %2737 = vmatprep.subr.mxu0 0.0
        %2738 = vmatpush2.xpose.msra.mxu0 0.0
        %2739 = vmatprep.subr.mxu0 0.0
        %2740 = vmatpush2.xpose.msra.mxu0 0.0
        %2741 = vmatprep.subr.mxu0 0.0
        %2742 = vmatpush2.xpose.msra.mxu0 0.0
        %2743 = vmatprep.subr.mxu0 0.0
        %2744 = vmatpush2.xpose.msra.mxu0 0.0
        %2745 = vmatprep.mubr.f32.mxu0 0.0
        %2746 = vmatmul.mubr.f32.gmra.mxu0 %v2676
        %v2747 = vpop.f32.mrf.mxu0
        %v2748 = vadd.f32 0.0, %v2747
        %v2749 = vpop.f32.mrf.mxu0
        %2750 = vdwg.mxu0
        %v2751 = vmul.f32 %v2748, 10.0
        %v2752 = vadd.f32 %v2751, %v909
        %v2753 = vsel %vm911, %v2752, -inf
        %2754 = vmax.xlane.f32.xlu0 %v2753
        %v2755 = vpop.xlane.xlu0 %2754
        %v2756 = vsub.f32 %v2752, %v2755
        %v2757 = vmul.f32 %v2756, 1.442695
        %v2758 = vpow.pop %v2757
        %v2759 = vsel %vm911, %v2758, 0.0
        %2760 = vadd.xlane.f32.xlu0 %v2759
        %v2761 = vpop.xlane.xlu0 %2760
        %v2762 = vrcp.pop %v2761
        %v2763 = vmul.f32 %v2758, %v2762
        %2765 = vrot.lane.b32.xlu0 %v2578, 64
        %v2766 = vpop.permute.xlu0 %2765
        %v2768 = vsel %vm926, %v2763, 0
        %v2770 = vsel %vm570, %v2766, 0
        %2772 = vmatprep.subr.mxu0 0.0
        %2773 = vmatpush1.msra.mxu0 0.0
        %2774 = vmatprep.subr.mxu0 0.0
        %2775 = vmatpush1.msra.mxu0 0.0
        %2776 = vmatprep.subr.mxu0 0.0
        %2777 = vmatpush1.msra.mxu0 0.0
        %2778 = vmatprep.subr.mxu0 0.0
        %2779 = vmatpush1.msra.mxu0 0.0
        %2780 = vmatprep.subr.mxu0 0.0
        %2781 = vmatpush1.msra.mxu0 0.0
        %2782 = vmatprep.subr.mxu0 0.0
        %2783 = vmatpush1.msra.mxu0 0.0
        %2784 = vmatprep.subr.mxu0 0.0
        %2785 = vmatpush1.msra.mxu0 0.0
        %2786 = vmatprep.subr.mxu0 0.0
        %2787 = vmatpush1.msra.mxu0 0.0
        %2788 = vmatprep.subr.mxu0 0.0
        %2789 = vmatpush1.msra.mxu0 0.0
        %2790 = vmatprep.subr.mxu0 0.0
        %2791 = vmatpush1.msra.mxu0 0.0
        %2792 = vmatprep.subr.mxu0 0.0
        %2793 = vmatpush1.msra.mxu0 0.0
        %2794 = vmatprep.subr.mxu0 0.0
        %2795 = vmatpush1.msra.mxu0 0.0
        %2796 = vmatprep.subr.mxu0 0.0
        %2797 = vmatpush1.msra.mxu0 0.0
        %2798 = vmatprep.subr.mxu0 0.0
        %2799 = vmatpush1.msra.mxu0 0.0
        %2800 = vmatprep.subr.mxu0 0.0
        %2801 = vmatpush1.msra.mxu0 0.0
        %2802 = vmatprep.subr.mxu0 0.0
        %2803 = vmatpush1.msra.mxu0 %v2770
        %2804 = vmatprep.subr.mxu0 0.0
        %2805 = vmatpush2.msra.mxu0 0.0
        %2806 = vmatprep.subr.mxu0 0.0
        %2807 = vmatpush2.msra.mxu0 0.0
        %2808 = vmatprep.subr.mxu0 0.0
        %2809 = vmatpush2.msra.mxu0 0.0
        %2810 = vmatprep.subr.mxu0 0.0
        %2811 = vmatpush2.msra.mxu0 0.0
        %2812 = vmatprep.subr.mxu0 0.0
        %2813 = vmatpush2.msra.mxu0 0.0
        %2814 = vmatprep.subr.mxu0 0.0
        %2815 = vmatpush2.msra.mxu0 0.0
        %2816 = vmatprep.subr.mxu0 0.0
        %2817 = vmatpush2.msra.mxu0 0.0
        %2818 = vmatprep.subr.mxu0 0.0
        %2819 = vmatpush2.msra.mxu0 0.0
        %2820 = vmatprep.subr.mxu0 0.0
        %2821 = vmatpush2.msra.mxu0 0.0
        %2822 = vmatprep.subr.mxu0 0.0
        %2823 = vmatpush2.msra.mxu0 0.0
        %2824 = vmatprep.subr.mxu0 0.0
        %2825 = vmatpush2.msra.mxu0 0.0
        %2826 = vmatprep.subr.mxu0 0.0
        %2827 = vmatpush2.msra.mxu0 0.0
        %2828 = vmatprep.subr.mxu0 0.0
        %2829 = vmatpush2.msra.mxu0 0.0
        %2830 = vmatprep.subr.mxu0 0.0
        %2831 = vmatpush2.msra.mxu0 0.0
        %2832 = vmatprep.subr.mxu0 0.0
        %2833 = vmatpush2.msra.mxu0 0.0
        %2834 = vmatprep.subr.mxu0 0.0
        %2835 = vmatpush2.msra.mxu0 0.0
        %2836 = vmatprep.mubr.f32.mxu0 0.0
        %2837 = vmatmul.mubr.f32.gmra.mxu0 %v2768
        %v2838 = vpop.f32.mrf.mxu0
        %v2839 = vadd.f32 0.0, %v2838
        %v2840 = vpop.f32.mrf.mxu0
        %2841 = vdwg.mxu0
        %2843 = vrot.lane.b32.xlu0 %v2649, 96
        %v2844 = vpop.permute.xlu0 %2843
        %v2846 = vsel %vm733, %v2844, 0.0
        %2847 = vadd.xlane.f32.xlu0 %v2846
        %v2848 = vpop.xlane.xlu0 %2847
        %v2849 = vadd.f32 %v2848, 1e-12
        %v2850 = vrsqrt.pop %v2849
        %v2851 = vmul.f32 %v2576, %v2850
        %v2852 = vlaneseq
        %v2853 = vshrl.u32 %v2852, 7
        %v2854 = vsub.s32 1, %v2853
        %v2855 = vrot.slane %v2583, %v2854
        %2857 = vrot.lane.b32.xlu0 %v2855, 32
        %v2858 = vpop.permute.xlu0 %2857
        %v2860 = vmul.f32 %v2851, %v2858
        %v2861 = vsub.f32 0.0, %v2860
        %2863 = vrot.lane.b32.xlu0 %v2861, 80
        %v2864 = vpop.permute.xlu0 %2863
        %2867 = vrot.lane.b32.xlu0 %v2860, 112
        %v2868 = vpop.permute.xlu0 %2867
        %v2870 = vsel %vm754, %v2864, %v2868
        %v2871 = vmul.f32 %v2860, %v791
        %v2872 = vmul.f32 %v2870, %v566
        %2874 = vrot.lane.b32.xlu0 %v2872, 32
        %v2875 = vpop.permute.xlu0 %2874
        %v2877 = vadd.f32 %v2871, %v2875
        %v2878 = vmul.f32 %v2877, %v1040
        %2880 = vrot.lane.b32.xlu0 %v2878, 96
        %v2881 = vpop.permute.xlu0 %2880
        %v2882 = vsel %vm831, %v2881, 0
        %2884 = vmatprep.subr.mxu0 0.0
        %2885 = vmatpush1.xpose.msra.mxu0 0.0
        %2886 = vmatprep.subr.mxu0 0.0
        %2887 = vmatpush1.xpose.msra.mxu0 0.0
        %2888 = vmatprep.subr.mxu0 0.0
        %2889 = vmatpush1.xpose.msra.mxu0 0.0
        %2890 = vmatprep.subr.mxu0 0.0
        %2891 = vmatpush1.xpose.msra.mxu0 0.0
        %2892 = vmatprep.subr.mxu0 0.0
        %2893 = vmatpush1.xpose.msra.mxu0 0.0
        %2894 = vmatprep.subr.mxu0 0.0
        %2895 = vmatpush1.xpose.msra.mxu0 0.0
        %2896 = vmatprep.subr.mxu0 0.0
        %2897 = vmatpush1.xpose.msra.mxu0 0.0
        %2898 = vmatprep.subr.mxu0 0.0
        %2899 = vmatpush1.xpose.msra.mxu0 0.0
        %2900 = vmatprep.subr.mxu0 0.0
        %2901 = vmatpush1.xpose.msra.mxu0 0.0
        %2902 = vmatprep.subr.mxu0 0.0
        %2903 = vmatpush1.xpose.msra.mxu0 0.0
        %2904 = vmatprep.subr.mxu0 0.0
        %2905 = vmatpush1.xpose.msra.mxu0 0.0
        %2906 = vmatprep.subr.mxu0 0.0
        %2907 = vmatpush1.xpose.msra.mxu0 0.0
        %2908 = vmatprep.subr.mxu0 0.0
        %2909 = vmatpush1.xpose.msra.mxu0 0.0
        %2910 = vmatprep.subr.mxu0 0.0
        %2911 = vmatpush1.xpose.msra.mxu0 0.0
        %2912 = vmatprep.subr.mxu0 0.0
        %2913 = vmatpush1.xpose.msra.mxu0 0.0
        %2914 = vmatprep.subr.mxu0 0.0
        %2915 = vmatpush1.xpose.msra.mxu0 %v2679
        %2916 = vmatprep.subr.mxu0 0.0
        %2917 = vmatpush2.xpose.msra.mxu0 0.0
        %2918 = vmatprep.subr.mxu0 0.0
        %2919 = vmatpush2.xpose.msra.mxu0 0.0
        %2920 = vmatprep.subr.mxu0 0.0
        %2921 = vmatpush2.xpose.msra.mxu0 0.0
        %2922 = vmatprep.subr.mxu0 0.0
        %2923 = vmatpush2.xpose.msra.mxu0 0.0
        %2924 = vmatprep.subr.mxu0 0.0
        %2925 = vmatpush2.xpose.msra.mxu0 0.0
        %2926 = vmatprep.subr.mxu0 0.0
        %2927 = vmatpush2.xpose.msra.mxu0 0.0
        %2928 = vmatprep.subr.mxu0 0.0
        %2929 = vmatpush2.xpose.msra.mxu0 0.0
        %2930 = vmatprep.subr.mxu0 0.0
        %2931 = vmatpush2.xpose.msra.mxu0 0.0
        %2932 = vmatprep.subr.mxu0 0.0
        %2933 = vmatpush2.xpose.msra.mxu0 0.0
        %2934 = vmatprep.subr.mxu0 0.0
        %2935 = vmatpush2.xpose.msra.mxu0 0.0
        %2936 = vmatprep.subr.mxu0 0.0
        %2937 = vmatpush2.xpose.msra.mxu0 0.0
        %2938 = vmatprep.subr.mxu0 0.0
        %2939 = vmatpush2.xpose.msra.mxu0 0.0
        %2940 = vmatprep.subr.mxu0 0.0
        %2941 = vmatpush2.xpose.msra.mxu0 0.0
        %2942 = vmatprep.subr.mxu0 0.0
        %2943 = vmatpush2.xpose.msra.mxu0 0.0
        %2944 = vmatprep.subr.mxu0 0.0
        %2945 = vmatpush2.xpose.msra.mxu0 0.0
        %2946 = vmatprep.subr.mxu0 0.0
        %2947 = vmatpush2.xpose.msra.mxu0 0.0
        %2948 = vmatprep.mubr.f32.mxu0 0.0
        %2949 = vmatmul.mubr.f32.gmra.mxu0 %v2882
        %v2950 = vpop.f32.mrf.mxu0
        %v2951 = vadd.f32 0.0, %v2950
        %v2952 = vpop.f32.mrf.mxu0
        %2953 = vdwg.mxu0
        %v2954 = vmul.f32 %v2951, 10.0
        %v2955 = vadd.f32 %v2954, %v1120
        %v2956 = vsel %vm911, %v2955, -inf
        %2957 = vmax.xlane.f32.xlu0 %v2956
        %v2958 = vpop.xlane.xlu0 %2957
        %v2959 = vsub.f32 %v2955, %v2958
        %v2960 = vmul.f32 %v2959, 1.442695
        %v2961 = vpow.pop %v2960
        %v2962 = vsel %vm911, %v2961, 0.0
        %2963 = vadd.xlane.f32.xlu0 %v2962
        %v2964 = vpop.xlane.xlu0 %2963
        %v2965 = vrcp.pop %v2964
        %v2966 = vmul.f32 %v2961, %v2965
        %v2968 = vsel %vm926, %v2966, 0
        %2970 = vmatprep.subr.mxu0 0.0
        %2971 = vmatpush1.msra.mxu0 0.0
        %2972 = vmatprep.subr.mxu0 0.0
        %2973 = vmatpush1.msra.mxu0 0.0
        %2974 = vmatprep.subr.mxu0 0.0
        %2975 = vmatpush1.msra.mxu0 0.0
        %2976 = vmatprep.subr.mxu0 0.0
        %2977 = vmatpush1.msra.mxu0 0.0
        %2978 = vmatprep.subr.mxu0 0.0
        %2979 = vmatpush1.msra.mxu0 0.0
        %2980 = vmatprep.subr.mxu0 0.0
        %2981 = vmatpush1.msra.mxu0 0.0
        %2982 = vmatprep.subr.mxu0 0.0
        %2983 = vmatpush1.msra.mxu0 0.0
        %2984 = vmatprep.subr.mxu0 0.0
        %2985 = vmatpush1.msra.mxu0 0.0
        %2986 = vmatprep.subr.mxu0 0.0
        %2987 = vmatpush1.msra.mxu0 0.0
        %2988 = vmatprep.subr.mxu0 0.0
        %2989 = vmatpush1.msra.mxu0 0.0
        %2990 = vmatprep.subr.mxu0 0.0
        %2991 = vmatpush1.msra.mxu0 0.0
        %2992 = vmatprep.subr.mxu0 0.0
        %2993 = vmatpush1.msra.mxu0 0.0
        %2994 = vmatprep.subr.mxu0 0.0
        %2995 = vmatpush1.msra.mxu0 0.0
        %2996 = vmatprep.subr.mxu0 0.0
        %2997 = vmatpush1.msra.mxu0 0.0
        %2998 = vmatprep.subr.mxu0 0.0
        %2999 = vmatpush1.msra.mxu0 0.0
        %3000 = vmatprep.subr.mxu0 0.0
        %3001 = vmatpush1.msra.mxu0 %v2770
        %3002 = vmatprep.subr.mxu0 0.0
        %3003 = vmatpush2.msra.mxu0 0.0
        %3004 = vmatprep.subr.mxu0 0.0
        %3005 = vmatpush2.msra.mxu0 0.0
        %3006 = vmatprep.subr.mxu0 0.0
        %3007 = vmatpush2.msra.mxu0 0.0
        %3008 = vmatprep.subr.mxu0 0.0
        %3009 = vmatpush2.msra.mxu0 0.0
        %3010 = vmatprep.subr.mxu0 0.0
        %3011 = vmatpush2.msra.mxu0 0.0
        %3012 = vmatprep.subr.mxu0 0.0
        %3013 = vmatpush2.msra.mxu0 0.0
        %3014 = vmatprep.subr.mxu0 0.0
        %3015 = vmatpush2.msra.mxu0 0.0
        %3016 = vmatprep.subr.mxu0 0.0
        %3017 = vmatpush2.msra.mxu0 0.0
        %3018 = vmatprep.subr.mxu0 0.0
        %3019 = vmatpush2.msra.mxu0 0.0
        %3020 = vmatprep.subr.mxu0 0.0
        %3021 = vmatpush2.msra.mxu0 0.0
        %3022 = vmatprep.subr.mxu0 0.0
        %3023 = vmatpush2.msra.mxu0 0.0
        %3024 = vmatprep.subr.mxu0 0.0
        %3025 = vmatpush2.msra.mxu0 0.0
        %3026 = vmatprep.subr.mxu0 0.0
        %3027 = vmatpush2.msra.mxu0 0.0
        %3028 = vmatprep.subr.mxu0 0.0
        %3029 = vmatpush2.msra.mxu0 0.0
        %3030 = vmatprep.subr.mxu0 0.0
        %3031 = vmatpush2.msra.mxu0 0.0
        %3032 = vmatprep.subr.mxu0 0.0
        %3033 = vmatpush2.msra.mxu0 0.0
        %3034 = vmatprep.mubr.f32.mxu0 0.0
        %3035 = vmatmul.mubr.f32.gmra.mxu0 %v2968
        %v3036 = vpop.f32.mrf.mxu0
        %v3037 = vadd.f32 0.0, %v3036
        %v3038 = vpop.f32.mrf.mxu0
        %3039 = vdwg.mxu0
        %3040 = vrot.lane.b32.xlu0 %v2649, 64
        %v3041 = vpop.permute.xlu0 %3040
        %v3043 = vsel %vm733, %v3041, 0.0
        %3044 = vadd.xlane.f32.xlu0 %v3043
        %v3045 = vpop.xlane.xlu0 %3044
        %v3046 = vadd.f32 %v3045, 1e-12
        %v3047 = vrsqrt.pop %v3046
        %v3048 = vmul.f32 %v2576, %v3047
        %v3049 = vlaneseq
        %v3050 = vshrl.u32 %v3049, 7
        %v3051 = vsub.s32 2, %v3050
        %v3052 = vrot.slane %v2583, %v3051
        %3054 = vrot.lane.b32.xlu0 %v3052, 64
        %v3055 = vpop.permute.xlu0 %3054
        %v3057 = vmul.f32 %v3048, %v3055
        %v3058 = vsub.f32 0.0, %v3057
        %3060 = vrot.lane.b32.xlu0 %v3058, 48
        %v3061 = vpop.permute.xlu0 %3060
        %3064 = vrot.lane.b32.xlu0 %v3057, 80
        %v3065 = vpop.permute.xlu0 %3064
        %v3067 = vsel %vm754, %v3061, %v3065
        %v3068 = vmul.f32 %v3057, %v1235
        %v3069 = vmul.f32 %v3067, %v566
        %3071 = vrot.lane.b32.xlu0 %v3069, 64
        %v3072 = vpop.permute.xlu0 %3071
        %v3074 = vadd.f32 %v3068, %v3072
        %v3075 = vmul.f32 %v3074, %v1245
        %3077 = vrot.lane.b32.xlu0 %v3075, 64
        %v3078 = vpop.permute.xlu0 %3077
        %3080 = vrot.lane.b32.xlu0 %v2648, 96
        %v3081 = vpop.permute.xlu0 %3080
        %v3082 = vsel %vm831, %v3078, 0
        %v3084 = vsel %vm831, %v3081, 0
        %3086 = vmatprep.subr.mxu0 0.0
        %3087 = vmatpush1.xpose.msra.mxu0 0.0
        %3088 = vmatprep.subr.mxu0 0.0
        %3089 = vmatpush1.xpose.msra.mxu0 0.0
        %3090 = vmatprep.subr.mxu0 0.0
        %3091 = vmatpush1.xpose.msra.mxu0 0.0
        %3092 = vmatprep.subr.mxu0 0.0
        %3093 = vmatpush1.xpose.msra.mxu0 0.0
        %3094 = vmatprep.subr.mxu0 0.0
        %3095 = vmatpush1.xpose.msra.mxu0 0.0
        %3096 = vmatprep.subr.mxu0 0.0
        %3097 = vmatpush1.xpose.msra.mxu0 0.0
        %3098 = vmatprep.subr.mxu0 0.0
        %3099 = vmatpush1.xpose.msra.mxu0 0.0
        %3100 = vmatprep.subr.mxu0 0.0
        %3101 = vmatpush1.xpose.msra.mxu0 0.0
        %3102 = vmatprep.subr.mxu0 0.0
        %3103 = vmatpush1.xpose.msra.mxu0 0.0
        %3104 = vmatprep.subr.mxu0 0.0
        %3105 = vmatpush1.xpose.msra.mxu0 0.0
        %3106 = vmatprep.subr.mxu0 0.0
        %3107 = vmatpush1.xpose.msra.mxu0 0.0
        %3108 = vmatprep.subr.mxu0 0.0
        %3109 = vmatpush1.xpose.msra.mxu0 0.0
        %3110 = vmatprep.subr.mxu0 0.0
        %3111 = vmatpush1.xpose.msra.mxu0 0.0
        %3112 = vmatprep.subr.mxu0 0.0
        %3113 = vmatpush1.xpose.msra.mxu0 0.0
        %3114 = vmatprep.subr.mxu0 0.0
        %3115 = vmatpush1.xpose.msra.mxu0 0.0
        %3116 = vmatprep.subr.mxu0 0.0
        %3117 = vmatpush1.xpose.msra.mxu0 %v3084
        %3118 = vmatprep.subr.mxu0 0.0
        %3119 = vmatpush2.xpose.msra.mxu0 0.0
        %3120 = vmatprep.subr.mxu0 0.0
        %3121 = vmatpush2.xpose.msra.mxu0 0.0
        %3122 = vmatprep.subr.mxu0 0.0
        %3123 = vmatpush2.xpose.msra.mxu0 0.0
        %3124 = vmatprep.subr.mxu0 0.0
        %3125 = vmatpush2.xpose.msra.mxu0 0.0
        %3126 = vmatprep.subr.mxu0 0.0
        %3127 = vmatpush2.xpose.msra.mxu0 0.0
        %3128 = vmatprep.subr.mxu0 0.0
        %3129 = vmatpush2.xpose.msra.mxu0 0.0
        %3130 = vmatprep.subr.mxu0 0.0
        %3131 = vmatpush2.xpose.msra.mxu0 0.0
        %3132 = vmatprep.subr.mxu0 0.0
        %3133 = vmatpush2.xpose.msra.mxu0 0.0
        %3134 = vmatprep.subr.mxu0 0.0
        %3135 = vmatpush2.xpose.msra.mxu0 0.0
        %3136 = vmatprep.subr.mxu0 0.0
        %3137 = vmatpush2.xpose.msra.mxu0 0.0
        %3138 = vmatprep.subr.mxu0 0.0
        %3139 = vmatpush2.xpose.msra.mxu0 0.0
        %3140 = vmatprep.subr.mxu0 0.0
        %3141 = vmatpush2.xpose.msra.mxu0 0.0
        %3142 = vmatprep.subr.mxu0 0.0
        %3143 = vmatpush2.xpose.msra.mxu0 0.0
        %3144 = vmatprep.subr.mxu0 0.0
        %3145 = vmatpush2.xpose.msra.mxu0 0.0
        %3146 = vmatprep.subr.mxu0 0.0
        %3147 = vmatpush2.xpose.msra.mxu0 0.0
        %3148 = vmatprep.subr.mxu0 0.0
        %3149 = vmatpush2.xpose.msra.mxu0 0.0
        %3150 = vmatprep.mubr.f32.mxu0 0.0
        %3151 = vmatmul.mubr.f32.gmra.mxu0 %v3082
        %v3152 = vpop.f32.mrf.mxu0
        %v3153 = vadd.f32 0.0, %v3152
        %v3154 = vpop.f32.mrf.mxu0
        %3155 = vdwg.mxu0
        %v3156 = vmul.f32 %v3153, 10.0
        %v3157 = vadd.f32 %v3156, %v1330
        %v3158 = vsel %vm911, %v3157, -inf
        %3159 = vmax.xlane.f32.xlu0 %v3158
        %v3160 = vpop.xlane.xlu0 %3159
        %v3161 = vsub.f32 %v3157, %v3160
        %v3162 = vmul.f32 %v3161, 1.442695
        %v3163 = vpow.pop %v3162
        %v3164 = vsel %vm911, %v3163, 0.0
        %3165 = vadd.xlane.f32.xlu0 %v3164
        %v3166 = vpop.xlane.xlu0 %3165
        %v3167 = vrcp.pop %v3166
        %v3168 = vmul.f32 %v3163, %v3167
        %3169 = vrot.lane.b32.xlu0 %v2578, 32
        %v3170 = vpop.permute.xlu0 %3169
        %v3172 = vsel %vm926, %v3168, 0
        %v3174 = vsel %vm570, %v3170, 0
        %3176 = vmatprep.subr.mxu0 0.0
        %3177 = vmatpush1.msra.mxu0 0.0
        %3178 = vmatprep.subr.mxu0 0.0
        %3179 = vmatpush1.msra.mxu0 0.0
        %3180 = vmatprep.subr.mxu0 0.0
        %3181 = vmatpush1.msra.mxu0 0.0
        %3182 = vmatprep.subr.mxu0 0.0
        %3183 = vmatpush1.msra.mxu0 0.0
        %3184 = vmatprep.subr.mxu0 0.0
        %3185 = vmatpush1.msra.mxu0 0.0
        %3186 = vmatprep.subr.mxu0 0.0
        %3187 = vmatpush1.msra.mxu0 0.0
        %3188 = vmatprep.subr.mxu0 0.0
        %3189 = vmatpush1.msra.mxu0 0.0
        %3190 = vmatprep.subr.mxu0 0.0
        %3191 = vmatpush1.msra.mxu0 0.0
        %3192 = vmatprep.subr.mxu0 0.0
        %3193 = vmatpush1.msra.mxu0 0.0
        %3194 = vmatprep.subr.mxu0 0.0
        %3195 = vmatpush1.msra.mxu0 0.0
        %3196 = vmatprep.subr.mxu0 0.0
        %3197 = vmatpush1.msra.mxu0 0.0
        %3198 = vmatprep.subr.mxu0 0.0
        %3199 = vmatpush1.msra.mxu0 0.0
        %3200 = vmatprep.subr.mxu0 0.0
        %3201 = vmatpush1.msra.mxu0 0.0
        %3202 = vmatprep.subr.mxu0 0.0
        %3203 = vmatpush1.msra.mxu0 0.0
        %3204 = vmatprep.subr.mxu0 0.0
        %3205 = vmatpush1.msra.mxu0 0.0
        %3206 = vmatprep.subr.mxu0 0.0
        %3207 = vmatpush1.msra.mxu0 %v3174
        %3208 = vmatprep.subr.mxu0 0.0
        %3209 = vmatpush2.msra.mxu0 0.0
        %3210 = vmatprep.subr.mxu0 0.0
        %3211 = vmatpush2.msra.mxu0 0.0
        %3212 = vmatprep.subr.mxu0 0.0
        %3213 = vmatpush2.msra.mxu0 0.0
        %3214 = vmatprep.subr.mxu0 0.0
        %3215 = vmatpush2.msra.mxu0 0.0
        %3216 = vmatprep.subr.mxu0 0.0
        %3217 = vmatpush2.msra.mxu0 0.0
        %3218 = vmatprep.subr.mxu0 0.0
        %3219 = vmatpush2.msra.mxu0 0.0
        %3220 = vmatprep.subr.mxu0 0.0
        %3221 = vmatpush2.msra.mxu0 0.0
        %3222 = vmatprep.subr.mxu0 0.0
        %3223 = vmatpush2.msra.mxu0 0.0
        %3224 = vmatprep.subr.mxu0 0.0
        %3225 = vmatpush2.msra.mxu0 0.0
        %3226 = vmatprep.subr.mxu0 0.0
        %3227 = vmatpush2.msra.mxu0 0.0
        %3228 = vmatprep.subr.mxu0 0.0
        %3229 = vmatpush2.msra.mxu0 0.0
        %3230 = vmatprep.subr.mxu0 0.0
        %3231 = vmatpush2.msra.mxu0 0.0
        %3232 = vmatprep.subr.mxu0 0.0
        %3233 = vmatpush2.msra.mxu0 0.0
        %3234 = vmatprep.subr.mxu0 0.0
        %3235 = vmatpush2.msra.mxu0 0.0
        %3236 = vmatprep.subr.mxu0 0.0
        %3237 = vmatpush2.msra.mxu0 0.0
        %3238 = vmatprep.subr.mxu0 0.0
        %3239 = vmatpush2.msra.mxu0 0.0
        %3240 = vmatprep.mubr.f32.mxu0 0.0
        %3241 = vmatmul.mubr.f32.gmra.mxu0 %v3172
        %v3242 = vpop.f32.mrf.mxu0
        %v3243 = vadd.f32 0.0, %v3242
        %v3244 = vpop.f32.mrf.mxu0
        %3245 = vdwg.mxu0
        %3246 = vrot.lane.b32.xlu0 %v2649, 32
        %v3247 = vpop.permute.xlu0 %3246
        %v3249 = vsel %vm733, %v3247, 0.0
        %3250 = vadd.xlane.f32.xlu0 %v3249
        %v3251 = vpop.xlane.xlu0 %3250
        %v3252 = vadd.f32 %v3251, 1e-12
        %v3253 = vrsqrt.pop %v3252
        %v3254 = vmul.f32 %v2576, %v3253
        %v3255 = vlaneseq
        %v3256 = vshrl.u32 %v3255, 7
        %v3257 = vsub.s32 3, %v3256
        %v3258 = vrot.slane %v2583, %v3257
        %3260 = vrot.lane.b32.xlu0 %v3258, 96
        %v3261 = vpop.permute.xlu0 %3260
        %v3263 = vmul.f32 %v3254, %v3261
        %v3264 = vsub.f32 0.0, %v3263
        %3266 = vrot.lane.b32.xlu0 %v3264, 16
        %v3267 = vpop.permute.xlu0 %3266
        %3270 = vrot.lane.b32.xlu0 %v3263, 48
        %v3271 = vpop.permute.xlu0 %3270
        %v3273 = vsel %vm754, %v3267, %v3271
        %v3274 = vmul.f32 %v3263, %v1449
        %v3275 = vmul.f32 %v3273, %v566
        %3277 = vrot.lane.b32.xlu0 %v3275, 96
        %v3278 = vpop.permute.xlu0 %3277
        %v3280 = vadd.f32 %v3274, %v3278
        %v3281 = vmul.f32 %v3280, %v1459
        %3283 = vrot.lane.b32.xlu0 %v3281, 32
        %v3284 = vpop.permute.xlu0 %3283
        %v3285 = vsel %vm831, %v3284, 0
        %3287 = vmatprep.subr.mxu0 0.0
        %3288 = vmatpush1.xpose.msra.mxu0 0.0
        %3289 = vmatprep.subr.mxu0 0.0
        %3290 = vmatpush1.xpose.msra.mxu0 0.0
        %3291 = vmatprep.subr.mxu0 0.0
        %3292 = vmatpush1.xpose.msra.mxu0 0.0
        %3293 = vmatprep.subr.mxu0 0.0
        %3294 = vmatpush1.xpose.msra.mxu0 0.0
        %3295 = vmatprep.subr.mxu0 0.0
        %3296 = vmatpush1.xpose.msra.mxu0 0.0
        %3297 = vmatprep.subr.mxu0 0.0
        %3298 = vmatpush1.xpose.msra.mxu0 0.0
        %3299 = vmatprep.subr.mxu0 0.0
        %3300 = vmatpush1.xpose.msra.mxu0 0.0
        %3301 = vmatprep.subr.mxu0 0.0
        %3302 = vmatpush1.xpose.msra.mxu0 0.0
        %3303 = vmatprep.subr.mxu0 0.0
        %3304 = vmatpush1.xpose.msra.mxu0 0.0
        %3305 = vmatprep.subr.mxu0 0.0
        %3306 = vmatpush1.xpose.msra.mxu0 0.0
        %3307 = vmatprep.subr.mxu0 0.0
        %3308 = vmatpush1.xpose.msra.mxu0 0.0
        %3309 = vmatprep.subr.mxu0 0.0
        %3310 = vmatpush1.xpose.msra.mxu0 0.0
        %3311 = vmatprep.subr.mxu0 0.0
        %3312 = vmatpush1.xpose.msra.mxu0 0.0
        %3313 = vmatprep.subr.mxu0 0.0
        %3314 = vmatpush1.xpose.msra.mxu0 0.0
        %3315 = vmatprep.subr.mxu0 0.0
        %3316 = vmatpush1.xpose.msra.mxu0 0.0
        %3317 = vmatprep.subr.mxu0 0.0
        %3318 = vmatpush1.xpose.msra.mxu0 %v3084
        %3319 = vmatprep.subr.mxu0 0.0
        %3320 = vmatpush2.xpose.msra.mxu0 0.0
        %3321 = vmatprep.subr.mxu0 0.0
        %3322 = vmatpush2.xpose.msra.mxu0 0.0
        %3323 = vmatprep.subr.mxu0 0.0
        %3324 = vmatpush2.xpose.msra.mxu0 0.0
        %3325 = vmatprep.subr.mxu0 0.0
        %3326 = vmatpush2.xpose.msra.mxu0 0.0
        %3327 = vmatprep.subr.mxu0 0.0
        %3328 = vmatpush2.xpose.msra.mxu0 0.0
        %3329 = vmatprep.subr.mxu0 0.0
        %3330 = vmatpush2.xpose.msra.mxu0 0.0
        %3331 = vmatprep.subr.mxu0 0.0
        %3332 = vmatpush2.xpose.msra.mxu0 0.0
        %3333 = vmatprep.subr.mxu0 0.0
        %3334 = vmatpush2.xpose.msra.mxu0 0.0
        %3335 = vmatprep.subr.mxu0 0.0
        %3336 = vmatpush2.xpose.msra.mxu0 0.0
        %3337 = vmatprep.subr.mxu0 0.0
        %3338 = vmatpush2.xpose.msra.mxu0 0.0
        %3339 = vmatprep.subr.mxu0 0.0
        %3340 = vmatpush2.xpose.msra.mxu0 0.0
        %3341 = vmatprep.subr.mxu0 0.0
        %3342 = vmatpush2.xpose.msra.mxu0 0.0
        %3343 = vmatprep.subr.mxu0 0.0
        %3344 = vmatpush2.xpose.msra.mxu0 0.0
        %3345 = vmatprep.subr.mxu0 0.0
        %3346 = vmatpush2.xpose.msra.mxu0 0.0
        %3347 = vmatprep.subr.mxu0 0.0
        %3348 = vmatpush2.xpose.msra.mxu0 0.0
        %3349 = vmatprep.subr.mxu0 0.0
        %3350 = vmatpush2.xpose.msra.mxu0 0.0
        %3351 = vmatprep.mubr.f32.mxu0 0.0
        %3352 = vmatmul.mubr.f32.gmra.mxu0 %v3285
        %v3353 = vpop.f32.mrf.mxu0
        %v3354 = vadd.f32 0.0, %v3353
        %v3355 = vpop.f32.mrf.mxu0
        %3356 = vdwg.mxu0
        %v3357 = vmul.f32 %v3354, 10.0
        %v3358 = vadd.f32 %v3357, %v1539
        %v3359 = vsel %vm911, %v3358, -inf
        %3360 = vmax.xlane.f32.xlu0 %v3359
        %v3361 = vpop.xlane.xlu0 %3360
        %v3362 = vsub.f32 %v3358, %v3361
        %v3363 = vmul.f32 %v3362, 1.442695
        %v3364 = vpow.pop %v3363
        %v3365 = vsel %vm911, %v3364, 0.0
        %3366 = vadd.xlane.f32.xlu0 %v3365
        %v3367 = vpop.xlane.xlu0 %3366
        %v3368 = vrcp.pop %v3367
        %v3369 = vmul.f32 %v3364, %v3368
        %v3371 = vsel %vm926, %v3369, 0
        %3373 = vmatprep.subr.mxu0 0.0
        %3374 = vmatpush1.msra.mxu0 0.0
        %3375 = vmatprep.subr.mxu0 0.0
        %3376 = vmatpush1.msra.mxu0 0.0
        %3377 = vmatprep.subr.mxu0 0.0
        %3378 = vmatpush1.msra.mxu0 0.0
        %3379 = vmatprep.subr.mxu0 0.0
        %3380 = vmatpush1.msra.mxu0 0.0
        %3381 = vmatprep.subr.mxu0 0.0
        %3382 = vmatpush1.msra.mxu0 0.0
        %3383 = vmatprep.subr.mxu0 0.0
        %3384 = vmatpush1.msra.mxu0 0.0
        %3385 = vmatprep.subr.mxu0 0.0
        %3386 = vmatpush1.msra.mxu0 0.0
        %3387 = vmatprep.subr.mxu0 0.0
        %3388 = vmatpush1.msra.mxu0 0.0
        %3389 = vmatprep.subr.mxu0 0.0
        %3390 = vmatpush1.msra.mxu0 0.0
        %3391 = vmatprep.subr.mxu0 0.0
        %3392 = vmatpush1.msra.mxu0 0.0
        %3393 = vmatprep.subr.mxu0 0.0
        %3394 = vmatpush1.msra.mxu0 0.0
        %3395 = vmatprep.subr.mxu0 0.0
        %3396 = vmatpush1.msra.mxu0 0.0
        %3397 = vmatprep.subr.mxu0 0.0
        %3398 = vmatpush1.msra.mxu0 0.0
        %3399 = vmatprep.subr.mxu0 0.0
        %3400 = vmatpush1.msra.mxu0 0.0
        %3401 = vmatprep.subr.mxu0 0.0
        %3402 = vmatpush1.msra.mxu0 0.0
        %3403 = vmatprep.subr.mxu0 0.0
        %3404 = vmatpush1.msra.mxu0 %v3174
        %3405 = vmatprep.subr.mxu0 0.0
        %3406 = vmatpush2.msra.mxu0 0.0
        %3407 = vmatprep.subr.mxu0 0.0
        %3408 = vmatpush2.msra.mxu0 0.0
        %3409 = vmatprep.subr.mxu0 0.0
        %3410 = vmatpush2.msra.mxu0 0.0
        %3411 = vmatprep.subr.mxu0 0.0
        %3412 = vmatpush2.msra.mxu0 0.0
        %3413 = vmatprep.subr.mxu0 0.0
        %3414 = vmatpush2.msra.mxu0 0.0
        %3415 = vmatprep.subr.mxu0 0.0
        %3416 = vmatpush2.msra.mxu0 0.0
        %3417 = vmatprep.subr.mxu0 0.0
        %3418 = vmatpush2.msra.mxu0 0.0
        %3419 = vmatprep.subr.mxu0 0.0
        %3420 = vmatpush2.msra.mxu0 0.0
        %3421 = vmatprep.subr.mxu0 0.0
        %3422 = vmatpush2.msra.mxu0 0.0
        %3423 = vmatprep.subr.mxu0 0.0
        %3424 = vmatpush2.msra.mxu0 0.0
        %3425 = vmatprep.subr.mxu0 0.0
        %3426 = vmatpush2.msra.mxu0 0.0
        %3427 = vmatprep.subr.mxu0 0.0
        %3428 = vmatpush2.msra.mxu0 0.0
        %3429 = vmatprep.subr.mxu0 0.0
        %3430 = vmatpush2.msra.mxu0 0.0
        %3431 = vmatprep.subr.mxu0 0.0
        %3432 = vmatpush2.msra.mxu0 0.0
        %3433 = vmatprep.subr.mxu0 0.0
        %3434 = vmatpush2.msra.mxu0 0.0
        %3435 = vmatprep.subr.mxu0 0.0
        %3436 = vmatpush2.msra.mxu0 0.0
        %3437 = vmatprep.mubr.f32.mxu0 0.0
        %3438 = vmatmul.mubr.f32.gmra.mxu0 %v3371
        %v3439 = vpop.f32.mrf.mxu0
        %v3440 = vadd.f32 0.0, %v3439
        %v3441 = vpop.f32.mrf.mxu0
        %3442 = vdwg.mxu0
        %3444 = vrot.lane.b32.xlu0 %v3037, 32
        %v3445 = vpop.permute.xlu0 %3444
        %3448 = vrot.lane.b32.xlu0 %v3243, 64
        %v3449 = vpop.permute.xlu0 %3448
        %3452 = vrot.lane.b32.xlu0 %v3440, 96
        %v3453 = vpop.permute.xlu0 %3452
        %v3455 = vsel %vm831, %v2839, %v3445
        %v3456 = vsel %vm1638, %v3455, %v3449
        %v3457 = vsel %vm1640, %v3456, %v3453
        %v3458 = vpack.c.bf16 %v3457, %v3457
        %s3459 = scalar_lea.vmem %s3, 64
        %v3460 = vld [vmem:[%s3459] sm:$0xf]
        %v3461 = vld [vmem:[%s3459 + $0x4] sm:$0xf]
        %v3462 = vld [vmem:[%s3459 + $0x8] sm:$0xf]
        %v3463 = vld [vmem:[%s3459 + $0xc] sm:$0xf]
        %v3464 = vld [vmem:[%s3459 + $0x10] sm:$0xf]
        %v3465 = vld [vmem:[%s3459 + $0x14] sm:$0xf]
        %v3466 = vld [vmem:[%s3459 + $0x18] sm:$0xf]
        %v3467 = vld [vmem:[%s3459 + $0x1c] sm:$0xf]
        %v3468 = vld [vmem:[%s3459 + $0x20] sm:$0xf]
        %v3469 = vld [vmem:[%s3459 + $0x24] sm:$0xf]
        %v3470 = vld [vmem:[%s3459 + $0x28] sm:$0xf]
        %v3471 = vld [vmem:[%s3459 + $0x2c] sm:$0xf]
        %v3472 = vld [vmem:[%s3459 + $0x30] sm:$0xf]
        %v3473 = vld [vmem:[%s3459 + $0x34] sm:$0xf]
        %v3474 = vld [vmem:[%s3459 + $0x38] sm:$0xf]
        %v3475 = vld [vmem:[%s3459 + $0x3c] sm:$0xf]
        %v3492 = vunpack.c.l.b16 %v3460
        %v3493 = vunpack.c.l.b16 %v3461
        %v3494 = vunpack.c.l.b16 %v3462
        %v3495 = vunpack.c.l.b16 %v3463
        %v3496 = vunpack.c.l.b16 %v3464
        %v3497 = vunpack.c.l.b16 %v3465
        %v3498 = vunpack.c.l.b16 %v3466
        %v3499 = vunpack.c.l.b16 %v3467
        %v3500 = vunpack.c.l.b16 %v3468
        %v3501 = vunpack.c.l.b16 %v3469
        %v3502 = vunpack.c.l.b16 %v3470
        %v3503 = vunpack.c.l.b16 %v3471
        %v3504 = vunpack.c.l.b16 %v3472
        %v3505 = vunpack.c.l.b16 %v3473
        %v3506 = vunpack.c.l.b16 %v3474
        %v3507 = vunpack.c.l.b16 %v3475
        %v3508 = vpack.c.b16 %v3493, %v3492
        %v3509 = vpack.c.b16 %v3495, %v3494
        %v3510 = vpack.c.b16 %v3497, %v3496
        %v3511 = vpack.c.b16 %v3499, %v3498
        %v3512 = vpack.c.b16 %v3501, %v3500
        %v3513 = vpack.c.b16 %v3503, %v3502
        %v3514 = vpack.c.b16 %v3505, %v3504
        %v3515 = vpack.c.b16 %v3507, %v3506
        %3524 = vmatprep.subr.bf16.mxu0 0
        %3525 = vmatpush1.bf16.msra.mxu0 %v3515
        %3526 = vmatprep.subr.bf16.mxu0 0
        %3527 = vmatpush1.bf16.msra.mxu0 %v3514
        %3528 = vmatprep.subr.bf16.mxu0 0
        %3529 = vmatpush1.bf16.msra.mxu0 %v3513
        %3530 = vmatprep.subr.bf16.mxu0 0
        %3531 = vmatpush1.bf16.msra.mxu0 %v3512
        %3532 = vmatprep.subr.bf16.mxu0 0
        %3533 = vmatpush1.bf16.msra.mxu0 %v3511
        %3534 = vmatprep.subr.bf16.mxu0 0
        %3535 = vmatpush1.bf16.msra.mxu0 %v3510
        %3536 = vmatprep.subr.bf16.mxu0 0
        %3537 = vmatpush1.bf16.msra.mxu0 %v3509
        %3538 = vmatprep.subr.bf16.mxu0 0
        %3539 = vmatpush1.bf16.msra.mxu0 %v3508
        %3540 = vmatprep.subr.bf16.mxu0 0
        %3541 = vmatpush2.bf16.msra.mxu0 0
        %3542 = vmatprep.subr.bf16.mxu0 0
        %3543 = vmatpush2.bf16.msra.mxu0 0
        %3544 = vmatprep.subr.bf16.mxu0 0
        %3545 = vmatpush2.bf16.msra.mxu0 0
        %3546 = vmatprep.subr.bf16.mxu0 0
        %3547 = vmatpush2.bf16.msra.mxu0 0
        %3548 = vmatprep.subr.bf16.mxu0 0
        %3549 = vmatpush2.bf16.msra.mxu0 0
        %3550 = vmatprep.subr.bf16.mxu0 0
        %3551 = vmatpush2.bf16.msra.mxu0 0
        %3552 = vmatprep.subr.bf16.mxu0 0
        %3553 = vmatpush2.bf16.msra.mxu0 0
        %3554 = vmatprep.subr.bf16.mxu0 0
        %3555 = vmatpush2.bf16.msra.mxu0 0
        %3556 = vmatprep.mubr.bf16.mxu0 0
        %3557 = vmatmul.mubr.bf16.gmra.mxu0 %v3458
        %v3558 = vpop.f32.mrf.mxu0
        %v3559 = vadd.f32 0.0, %v3558
        %v3560 = vpop.f32.mrf.mxu0
        %v3561 = vpop.f32.mrf.mxu0
        %v3562 = vpop.f32.mrf.mxu0
        %3563 = vdwg.mxu0
        %v3564 = vadd.f32 %v2420, %v3559
        %s3565 = scalar_lea.vmem %s6, 1
        %v3566 = vld [vmem:[%s3565] sm:$0x1]
        %v3567 = vsel %vm570, %v3564, 0.0
        %3568 = vadd.xlane.f32.xlu0 %v3567
        %v3569 = vpop.xlane.xlu0 %3568
        %v3570 = vmul.f32 %v3569, %v574
        %v3571 = vsub.f32 %v3564, %v3570
        %v3572 = vmul.f32 %v3571, %v3571
        %v3573 = vsel %vm570, %v3572, 0.0
        %3574 = vadd.xlane.f32.xlu0 %v3573
        %v3575 = vpop.xlane.xlu0 %3574
        %v3576 = vmul.f32 %v3575, %v574
        %v3577 = vadd.f32 %v3576, 1e-05
        %v3578 = vrsqrt.pop %v3577
        %v3579 = vmul.f32 %v3571, %v3578
        %v3581 = vlaneseq
        %v3582 = vshrl.u32 %v3581, 7
        %v3583 = vsub.s32 0, %v3582
        %v3584 = vrot.slane %v3566, %v3583
        %v3586 = vmul.f32 %v3579, %v3584
        %v3587 = vpack.c.bf16 %v3586, %v3586
        %s3588 = scalar_lea.vmem [#allocation2], 256
        %v3589 = vld [vmem:[%s3588] sm:$0xff]
        %v3590 = vld [vmem:[%s3588 + $0x8] sm:$0xff]
        %v3591 = vld [vmem:[%s3588 + $0x10] sm:$0xff]
        %v3592 = vld [vmem:[%s3588 + $0x18] sm:$0xff]
        %v3593 = vld [vmem:[%s3588 + $0x20] sm:$0xff]
        %v3594 = vld [vmem:[%s3588 + $0x28] sm:$0xff]
        %v3595 = vld [vmem:[%s3588 + $0x30] sm:$0xff]
        %v3596 = vld [vmem:[%s3588 + $0x38] sm:$0xff]
        %v3597 = vld [vmem:[%s3588 + $0x40] sm:$0xff]
        %v3598 = vld [vmem:[%s3588 + $0x48] sm:$0xff]
        %v3599 = vld [vmem:[%s3588 + $0x50] sm:$0xff]
        %v3600 = vld [vmem:[%s3588 + $0x58] sm:$0xff]
        %v3601 = vld [vmem:[%s3588 + $0x60] sm:$0xff]
        %v3602 = vld [vmem:[%s3588 + $0x68] sm:$0xff]
        %v3603 = vld [vmem:[%s3588 + $0x70] sm:$0xff]
        %v3604 = vld [vmem:[%s3588 + $0x78] sm:$0xff]
        %v3605 = vld [vmem:[%s3588 + $0x80] sm:$0xff]
        %v3606 = vld [vmem:[%s3588 + $0x88] sm:$0xff]
        %v3607 = vld [vmem:[%s3588 + $0x90] sm:$0xff]
        %v3608 = vld [vmem:[%s3588 + $0x98] sm:$0xff]
        %v3609 = vld [vmem:[%s3588 + $0xa0] sm:$0xff]
        %v3610 = vld [vmem:[%s3588 + $0xa8] sm:$0xff]
        %v3611 = vld [vmem:[%s3588 + $0xb0] sm:$0xff]
        %v3612 = vld [vmem:[%s3588 + $0xb8] sm:$0xff]
        %v3613 = vld [vmem:[%s3588 + $0xc0] sm:$0xff]
        %v3614 = vld [vmem:[%s3588 + $0xc8] sm:$0xff]
        %v3615 = vld [vmem:[%s3588 + $0xd0] sm:$0xff]
        %v3616 = vld [vmem:[%s3588 + $0xd8] sm:$0xff]
        %v3617 = vld [vmem:[%s3588 + $0xe0] sm:$0xff]
        %v3618 = vld [vmem:[%s3588 + $0xe8] sm:$0xff]
        %v3619 = vld [vmem:[%s3588 + $0xf0] sm:$0xff]
        %v3620 = vld [vmem:[%s3588 + $0xf8] sm:$0xff]
        %v3653 = vunpack.c.l.b16 %v3589
        %v3654 = vunpack.c.h.b16 %v3589
        %v3655 = vunpack.c.l.b16 %v3590
        %v3656 = vunpack.c.h.b16 %v3590
        %v3657 = vunpack.c.l.b16 %v3591
        %v3658 = vunpack.c.h.b16 %v3591
        %v3659 = vunpack.c.l.b16 %v3592
        %v3660 = vunpack.c.h.b16 %v3592
        %v3661 = vunpack.c.l.b16 %v3593
        %v3662 = vunpack.c.h.b16 %v3593
        %v3663 = vunpack.c.l.b16 %v3594
        %v3664 = vunpack.c.h.b16 %v3594
        %v3665 = vunpack.c.l.b16 %v3595
        %v3666 = vunpack.c.h.b16 %v3595
        %v3667 = vunpack.c.l.b16 %v3596
        %v3668 = vunpack.c.h.b16 %v3596
        %v3669 = vunpack.c.l.b16 %v3597
        %v3670 = vunpack.c.h.b16 %v3597
        %v3671 = vunpack.c.l.b16 %v3598
        %v3672 = vunpack.c.h.b16 %v3598
        %v3673 = vunpack.c.l.b16 %v3599
        %v3674 = vunpack.c.h.b16 %v3599
        %v3675 = vunpack.c.l.b16 %v3600
        %v3676 = vunpack.c.h.b16 %v3600
        %v3677 = vunpack.c.l.b16 %v3601
        %v3678 = vunpack.c.h.b16 %v3601
        %v3679 = vunpack.c.l.b16 %v3602
        %v3680 = vunpack.c.h.b16 %v3602
        %v3681 = vunpack.c.l.b16 %v3603
        %v3682 = vunpack.c.h.b16 %v3603
        %v3683 = vunpack.c.l.b16 %v3604
        %v3684 = vunpack.c.h.b16 %v3604
        %v3685 = vunpack.c.l.b16 %v3605
        %v3686 = vunpack.c.h.b16 %v3605
        %v3687 = vunpack.c.l.b16 %v3606
        %v3688 = vunpack.c.h.b16 %v3606
        %v3689 = vunpack.c.l.b16 %v3607
        %v3690 = vunpack.c.h.b16 %v3607
        %v3691 = vunpack.c.l.b16 %v3608
        %v3692 = vunpack.c.h.b16 %v3608
        %v3693 = vunpack.c.l.b16 %v3609
        %v3694 = vunpack.c.h.b16 %v3609
        %v3695 = vunpack.c.l.b16 %v3610
        %v3696 = vunpack.c.h.b16 %v3610
        %v3697 = vunpack.c.l.b16 %v3611
        %v3698 = vunpack.c.h.b16 %v3611
        %v3699 = vunpack.c.l.b16 %v3612
        %v3700 = vunpack.c.h.b16 %v3612
        %v3701 = vunpack.c.l.b16 %v3613
        %v3702 = vunpack.c.h.b16 %v3613
        %v3703 = vunpack.c.l.b16 %v3614
        %v3704 = vunpack.c.h.b16 %v3614
        %v3705 = vunpack.c.l.b16 %v3615
        %v3706 = vunpack.c.h.b16 %v3615
        %v3707 = vunpack.c.l.b16 %v3616
        %v3708 = vunpack.c.h.b16 %v3616
        %v3709 = vunpack.c.l.b16 %v3617
        %v3710 = vunpack.c.h.b16 %v3617
        %v3711 = vunpack.c.l.b16 %v3618
        %v3712 = vunpack.c.h.b16 %v3618
        %v3713 = vunpack.c.l.b16 %v3619
        %v3714 = vunpack.c.h.b16 %v3619
        %v3715 = vunpack.c.l.b16 %v3620
        %v3716 = vunpack.c.h.b16 %v3620
        %v3717 = vpack.c.b16 %v3657, %v3653
        %v3718 = vpack.c.b16 %v3658, %v3654
        %v3719 = vpack.c.b16 %v3659, %v3655
        %v3720 = vpack.c.b16 %v3660, %v3656
        %v3721 = vpack.c.b16 %v3665, %v3661
        %v3722 = vpack.c.b16 %v3666, %v3662
        %v3723 = vpack.c.b16 %v3667, %v3663
        %v3724 = vpack.c.b16 %v3668, %v3664
        %v3725 = vpack.c.b16 %v3673, %v3669
        %v3726 = vpack.c.b16 %v3674, %v3670
        %v3727 = vpack.c.b16 %v3675, %v3671
        %v3728 = vpack.c.b16 %v3676, %v3672
        %v3729 = vpack.c.b16 %v3681, %v3677
        %v3730 = vpack.c.b16 %v3682, %v3678
        %v3731 = vpack.c.b16 %v3683, %v3679
        %v3732 = vpack.c.b16 %v3684, %v3680
        %v3733 = vpack.c.b16 %v3689, %v3685
        %v3734 = vpack.c.b16 %v3690, %v3686
        %v3735 = vpack.c.b16 %v3691, %v3687
        %v3736 = vpack.c.b16 %v3692, %v3688
        %v3737 = vpack.c.b16 %v3697, %v3693
        %v3738 = vpack.c.b16 %v3698, %v3694
        %v3739 = vpack.c.b16 %v3699, %v3695
        %v3740 = vpack.c.b16 %v3700, %v3696
        %v3741 = vpack.c.b16 %v3705, %v3701
        %v3742 = vpack.c.b16 %v3706, %v3702
        %v3743 = vpack.c.b16 %v3707, %v3703
        %v3744 = vpack.c.b16 %v3708, %v3704
        %v3745 = vpack.c.b16 %v3713, %v3709
        %v3746 = vpack.c.b16 %v3714, %v3710
        %v3747 = vpack.c.b16 %v3715, %v3711
        %v3748 = vpack.c.b16 %v3716, %v3712
        %3781 = vmatprep.subr.bf16.mxu0 %v3746
        %3782 = vmatpush1.bf16.msra.mxu0 %v3745
        %3783 = vmatprep.subr.bf16.mxu0 %v3742
        %3784 = vmatpush1.bf16.msra.mxu0 %v3741
        %3785 = vmatprep.subr.bf16.mxu0 %v3738
        %3786 = vmatpush1.bf16.msra.mxu0 %v3737
        %3787 = vmatprep.subr.bf16.mxu0 %v3734
        %3788 = vmatpush1.bf16.msra.mxu0 %v3733
        %3789 = vmatprep.subr.bf16.mxu0 %v3730
        %3790 = vmatpush1.bf16.msra.mxu0 %v3729
        %3791 = vmatprep.subr.bf16.mxu0 %v3726
        %3792 = vmatpush1.bf16.msra.mxu0 %v3725
        %3793 = vmatprep.subr.bf16.mxu0 %v3722
        %3794 = vmatpush1.bf16.msra.mxu0 %v3721
        %3795 = vmatprep.subr.bf16.mxu0 %v3718
        %3796 = vmatpush1.bf16.msra.mxu0 %v3717
        %3797 = vmatprep.subr.bf16.mxu0 0
        %3798 = vmatpush2.bf16.msra.mxu0 0
        %3799 = vmatprep.subr.bf16.mxu0 0
        %3800 = vmatpush2.bf16.msra.mxu0 0
        %3801 = vmatprep.subr.bf16.mxu0 0
        %3802 = vmatpush2.bf16.msra.mxu0 0
        %3803 = vmatprep.subr.bf16.mxu0 0
        %3804 = vmatpush2.bf16.msra.mxu0 0
        %3805 = vmatprep.subr.bf16.mxu0 0
        %3806 = vmatpush2.bf16.msra.mxu0 0
        %3807 = vmatprep.subr.bf16.mxu0 0
        %3808 = vmatpush2.bf16.msra.mxu0 0
        %3809 = vmatprep.subr.bf16.mxu0 0
        %3810 = vmatpush2.bf16.msra.mxu0 0
        %3811 = vmatprep.subr.bf16.mxu0 0
        %3812 = vmatpush2.bf16.msra.mxu0 0
        %3813 = vmatprep.mubr.bf16.mxu0 0
        %3814 = vmatmul.mubr.bf16.gmra.mxu0 %v3587
        %v3815 = vpop.f32.mrf.mxu0
        %v3816 = vadd.f32 0.0, %v3815
        %v3817 = vpop.f32.mrf.mxu0
        %v3818 = vadd.f32 0.0, %v3817
        %v3819 = vpop.f32.mrf.mxu0
        %v3820 = vpop.f32.mrf.mxu0
        %3821 = vdwg.mxu0
        %3822 = vmatprep.subr.bf16.mxu0 %v3748
        %3823 = vmatpush1.bf16.msra.mxu0 %v3747
        %3824 = vmatprep.subr.bf16.mxu0 %v3744
        %3825 = vmatpush1.bf16.msra.mxu0 %v3743
        %3826 = vmatprep.subr.bf16.mxu0 %v3740
        %3827 = vmatpush1.bf16.msra.mxu0 %v3739
        %3828 = vmatprep.subr.bf16.mxu0 %v3736
        %3829 = vmatpush1.bf16.msra.mxu0 %v3735
        %3830 = vmatprep.subr.bf16.mxu0 %v3732
        %3831 = vmatpush1.bf16.msra.mxu0 %v3731
        %3832 = vmatprep.subr.bf16.mxu0 %v3728
        %3833 = vmatpush1.bf16.msra.mxu0 %v3727
        %3834 = vmatprep.subr.bf16.mxu0 %v3724
        %3835 = vmatpush1.bf16.msra.mxu0 %v3723
        %3836 = vmatprep.subr.bf16.mxu0 %v3720
        %3837 = vmatpush1.bf16.msra.mxu0 %v3719
        %3838 = vmatprep.subr.bf16.mxu0 0
        %3839 = vmatpush2.bf16.msra.mxu0 0
        %3840 = vmatprep.subr.bf16.mxu0 0
        %3841 = vmatpush2.bf16.msra.mxu0 0
        %3842 = vmatprep.subr.bf16.mxu0 0
        %3843 = vmatpush2.bf16.msra.mxu0 0
        %3844 = vmatprep.subr.bf16.mxu0 0
        %3845 = vmatpush2.bf16.msra.mxu0 0
        %3846 = vmatprep.subr.bf16.mxu0 0
        %3847 = vmatpush2.bf16.msra.mxu0 0
        %3848 = vmatprep.subr.bf16.mxu0 0
        %3849 = vmatpush2.bf16.msra.mxu0 0
        %3850 = vmatprep.subr.bf16.mxu0 0
        %3851 = vmatpush2.bf16.msra.mxu0 0
        %3852 = vmatprep.subr.bf16.mxu0 0
        %3853 = vmatpush2.bf16.msra.mxu0 0
        %3854 = vmatprep.mubr.bf16.mxu0 0
        %3855 = vmatmul.mubr.bf16.gmra.mxu0 %v3587
        %v3856 = vpop.f32.mrf.mxu0
        %v3857 = vadd.f32 0.0, %v3856
        %v3858 = vpop.f32.mrf.mxu0
        %v3859 = vadd.f32 0.0, %v3858
        %v3860 = vpop.f32.mrf.mxu0
        %v3861 = vpop.f32.mrf.mxu0
        %3862 = vdwg.mxu0
        %v3863 = vmul.f32 %v3816, %v3816
        %v3864 = vmul.f32 %v3818, %v3818
        %v3865 = vmul.f32 %v3857, %v3857
        %v3866 = vmul.f32 %v3859, %v3859
        %v3867 = vmul.f32 %v3816, %v3863
        %v3868 = vmul.f32 %v3818, %v3864
        %v3869 = vmul.f32 %v3857, %v3865
        %v3870 = vmul.f32 %v3859, %v3866
        %v3871 = vmul.f32 %v3867, 0.044715
        %v3872 = vmul.f32 %v3868, 0.044715
        %v3873 = vmul.f32 %v3869, 0.044715
        %v3874 = vmul.f32 %v3870, 0.044715
        %v3875 = vadd.f32 %v3816, %v3871
        %v3876 = vadd.f32 %v3818, %v3872
        %v3877 = vadd.f32 %v3857, %v3873
        %v3878 = vadd.f32 %v3859, %v3874
        %v3879 = vmul.f32 %v3875, 0.7978846
        %v3880 = vmul.f32 %v3876, 0.7978846
        %v3881 = vmul.f32 %v3877, 0.7978846
        %v3882 = vmul.f32 %v3878, 0.7978846
        %v3883 = vtanh.pop %v3879
        %v3884 = vtanh.pop %v3880
        %v3885 = vtanh.pop %v3881
        %v3886 = vtanh.pop %v3882
        %v3887 = vadd.f32 %v3883, 1.0
        %v3888 = vadd.f32 %v3884, 1.0
        %v3889 = vadd.f32 %v3885, 1.0
        %v3890 = vadd.f32 %v3886, 1.0
        %v3891 = vmul.f32 %v3887, 0.5
        %v3892 = vmul.f32 %v3888, 0.5
        %v3893 = vmul.f32 %v3889, 0.5
        %v3894 = vmul.f32 %v3890, 0.5
        %v3895 = vmul.f32 %v3816, %v3891
        %v3896 = vmul.f32 %v3818, %v3892
        %v3897 = vmul.f32 %v3857, %v3893
        %v3898 = vmul.f32 %v3859, %v3894
        %v3899 = vpack.c.bf16 %v3895, %v3895
        %v3900 = vpack.c.bf16 %v3896, %v3896
        %v3901 = vpack.c.bf16 %v3897, %v3897
        %v3902 = vpack.c.bf16 %v3898, %v3898
        %s3903 = scalar_lea.vmem [#allocation4], 256
        %v3904 = vld [vmem:[%s3903] sm:$0xf]
        %v3905 = vld [vmem:[%s3903 + $0x4] sm:$0xf]
        %v3906 = vld [vmem:[%s3903 + $0x8] sm:$0xf]
        %v3907 = vld [vmem:[%s3903 + $0xc] sm:$0xf]
        %v3908 = vld [vmem:[%s3903 + $0x10] sm:$0xf]
        %v3909 = vld [vmem:[%s3903 + $0x14] sm:$0xf]
        %v3910 = vld [vmem:[%s3903 + $0x18] sm:$0xf]
        %v3911 = vld [vmem:[%s3903 + $0x1c] sm:$0xf]
        %v3912 = vld [vmem:[%s3903 + $0x20] sm:$0xf]
        %v3913 = vld [vmem:[%s3903 + $0x24] sm:$0xf]
        %v3914 = vld [vmem:[%s3903 + $0x28] sm:$0xf]
        %v3915 = vld [vmem:[%s3903 + $0x2c] sm:$0xf]
        %v3916 = vld [vmem:[%s3903 + $0x30] sm:$0xf]
        %v3917 = vld [vmem:[%s3903 + $0x34] sm:$0xf]
        %v3918 = vld [vmem:[%s3903 + $0x38] sm:$0xf]
        %v3919 = vld [vmem:[%s3903 + $0x3c] sm:$0xf]
        %v3920 = vld [vmem:[%s3903 + $0x40] sm:$0xf]
        %v3921 = vld [vmem:[%s3903 + $0x44] sm:$0xf]
        %v3922 = vld [vmem:[%s3903 + $0x48] sm:$0xf]
        %v3923 = vld [vmem:[%s3903 + $0x4c] sm:$0xf]
        %v3924 = vld [vmem:[%s3903 + $0x50] sm:$0xf]
        %v3925 = vld [vmem:[%s3903 + $0x54] sm:$0xf]
        %v3926 = vld [vmem:[%s3903 + $0x58] sm:$0xf]
        %v3927 = vld [vmem:[%s3903 + $0x5c] sm:$0xf]
        %v3928 = vld [vmem:[%s3903 + $0x60] sm:$0xf]
        %v3929 = vld [vmem:[%s3903 + $0x64] sm:$0xf]
        %v3930 = vld [vmem:[%s3903 + $0x68] sm:$0xf]
        %v3931 = vld [vmem:[%s3903 + $0x6c] sm:$0xf]
        %v3932 = vld [vmem:[%s3903 + $0x70] sm:$0xf]
        %v3933 = vld [vmem:[%s3903 + $0x74] sm:$0xf]
        %v3934 = vld [vmem:[%s3903 + $0x78] sm:$0xf]
        %v3935 = vld [vmem:[%s3903 + $0x7c] sm:$0xf]
        %v3936 = vld [vmem:[%s3903 + $0x80] sm:$0xf]
        %v3937 = vld [vmem:[%s3903 + $0x84] sm:$0xf]
        %v3938 = vld [vmem:[%s3903 + $0x88] sm:$0xf]
        %v3939 = vld [vmem:[%s3903 + $0x8c] sm:$0xf]
        %v3940 = vld [vmem:[%s3903 + $0x90] sm:$0xf]
        %v3941 = vld [vmem:[%s3903 + $0x94] sm:$0xf]
        %v3942 = vld [vmem:[%s3903 + $0x98] sm:$0xf]
        %v3943 = vld [vmem:[%s3903 + $0x9c] sm:$0xf]
        %v3944 = vld [vmem:[%s3903 + $0xa0] sm:$0xf]
        %v3945 = vld [vmem:[%s3903 + $0xa4] sm:$0xf]
        %v3946 = vld [vmem:[%s3903 + $0xa8] sm:$0xf]
        %v3947 = vld [vmem:[%s3903 + $0xac] sm:$0xf]
        %v3948 = vld [vmem:[%s3903 + $0xb0] sm:$0xf]
        %v3949 = vld [vmem:[%s3903 + $0xb4] sm:$0xf]
        %v3950 = vld [vmem:[%s3903 + $0xb8] sm:$0xf]
        %v3951 = vld [vmem:[%s3903 + $0xbc] sm:$0xf]
        %v3952 = vld [vmem:[%s3903 + $0xc0] sm:$0xf]
        %v3953 = vld [vmem:[%s3903 + $0xc4] sm:$0xf]
        %v3954 = vld [vmem:[%s3903 + $0xc8] sm:$0xf]
        %v3955 = vld [vmem:[%s3903 + $0xcc] sm:$0xf]
        %v3956 = vld [vmem:[%s3903 + $0xd0] sm:$0xf]
        %v3957 = vld [vmem:[%s3903 + $0xd4] sm:$0xf]
        %v3958 = vld [vmem:[%s3903 + $0xd8] sm:$0xf]
        %v3959 = vld [vmem:[%s3903 + $0xdc] sm:$0xf]
        %v3960 = vld [vmem:[%s3903 + $0xe0] sm:$0xf]
        %v3961 = vld [vmem:[%s3903 + $0xe4] sm:$0xf]
        %v3962 = vld [vmem:[%s3903 + $0xe8] sm:$0xf]
        %v3963 = vld [vmem:[%s3903 + $0xec] sm:$0xf]
        %v3964 = vld [vmem:[%s3903 + $0xf0] sm:$0xf]
        %v3965 = vld [vmem:[%s3903 + $0xf4] sm:$0xf]
        %v3966 = vld [vmem:[%s3903 + $0xf8] sm:$0xf]
        %v3967 = vld [vmem:[%s3903 + $0xfc] sm:$0xf]
        %v4032 = vunpack.c.l.b16 %v3904
        %v4033 = vunpack.c.l.b16 %v3905
        %v4034 = vunpack.c.l.b16 %v3906
        %v4035 = vunpack.c.l.b16 %v3907
        %v4036 = vunpack.c.l.b16 %v3908
        %v4037 = vunpack.c.l.b16 %v3909
        %v4038 = vunpack.c.l.b16 %v3910
        %v4039 = vunpack.c.l.b16 %v3911
        %v4040 = vunpack.c.l.b16 %v3912
        %v4041 = vunpack.c.l.b16 %v3913
        %v4042 = vunpack.c.l.b16 %v3914
        %v4043 = vunpack.c.l.b16 %v3915
        %v4044 = vunpack.c.l.b16 %v3916
        %v4045 = vunpack.c.l.b16 %v3917
        %v4046 = vunpack.c.l.b16 %v3918
        %v4047 = vunpack.c.l.b16 %v3919
        %v4048 = vunpack.c.l.b16 %v3920
        %v4049 = vunpack.c.l.b16 %v3921
        %v4050 = vunpack.c.l.b16 %v3922
        %v4051 = vunpack.c.l.b16 %v3923
        %v4052 = vunpack.c.l.b16 %v3924
        %v4053 = vunpack.c.l.b16 %v3925
        %v4054 = vunpack.c.l.b16 %v3926
        %v4055 = vunpack.c.l.b16 %v3927
        %v4056 = vunpack.c.l.b16 %v3928
        %v4057 = vunpack.c.l.b16 %v3929
        %v4058 = vunpack.c.l.b16 %v3930
        %v4059 = vunpack.c.l.b16 %v3931
        %v4060 = vunpack.c.l.b16 %v3932
        %v4061 = vunpack.c.l.b16 %v3933
        %v4062 = vunpack.c.l.b16 %v3934
        %v4063 = vunpack.c.l.b16 %v3935
        %v4064 = vunpack.c.l.b16 %v3936
        %v4065 = vunpack.c.l.b16 %v3937
        %v4066 = vunpack.c.l.b16 %v3938
        %v4067 = vunpack.c.l.b16 %v3939
        %v4068 = vunpack.c.l.b16 %v3940
        %v4069 = vunpack.c.l.b16 %v3941
        %v4070 = vunpack.c.l.b16 %v3942
        %v4071 = vunpack.c.l.b16 %v3943
        %v4072 = vunpack.c.l.b16 %v3944
        %v4073 = vunpack.c.l.b16 %v3945
        %v4074 = vunpack.c.l.b16 %v3946
        %v4075 = vunpack.c.l.b16 %v3947
        %v4076 = vunpack.c.l.b16 %v3948
        %v4077 = vunpack.c.l.b16 %v3949
        %v4078 = vunpack.c.l.b16 %v3950
        %v4079 = vunpack.c.l.b16 %v3951
        %v4080 = vunpack.c.l.b16 %v3952
        %v4081 = vunpack.c.l.b16 %v3953
        %v4082 = vunpack.c.l.b16 %v3954
        %v4083 = vunpack.c.l.b16 %v3955
        %v4084 = vunpack.c.l.b16 %v3956
        %v4085 = vunpack.c.l.b16 %v3957
        %v4086 = vunpack.c.l.b16 %v3958
        %v4087 = vunpack.c.l.b16 %v3959
        %v4088 = vunpack.c.l.b16 %v3960
        %v4089 = vunpack.c.l.b16 %v3961
        %v4090 = vunpack.c.l.b16 %v3962
        %v4091 = vunpack.c.l.b16 %v3963
        %v4092 = vunpack.c.l.b16 %v3964
        %v4093 = vunpack.c.l.b16 %v3965
        %v4094 = vunpack.c.l.b16 %v3966
        %v4095 = vunpack.c.l.b16 %v3967
        %v4096 = vpack.c.b16 %v4033, %v4032
        %v4097 = vpack.c.b16 %v4035, %v4034
        %v4098 = vpack.c.b16 %v4037, %v4036
        %v4099 = vpack.c.b16 %v4039, %v4038
        %v4100 = vpack.c.b16 %v4041, %v4040
        %v4101 = vpack.c.b16 %v4043, %v4042
        %v4102 = vpack.c.b16 %v4045, %v4044
        %v4103 = vpack.c.b16 %v4047, %v4046
        %v4104 = vpack.c.b16 %v4049, %v4048
        %v4105 = vpack.c.b16 %v4051, %v4050
        %v4106 = vpack.c.b16 %v4053, %v4052
        %v4107 = vpack.c.b16 %v4055, %v4054
        %v4108 = vpack.c.b16 %v4057, %v4056
        %v4109 = vpack.c.b16 %v4059, %v4058
        %v4110 = vpack.c.b16 %v4061, %v4060
        %v4111 = vpack.c.b16 %v4063, %v4062
        %v4112 = vpack.c.b16 %v4065, %v4064
        %v4113 = vpack.c.b16 %v4067, %v4066
        %v4114 = vpack.c.b16 %v4069, %v4068
        %v4115 = vpack.c.b16 %v4071, %v4070
        %v4116 = vpack.c.b16 %v4073, %v4072
        %v4117 = vpack.c.b16 %v4075, %v4074
        %v4118 = vpack.c.b16 %v4077, %v4076
        %v4119 = vpack.c.b16 %v4079, %v4078
        %v4120 = vpack.c.b16 %v4081, %v4080
        %v4121 = vpack.c.b16 %v4083, %v4082
        %v4122 = vpack.c.b16 %v4085, %v4084
        %v4123 = vpack.c.b16 %v4087, %v4086
        %v4124 = vpack.c.b16 %v4089, %v4088
        %v4125 = vpack.c.b16 %v4091, %v4090
        %v4126 = vpack.c.b16 %v4093, %v4092
        %v4127 = vpack.c.b16 %v4095, %v4094
        %4160 = vmatprep.subr.bf16.mxu0 0
        %4161 = vmatpush1.bf16.msra.mxu0 %v4103
        %4162 = vmatprep.subr.bf16.mxu0 0
        %4163 = vmatpush1.bf16.msra.mxu0 %v4102
        %4164 = vmatprep.subr.bf16.mxu0 0
        %4165 = vmatpush1.bf16.msra.mxu0 %v4101
        %4166 = vmatprep.subr.bf16.mxu0 0
        %4167 = vmatpush1.bf16.msra.mxu0 %v4100
        %4168 = vmatprep.subr.bf16.mxu0 0
        %4169 = vmatpush1.bf16.msra.mxu0 %v4099
        %4170 = vmatprep.subr.bf16.mxu0 0
        %4171 = vmatpush1.bf16.msra.mxu0 %v4098
        %4172 = vmatprep.subr.bf16.mxu0 0
        %4173 = vmatpush1.bf16.msra.mxu0 %v4097
        %4174 = vmatprep.subr.bf16.mxu0 0
        %4175 = vmatpush1.bf16.msra.mxu0 %v4096
        %4176 = vmatprep.subr.bf16.mxu0 0
        %4177 = vmatpush2.bf16.msra.mxu0 %v4111
        %4178 = vmatprep.subr.bf16.mxu0 0
        %4179 = vmatpush2.bf16.msra.mxu0 %v4110
        %4180 = vmatprep.subr.bf16.mxu0 0
        %4181 = vmatpush2.bf16.msra.mxu0 %v4109
        %4182 = vmatprep.subr.bf16.mxu0 0
        %4183 = vmatpush2.bf16.msra.mxu0 %v4108
        %4184 = vmatprep.subr.bf16.mxu0 0
        %4185 = vmatpush2.bf16.msra.mxu0 %v4107
        %4186 = vmatprep.subr.bf16.mxu0 0
        %4187 = vmatpush2.bf16.msra.mxu0 %v4106
        %4188 = vmatprep.subr.bf16.mxu0 0
        %4189 = vmatpush2.bf16.msra.mxu0 %v4105
        %4190 = vmatprep.subr.bf16.mxu0 0
        %4191 = vmatpush2.bf16.msra.mxu0 %v4104
        %4192 = vmatprep.mubr.bf16.mxu0 %v3900
        %4193 = vmatmul.mubr.bf16.gmra.mxu0 %v3899
        %v4194 = vpop.f32.mrf.mxu0
        %v4195 = vadd.f32 0.0, %v4194
        %v4196 = vpop.f32.mrf.mxu0
        %v4197 = vpop.f32.mrf.mxu0
        %v4198 = vpop.f32.mrf.mxu0
        %4199 = vdwg.mxu0
        %4200 = vmatprep.subr.bf16.mxu0 0
        %4201 = vmatpush1.bf16.msra.mxu0 %v4119
        %4202 = vmatprep.subr.bf16.mxu0 0
        %4203 = vmatpush1.bf16.msra.mxu0 %v4118
        %4204 = vmatprep.subr.bf16.mxu0 0
        %4205 = vmatpush1.bf16.msra.mxu0 %v4117
        %4206 = vmatprep.subr.bf16.mxu0 0
        %4207 = vmatpush1.bf16.msra.mxu0 %v4116
        %4208 = vmatprep.subr.bf16.mxu0 0
        %4209 = vmatpush1.bf16.msra.mxu0 %v4115
        %4210 = vmatprep.subr.bf16.mxu0 0
        %4211 = vmatpush1.bf16.msra.mxu0 %v4114
        %4212 = vmatprep.subr.bf16.mxu0 0
        %4213 = vmatpush1.bf16.msra.mxu0 %v4113
        %4214 = vmatprep.subr.bf16.mxu0 0
        %4215 = vmatpush1.bf16.msra.mxu0 %v4112
        %4216 = vmatprep.subr.bf16.mxu0 0
        %4217 = vmatpush2.bf16.msra.mxu0 %v4127
        %4218 = vmatprep.subr.bf16.mxu0 0
        %4219 = vmatpush2.bf16.msra.mxu0 %v4126
        %4220 = vmatprep.subr.bf16.mxu0 0
        %4221 = vmatpush2.bf16.msra.mxu0 %v4125
        %4222 = vmatprep.subr.bf16.mxu0 0
        %4223 = vmatpush2.bf16.msra.mxu0 %v4124
        %4224 = vmatprep.subr.bf16.mxu0 0
        %4225 = vmatpush2.bf16.msra.mxu0 %v4123
        %4226 = vmatprep.subr.bf16.mxu0 0
        %4227 = vmatpush2.bf16.msra.mxu0 %v4122
        %4228 = vmatprep.subr.bf16.mxu0 0
        %4229 = vmatpush2.bf16.msra.mxu0 %v4121
        %4230 = vmatprep.subr.bf16.mxu0 0
        %4231 = vmatpush2.bf16.msra.mxu0 %v4120
        %4232 = vmatprep.mubr.bf16.mxu0 %v3902
        %4233 = vmatmul.mubr.bf16.gmra.mxu0 %v3901
        %v4234 = vpop.f32.mrf.mxu0
        %v4235 = vadd.f32 %v4195, %v4234
        %v4236 = vpop.f32.mrf.mxu0
        %v4237 = vpop.f32.mrf.mxu0
        %v4238 = vpop.f32.mrf.mxu0
        %4239 = vdwg.mxu0
        %v4240 = vadd.f32 %v3564, %v4235
        %v4241 = vld [vmem:[%s9] sm:$0x1]
        %v4242 = vsel %vm570, %v4240, 0.0
        %4243 = vadd.xlane.f32.xlu0 %v4242
        %v4244 = vpop.xlane.xlu0 %4243
        %v4245 = vmul.f32 %v4244, %v574
        %v4246 = vsub.f32 %v4240, %v4245
        %v4247 = vmul.f32 %v4246, %v4246
        %v4248 = vsel %vm570, %v4247, 0.0
        %4249 = vadd.xlane.f32.xlu0 %v4248
        %v4250 = vpop.xlane.xlu0 %4249
        %v4251 = vmul.f32 %v4250, %v574
        %v4252 = vadd.f32 %v4251, 1e-05
        %v4253 = vrsqrt.pop %v4252
        %v4254 = vmul.f32 %v4246, %v4253
        %v4256 = vlaneseq
        %v4257 = vshrl.u32 %v4256, 7
        %v4258 = vsub.s32 0, %v4257
        %v4259 = vrot.slane %v4241, %v4258
        %v4261 = vmul.f32 %v4254, %v4259
        %v4262 = vpack.c.bf16 %v4261, %v4261
        %v4263 = vld [vmem:[#allocation6] sm:$0xff]
        %v4264 = vld [vmem:[#allocation6 + $0x8] sm:$0xff]
        %v4265 = vld [vmem:[#allocation6 + $0x10] sm:$0xff]
        %v4266 = vld [vmem:[#allocation6 + $0x18] sm:$0xff]
        %v4267 = vld [vmem:[#allocation6 + $0x20] sm:$0xff]
        %v4268 = vld [vmem:[#allocation6 + $0x28] sm:$0xff]
        %v4269 = vld [vmem:[#allocation6 + $0x30] sm:$0xff]
        %v4270 = vld [vmem:[#allocation6 + $0x38] sm:$0xff]
        %v4271 = vld [vmem:[#allocation6 + $0x40] sm:$0xff]
        %v4272 = vld [vmem:[#allocation6 + $0x48] sm:$0xff]
        %v4273 = vld [vmem:[#allocation6 + $0x50] sm:$0xff]
        %v4274 = vld [vmem:[#allocation6 + $0x58] sm:$0xff]
        %v4275 = vld [vmem:[#allocation6 + $0x60] sm:$0xff]
        %v4276 = vld [vmem:[#allocation6 + $0x68] sm:$0xff]
        %v4277 = vld [vmem:[#allocation6 + $0x70] sm:$0xff]
        %v4278 = vld [vmem:[#allocation6 + $0x78] sm:$0xff]
        %v4279 = vld [vmem:[#allocation6 + $0x80] sm:$0xff]
        %v4280 = vld [vmem:[#allocation6 + $0x88] sm:$0xff]
        %v4281 = vld [vmem:[#allocation6 + $0x90] sm:$0xff]
        %v4282 = vld [vmem:[#allocation6 + $0x98] sm:$0xff]
        %v4283 = vld [vmem:[#allocation6 + $0xa0] sm:$0xff]
        %v4284 = vld [vmem:[#allocation6 + $0xa8] sm:$0xff]
        %v4285 = vld [vmem:[#allocation6 + $0xb0] sm:$0xff]
        %v4286 = vld [vmem:[#allocation6 + $0xb8] sm:$0xff]
        %v4287 = vld [vmem:[#allocation6 + $0xc0] sm:$0xff]
        %v4288 = vld [vmem:[#allocation6 + $0xc8] sm:$0xff]
        %v4289 = vld [vmem:[#allocation6 + $0xd0] sm:$0xff]
        %v4290 = vld [vmem:[#allocation6 + $0xd8] sm:$0xff]
        %v4291 = vld [vmem:[#allocation6 + $0xe0] sm:$0xff]
        %v4292 = vld [vmem:[#allocation6 + $0xe8] sm:$0xff]
        %v4293 = vld [vmem:[#allocation6 + $0xf0] sm:$0xff]
        %v4294 = vld [vmem:[#allocation6 + $0xf8] sm:$0xff]
        %v4327 = vunpack.c.l.b16 %v4263
        %v4328 = vunpack.c.h.b16 %v4263
        %v4329 = vunpack.c.l.b16 %v4264
        %v4330 = vunpack.c.h.b16 %v4264
        %v4331 = vunpack.c.l.b16 %v4265
        %v4332 = vunpack.c.h.b16 %v4265
        %v4333 = vunpack.c.l.b16 %v4266
        %v4334 = vunpack.c.h.b16 %v4266
        %v4335 = vunpack.c.l.b16 %v4267
        %v4336 = vunpack.c.h.b16 %v4267
        %v4337 = vunpack.c.l.b16 %v4268
        %v4338 = vunpack.c.h.b16 %v4268
        %v4339 = vunpack.c.l.b16 %v4269
        %v4340 = vunpack.c.h.b16 %v4269
        %v4341 = vunpack.c.l.b16 %v4270
        %v4342 = vunpack.c.h.b16 %v4270
        %v4343 = vunpack.c.l.b16 %v4271
        %v4344 = vunpack.c.h.b16 %v4271
        %v4345 = vunpack.c.l.b16 %v4272
        %v4346 = vunpack.c.h.b16 %v4272
        %v4347 = vunpack.c.l.b16 %v4273
        %v4348 = vunpack.c.h.b16 %v4273
        %v4349 = vunpack.c.l.b16 %v4274
        %v4350 = vunpack.c.h.b16 %v4274
        %v4351 = vunpack.c.l.b16 %v4275
        %v4352 = vunpack.c.h.b16 %v4275
        %v4353 = vunpack.c.l.b16 %v4276
        %v4354 = vunpack.c.h.b16 %v4276
        %v4355 = vunpack.c.l.b16 %v4277
        %v4356 = vunpack.c.h.b16 %v4277
        %v4357 = vunpack.c.l.b16 %v4278
        %v4358 = vunpack.c.h.b16 %v4278
        %v4359 = vunpack.c.l.b16 %v4279
        %v4360 = vunpack.c.h.b16 %v4279
        %v4361 = vunpack.c.l.b16 %v4280
        %v4362 = vunpack.c.h.b16 %v4280
        %v4363 = vunpack.c.l.b16 %v4281
        %v4364 = vunpack.c.h.b16 %v4281
        %v4365 = vunpack.c.l.b16 %v4282
        %v4366 = vunpack.c.h.b16 %v4282
        %v4367 = vunpack.c.l.b16 %v4283
        %v4368 = vunpack.c.h.b16 %v4283
        %v4369 = vunpack.c.l.b16 %v4284
        %v4370 = vunpack.c.h.b16 %v4284
        %v4371 = vunpack.c.l.b16 %v4285
        %v4372 = vunpack.c.h.b16 %v4285
        %v4373 = vunpack.c.l.b16 %v4286
        %v4374 = vunpack.c.h.b16 %v4286
        %v4375 = vunpack.c.l.b16 %v4287
        %v4376 = vunpack.c.h.b16 %v4287
        %v4377 = vunpack.c.l.b16 %v4288
        %v4378 = vunpack.c.h.b16 %v4288
        %v4379 = vunpack.c.l.b16 %v4289
        %v4380 = vunpack.c.h.b16 %v4289
        %v4381 = vunpack.c.l.b16 %v4290
        %v4382 = vunpack.c.h.b16 %v4290
        %v4383 = vunpack.c.l.b16 %v4291
        %v4384 = vunpack.c.h.b16 %v4291
        %v4385 = vunpack.c.l.b16 %v4292
        %v4386 = vunpack.c.h.b16 %v4292
        %v4387 = vunpack.c.l.b16 %v4293
        %v4388 = vunpack.c.h.b16 %v4293
        %v4389 = vunpack.c.l.b16 %v4294
        %v4390 = vunpack.c.h.b16 %v4294
        %v4391 = vpack.c.b16 %v4331, %v4327
        %v4392 = vpack.c.b16 %v4332, %v4328
        %v4393 = vpack.c.b16 %v4333, %v4329
        %v4394 = vpack.c.b16 %v4334, %v4330
        %v4395 = vpack.c.b16 %v4339, %v4335
        %v4396 = vpack.c.b16 %v4340, %v4336
        %v4397 = vpack.c.b16 %v4341, %v4337
        %v4398 = vpack.c.b16 %v4342, %v4338
        %v4399 = vpack.c.b16 %v4347, %v4343
        %v4400 = vpack.c.b16 %v4348, %v4344
        %v4401 = vpack.c.b16 %v4349, %v4345
        %v4402 = vpack.c.b16 %v4350, %v4346
        %v4403 = vpack.c.b16 %v4355, %v4351
        %v4404 = vpack.c.b16 %v4356, %v4352
        %v4405 = vpack.c.b16 %v4357, %v4353
        %v4406 = vpack.c.b16 %v4358, %v4354
        %v4407 = vpack.c.b16 %v4363, %v4359
        %v4408 = vpack.c.b16 %v4364, %v4360
        %v4409 = vpack.c.b16 %v4365, %v4361
        %v4410 = vpack.c.b16 %v4366, %v4362
        %v4411 = vpack.c.b16 %v4371, %v4367
        %v4412 = vpack.c.b16 %v4372, %v4368
        %v4413 = vpack.c.b16 %v4373, %v4369
        %v4414 = vpack.c.b16 %v4374, %v4370
        %v4415 = vpack.c.b16 %v4379, %v4375
        %v4416 = vpack.c.b16 %v4380, %v4376
        %v4417 = vpack.c.b16 %v4381, %v4377
        %v4418 = vpack.c.b16 %v4382, %v4378
        %v4419 = vpack.c.b16 %v4387, %v4383
        %v4420 = vpack.c.b16 %v4388, %v4384
        %v4421 = vpack.c.b16 %v4389, %v4385
        %v4422 = vpack.c.b16 %v4390, %v4386
        %4455 = vmatprep.subr.bf16.mxu0 %v4420
        %4456 = vmatpush1.bf16.msra.mxu0 %v4419
        %4457 = vmatprep.subr.bf16.mxu0 %v4416
        %4458 = vmatpush1.bf16.msra.mxu0 %v4415
        %4459 = vmatprep.subr.bf16.mxu0 %v4412
        %4460 = vmatpush1.bf16.msra.mxu0 %v4411
        %4461 = vmatprep.subr.bf16.mxu0 %v4408
        %4462 = vmatpush1.bf16.msra.mxu0 %v4407
        %4463 = vmatprep.subr.bf16.mxu0 %v4404
        %4464 = vmatpush1.bf16.msra.mxu0 %v4403
        %4465 = vmatprep.subr.bf16.mxu0 %v4400
        %4466 = vmatpush1.bf16.msra.mxu0 %v4399
        %4467 = vmatprep.subr.bf16.mxu0 %v4396
        %4468 = vmatpush1.bf16.msra.mxu0 %v4395
        %4469 = vmatprep.subr.bf16.mxu0 %v4392
        %4470 = vmatpush1.bf16.msra.mxu0 %v4391
        %4471 = vmatprep.subr.bf16.mxu0 0
        %4472 = vmatpush2.bf16.msra.mxu0 0
        %4473 = vmatprep.subr.bf16.mxu0 0
        %4474 = vmatpush2.bf16.msra.mxu0 0
        %4475 = vmatprep.subr.bf16.mxu0 0
        %4476 = vmatpush2.bf16.msra.mxu0 0
        %4477 = vmatprep.subr.bf16.mxu0 0
        %4478 = vmatpush2.bf16.msra.mxu0 0
        %4479 = vmatprep.subr.bf16.mxu0 0
        %4480 = vmatpush2.bf16.msra.mxu0 0
        %4481 = vmatprep.subr.bf16.mxu0 0
        %4482 = vmatpush2.bf16.msra.mxu0 0
        %4483 = vmatprep.subr.bf16.mxu0 0
        %4484 = vmatpush2.bf16.msra.mxu0 0
        %4485 = vmatprep.subr.bf16.mxu0 0
        %4486 = vmatpush2.bf16.msra.mxu0 0
        %4487 = vmatprep.mubr.bf16.mxu0 0
        %4488 = vmatmul.mubr.bf16.gmra.mxu0 %v4262
        %v4489 = vpop.f32.mrf.mxu0
        %v4490 = vadd.f32 0.0, %v4489
        %v4491 = vpop.f32.mrf.mxu0
        %v4492 = vadd.f32 0.0, %v4491
        %v4493 = vpop.f32.mrf.mxu0
        %v4494 = vpop.f32.mrf.mxu0
        %4495 = vdwg.mxu0
        %4496 = vmatprep.subr.bf16.mxu0 %v4422
        %4497 = vmatpush1.bf16.msra.mxu0 %v4421
        %4498 = vmatprep.subr.bf16.mxu0 %v4418
        %4499 = vmatpush1.bf16.msra.mxu0 %v4417
        %4500 = vmatprep.subr.bf16.mxu0 %v4414
        %4501 = vmatpush1.bf16.msra.mxu0 %v4413
        %4502 = vmatprep.subr.bf16.mxu0 %v4410
        %4503 = vmatpush1.bf16.msra.mxu0 %v4409
        %4504 = vmatprep.subr.bf16.mxu0 %v4406
        %4505 = vmatpush1.bf16.msra.mxu0 %v4405
        %4506 = vmatprep.subr.bf16.mxu0 %v4402
        %4507 = vmatpush1.bf16.msra.mxu0 %v4401
        %4508 = vmatprep.subr.bf16.mxu0 %v4398
        %4509 = vmatpush1.bf16.msra.mxu0 %v4397
        %4510 = vmatprep.subr.bf16.mxu0 %v4394
        %4511 = vmatpush1.bf16.msra.mxu0 %v4393
        %4512 = vmatprep.subr.bf16.mxu0 0
        %4513 = vmatpush2.bf16.msra.mxu0 0
        %4514 = vmatprep.subr.bf16.mxu0 0
        %4515 = vmatpush2.bf16.msra.mxu0 0
        %4516 = vmatprep.subr.bf16.mxu0 0
        %4517 = vmatpush2.bf16.msra.mxu0 0
        %4518 = vmatprep.subr.bf16.mxu0 0
        %4519 = vmatpush2.bf16.msra.mxu0 0
        %4520 = vmatprep.subr.bf16.mxu0 0
        %4521 = vmatpush2.bf16.msra.mxu0 0
        %4522 = vmatprep.subr.bf16.mxu0 0
        %4523 = vmatpush2.bf16.msra.mxu0 0
        %4524 = vmatprep.subr.bf16.mxu0 0
        %4525 = vmatpush2.bf16.msra.mxu0 0
        %4526 = vmatprep.subr.bf16.mxu0 0
        %4527 = vmatpush2.bf16.msra.mxu0 0
        %4528 = vmatprep.mubr.bf16.mxu0 0
        %4529 = vmatmul.mubr.bf16.gmra.mxu0 %v4262
        %v4530 = vpop.f32.mrf.mxu0
        %v4531 = vadd.f32 0.0, %v4530
        %v4532 = vpop.f32.mrf.mxu0
        %v4533 = vadd.f32 0.0, %v4532
        %v4534 = vpop.f32.mrf.mxu0
        %v4535 = vpop.f32.mrf.mxu0
        %4536 = vdwg.mxu0
        %4537 = vst [vmem:[%s562] sm:$0x7f] %v4490
        %4538 = vst [vmem:[%s562 + $0x8] sm:$0x7f] %v4492
        %4539 = vst [vmem:[%s562 + $0x10] sm:$0x7f] %v4531
        %4540 = vst [vmem:[%s562 + $0x18] sm:$0x7f] %v4533
        %p4541 = scmp.lt.s32.totalorder %s29, 1
        %s4542 = scalar_select %p4541, %s29, 1
        %s4543 = smul.addr %s4542, 4
        %s4544 = smul.addr %s4543, 8
        %s4545 = scalar_lea.vmem %s16, %s4544
        // Predicated region
        $region97: #{nextgpt_forward.1} parent=83 // pred_check
          %p4546 = pneg %p388
        $region98: #{nextgpt_forward.1} parent=83 // pred_check_branch
          %4548 = sbr.rel (%p4546) target = $region100
        $region99: #{nextgpt_forward.1} parent=83 // pred_region
          _
        $region100: #{nextgpt_forward.1} parent=83 // pred_fallthru
          _
      $region84: #{nextgpt_forward.1} parent=5 // pred_fallthru
        _
      %p4549 = scmp.le.s32.totalorder 2, %s24
      // Predicated region
      $region101: #{nextgpt_forward.1} parent=5 // pred_check
        %p4550 = pneg %p4549
      $region102: #{nextgpt_forward.1} parent=5 // pred_check_branch
        %4552 = sbr.rel (%p4550) target = $region104
      $region103: #{nextgpt_forward.1} parent=5 // pred_region
        %s4553 = ssub.s32 %s24, 2
        // Predicated region
        $region105: #{nextgpt_forward.1} parent=103 // pred_check
          %p4554 = pneg %p394
        $region106: #{nextgpt_forward.1} parent=103 // pred_check_branch
          %4556 = sbr.rel (%p4554) target = $region108
        $region107: #{nextgpt_forward.1} parent=103 // pred_region
          %p4557 = scmp.lt.s32.totalorder %s30, 1
          %s4558 = scalar_select %p4557, %s30, 1
          %s4559 = smul.addr %s4558, 4
          %s4560 = smul.addr %s4559, 8
          %s4561 = scalar_lea.vmem %s16, %s4560
        $region108: #{nextgpt_forward.1} parent=103 // pred_fallthru
          _
      $region104: #{nextgpt_forward.1} parent=5 // pred_fallthru
        _
    $region6: #{nextgpt_forward.1} parent=1 // loop_footer
      %s28 = sadd.s32 1, %s24
    $region7: #{nextgpt_forward.1} parent=1 // loop_footer_branch
      %23 = sbr.rel target = $region3
    $region8: #{nextgpt_forward.1} parent=1 // loop_exit
      _
    %4562 = vsyncpa [#allocation3], 1
    %s4563 = scalar_lea.sflag [#allocation3], 1
    %4564 = vsyncpa %s4563, 1
    %4565 = vsyncpa [#allocation5], 1

</llo_original>
